<compile_context>
chip_gen: v7x
topology: tpu7x:2x2x1
jax: 0.10.0
libtpu: 0.0.40
codegen_flags: <defaults>
</compile_context>

<pallas_src>
import jax
import jax.numpy as jnp
from jax.experimental import pallas as pl
from jax.experimental.pallas import tpu as pltpu


def _build_kernel(T, H, num_layers, output_size, TB):
    """Builds the fused LSTM + MLP kernel body for static shapes."""
    n_in = 1 + 3 * num_layers + 4  # x, per-layer (w_ih_t, w_hh_t, b), fc1_wt, fc1_b, fc2_w, fc2_b

    def kernel(*refs):
        in_refs = refs[:n_in]
        out_ref = refs[n_in]
        x_ref = in_refs[0]                                    # (1, T*TB, F)

        # Hoist all weight loads out of the recurrence.
        w_ih = [in_refs[1 + 3 * l][...] for l in range(num_layers)]   # (d_in, 4H)
        w_hh = [in_refs[2 + 3 * l][...] for l in range(num_layers)]   # (H, 4H)
        b = [in_refs[3 + 3 * l][...] for l in range(num_layers)]      # (1, 4H)
        fc1_wt = in_refs[1 + 3 * num_layers][...]             # (H, 2H)
        fc1_b = in_refs[2 + 3 * num_layers][...]              # (1, 2H)
        fc2_w = in_refs[3 + 3 * num_layers][...]              # (1, 2H) or (2H, out)
        fc2_b = in_refs[4 + 3 * num_layers][...]              # (1, out)

        cdt = w_hh[0].dtype                                   # MXU operand dtype (f32 or bf16)

        # One-shot layer-0 input projection for all timesteps, bias folded in:
        #   rows [t*TB:(t+1)*TB] == x_t @ W_ih0^T + (b_ih0 + b_hh0)
        xproj0 = jnp.dot(x_ref[0], w_ih[0],
                         preferred_element_type=jnp.float32) + b[0]   # (T*TB, 4H) f32

        # Hoisted bias broadcasts for layers >= 1 (JAX does not CSE broadcasts).
        bias_b = [jnp.broadcast_to(b[l], (TB, 4 * H)) for l in range(1, num_layers)]

        # Zero initial hidden / cell state, carried as values (stay in vregs).
        h = [jnp.zeros((TB, H), jnp.float32) for _ in range(num_layers)]
        c = [jnp.zeros((TB, H), jnp.float32) for _ in range(num_layers)]

        def cell(gates, c_prev):
            # Gate columns are (i, f, o | g); g columns/bias were pre-scaled by 2
            # so ONE 4H-wide tanh gives both sigmoid (= 0.5*tanh(x/2)+0.5) and tanh.
            u = jnp.tanh(0.5 * gates)
            s = 0.5 * u[:, :3 * H] + 0.5
            i_g = s[:, :H]
            f_g = s[:, H:2 * H]
            o_g = s[:, 2 * H:3 * H]
            g_g = u[:, 3 * H:]
            c_new = f_g * c_prev + i_g * g_g
            h_new = o_g * jnp.tanh(c_new)
            return h_new, c_new

        # Fully unrolled, layer/time fused recurrence (T is small & static).
        # TODO(synk): for T >~ 32 switch to lax.fori_loop to bound vreg live ranges.
        for t in range(T):
            # Layer 0: x-projection precomputed; only the recurrent dot per step.
            gates = xproj0[t * TB:(t + 1) * TB] + jnp.dot(
                h[0].astype(cdt), w_hh[0], preferred_element_type=jnp.float32)
            h[0], c[0] = cell(gates, c[0])
            # Layers >= 1: concat-free, two accumulated dots.
            for l in range(1, num_layers):
                gates = (jnp.dot(h[l - 1].astype(cdt), w_ih[l],
                                 preferred_element_type=jnp.float32)
                         + jnp.dot(h[l].astype(cdt), w_hh[l],
                                   preferred_element_type=jnp.float32)
                         + bias_b[l - 1])
                h[l], c[l] = cell(gates, c[l])
            # TODO(synk): inter-layer dropout (p=0.2) omitted (inference identity).

        # Head: fc2(relu(fc1(h_last))) on the last layer's final hidden state.
        z = jnp.dot(h[num_layers - 1].astype(cdt), fc1_wt,
                    preferred_element_type=jnp.float32) + fc1_b
        z = jnp.maximum(z, 0.0)
        if output_size == 1:
            # VPU multiply + lane reduction instead of a 1-lane-wide MXU matmul.
            y = jnp.sum(z * fc2_w, axis=-1, keepdims=True) + fc2_b
        else:
            y = jnp.dot(z.astype(cdt), fc2_w,
                        preferred_element_type=jnp.float32) + fc2_b
        out_ref[...] = y.astype(out_ref.dtype)

    return kernel


def sol_price_lstm_forward(x, params, *, hidden_size, num_layers, output_size,
                           batch_block=None):
    B, T, F = x.shape
    H = hidden_size
    cdt = params["w_hh_t_0"].dtype            # compute dtype chosen at pack time

    # Pad batch to a sublane multiple (8): vregs / MXU rows are 8-deep regardless,
    # so this is ~free and lifts sublane utilization from 25% to 100% at B=2.
    B_pad = max(8, ((B + 7) // 8) * 8)
    if batch_block is None:
        TB = B_pad
    else:
        TB = batch_block
        assert TB % 8 == 0 and B_pad % TB == 0, "batch_block must be a sublane multiple dividing padded B"
    G = B_pad // TB                            # >=2 shards the batch across TCs (v7x)

    xp = x if B_pad == B else jnp.zeros((B_pad, T, F), x.dtype).at[:B].set(x)
    # (B_pad,T,F) -> (G,TB,T,F) -> (G,T,TB,F) -> (G, T*TB, F): one 2-D slab per block,
    # row t*TB + b, feeding the one-shot layer-0 projection (no per-step indexing).
    x_blk = xp.reshape(G, TB, T, F).transpose(0, 2, 1, 3).reshape(G, T * TB, F)
    x_blk = x_blk.astype(cdt)

    inputs = [x_blk]
    in_specs = [pl.BlockSpec((1, T * TB, F), lambda g: (g, 0, 0))]
    for l in range(num_layers):
        for name in (f"w_ih_t_{l}", f"w_hh_t_{l}", f"b_{l}"):
            p = params[name]
            inputs.append(p)
            in_specs.append(pl.BlockSpec(p.shape, lambda g: (0, 0)))
    for name in ("fc1_wt", "fc1_b", "fc2_w", "fc2_b"):
        p = params[name]
        inputs.append(p)
        in_specs.append(pl.BlockSpec(p.shape, lambda g: (0, 0)))

    kernel = _build_kernel(T, H, num_layers, output_size, TB)

    out = pl.pallas_call(
        kernel,
        out_shape=jax.ShapeDtypeStruct((B_pad, output_size), jnp.float32),
        grid=(G,),
        in_specs=in_specs,
        out_specs=pl.BlockSpec((TB, output_size), lambda g: (g, 0)),
        compiler_params=pltpu.CompilerParams(
            dimension_semantics=("parallel",)),
    )(*inputs)
    return out[:B]


def init_raw_params(key, input_size, hidden_size, num_layers, output_size):
    """PyTorch-layout weights (uniform +/- 1/sqrt(fan), gate order i,f,g,o)."""
    H = hidden_size
    raw = {}
    k_lstm = 1.0 / jnp.sqrt(jnp.float32(H))
    for l in range(num_layers):
        d_in = input_size if l == 0 else H
        key, k1, k2, k3, k4 = jax.random.split(key, 5)
        raw[f"w_ih_{l}"] = jax.random.uniform(k1, (4 * H, d_in), jnp.float32, -k_lstm, k_lstm)
        raw[f"w_hh_{l}"] = jax.random.uniform(k2, (4 * H, H), jnp.float32, -k_lstm, k_lstm)
        raw[f"b_ih_{l}"] = jax.random.uniform(k3, (4 * H,), jnp.float32, -k_lstm, k_lstm)
        raw[f"b_hh_{l}"] = jax.random.uniform(k4, (4 * H,), jnp.float32, -k_lstm, k_lstm)

    key, k1, k2, k3, k4 = jax.random.split(key, 5)
    k_fc1 = 1.0 / jnp.sqrt(jnp.float32(H))
    k_fc2 = 1.0 / jnp.sqrt(jnp.float32(2 * H))
    raw["fc1_w"] = jax.random.uniform(k1, (2 * H, H), jnp.float32, -k_fc1, k_fc1)
    raw["fc1_b"] = jax.random.uniform(k2, (2 * H,), jnp.float32, -k_fc1, k_fc1)
    raw["fc2_w"] = jax.random.uniform(k3, (output_size, 2 * H), jnp.float32, -k_fc2, k_fc2)
    raw["fc2_b"] = jax.random.uniform(k4, (output_size,), jnp.float32, -k_fc2, k_fc2)
    return raw


def pack_params(raw, *, hidden_size, num_layers, output_size,
                compute_dtype=jnp.float32):
    """Pack PyTorch-layout weights for the kernel:
       * permute gate rows to (i, f, o, g),
       * pre-scale the g-gate rows of W_ih / W_hh / bias by 2 (so one 4H-wide
         tanh(0.5*gates) covers both sigmoid and tanh in-kernel),
       * fuse biases, transpose, and cast matmul operands to compute_dtype
         (biases and the fc2 VPU row-vector stay f32)."""
    H = hidden_size
    perm = jnp.concatenate([jnp.arange(0, H),            # i
                            jnp.arange(H, 2 * H),        # f
                            jnp.arange(3 * H, 4 * H),    # o
                            jnp.arange(2 * H, 3 * H)])   # g
    gscale = jnp.concatenate([jnp.ones((3 * H,), jnp.float32),
                              jnp.full((H,), 2.0, jnp.float32)])
    packed = {}
    for l in range(num_layers):
        w_ih = raw[f"w_ih_{l}"][perm] * gscale[:, None]        # (4H, d_in)
        w_hh = raw[f"w_hh_{l}"][perm] * gscale[:, None]        # (4H, H)
        bias = (raw[f"b_ih_{l}"] + raw[f"b_hh_{l}"])[perm] * gscale
        packed[f"w_ih_t_{l}"] = w_ih.T.astype(compute_dtype)   # (d_in, 4H)
        packed[f"w_hh_t_{l}"] = w_hh.T.astype(compute_dtype)   # (H, 4H)
        packed[f"b_{l}"] = bias.reshape(1, 4 * H).astype(jnp.float32)
    packed["fc1_wt"] = raw["fc1_w"].T.astype(compute_dtype)    # (H, 2H)
    packed["fc1_b"] = raw["fc1_b"].reshape(1, 2 * H).astype(jnp.float32)
    if output_size == 1:
        packed["fc2_w"] = raw["fc2_w"].reshape(1, 2 * H).astype(jnp.float32)  # VPU reduce path
    else:
        packed["fc2_w"] = raw["fc2_w"].T.astype(compute_dtype)                # (2H, out)
    packed["fc2_b"] = raw["fc2_b"].reshape(1, output_size).astype(jnp.float32)
    return packed


def reference_forward(x, raw, *, hidden_size, num_layers, output_size):
    """Pure-JAX reference of standard PyTorch LSTM math (gate order i,f,g,o),
    using the *raw* un-permuted f32 weights, to validate the packing."""
    B, T, _ = x.shape
    H = hidden_size
    seq = x
    for l in range(num_layers):
        w_ih_t = raw[f"w_ih_{l}"].T
        w_hh_t = raw[f"w_hh_{l}"].T
        b = (raw[f"b_ih_{l}"] + raw[f"b_hh_{l}"]).reshape(1, 4 * H)
        h = jnp.zeros((B, H), jnp.float32)
        c = jnp.zeros((B, H), jnp.float32)
        outs = []
        for t in range(T):
            gates = seq[:, t, :] @ w_ih_t + h @ w_hh_t + b
            i_g = jax.nn.sigmoid(gates[:, 0:H])
            f_g = jax.nn.sigmoid(gates[:, H:2 * H])
            g_g = jnp.tanh(gates[:, 2 * H:3 * H])
            o_g = jax.nn.sigmoid(gates[:, 3 * H:4 * H])
            c = f_g * c + i_g * g_g
            h = o_g * jnp.tanh(c)
            outs.append(h)
        seq = jnp.stack(outs, axis=1)
    z = jnp.maximum(seq[:, -1, :] @ raw["fc1_w"].T + raw["fc1_b"], 0.0)
    return z @ raw["fc2_w"].T + raw["fc2_b"]


if __name__ == "__main__":
    # Small shapes consistent with the module's forward: x is (batch, seq, input_size).
    B, T = 2, 8
    input_size, hidden_size, num_layers, output_size = 4, 32, 2, 1

    key = jax.random.PRNGKey(0)
    key, kx = jax.random.split(key)
    x = jax.random.normal(kx, (B, T, input_size), jnp.float32)

    raw = init_raw_params(key, input_size, hidden_size, num_layers, output_size)

    ref = jax.block_until_ready(reference_forward(
        x, raw,
        hidden_size=hidden_size, num_layers=num_layers, output_size=output_size))

    # 1) f32 MXU feeds: tight check validates packing / gate-rescale / layer fusion math.
    packed_f32 = pack_params(raw, hidden_size=hidden_size, num_layers=num_layers,
                             output_size=output_size, compute_dtype=jnp.float32)
    out_f32 = jax.block_until_ready(sol_price_lstm_forward(
        x, packed_f32,
        hidden_size=hidden_size, num_layers=num_layers, output_size=output_size))
    assert out_f32.shape == (B, output_size)
    assert jnp.allclose(out_f32, ref, rtol=1e-4, atol=1e-4)

    # 2) bf16 MXU feeds (fast path): f32 state/accumulation, looser tolerance.
    packed_bf16 = pack_params(raw, hidden_size=hidden_size, num_layers=num_layers,
                              output_size=output_size, compute_dtype=jnp.bfloat16)
    out_bf16 = jax.block_until_ready(sol_price_lstm_forward(
        x, packed_bf16,
        hidden_size=hidden_size, num_layers=num_layers, output_size=output_size))
    assert out_bf16.shape == (B, output_size)
    assert jnp.allclose(out_bf16, ref, rtol=5e-2, atol=5e-2)

    print("KERNEL_OK")
</pallas_src>

<mosaic_0001>
module attributes {stable_mosaic.version = 11 : i64} {
  func.func @kernel(%arg0: i32, %arg1: memref<1x64x4xf32, #tpu.memory_space<vmem>>, %arg2: memref<4x128xf32, #tpu.memory_space<vmem>>, %arg3: memref<32x128xf32, #tpu.memory_space<vmem>>, %arg4: memref<1x128xf32, #tpu.memory_space<vmem>>, %arg5: memref<32x128xf32, #tpu.memory_space<vmem>>, %arg6: memref<32x128xf32, #tpu.memory_space<vmem>>, %arg7: memref<1x128xf32, #tpu.memory_space<vmem>>, %arg8: memref<32x64xf32, #tpu.memory_space<vmem>>, %arg9: memref<1x64xf32, #tpu.memory_space<vmem>>, %arg10: memref<1x64xf32, #tpu.memory_space<vmem>>, %arg11: memref<1x1xf32, #tpu.memory_space<vmem>>, %arg12: memref<8x1xf32, #tpu.memory_space<vmem>>) attributes {dimension_semantics = [#tpu.dimension_semantics<parallel>], iteration_bounds = array<i64: 1>, scalar_prefetch = 0 : i64, scratch_operands = 0 : i64, tpu.core_type = #tpu.core_type<tc>, window_params = [{transform_indices = @transform_0, window_bounds = array<i64: 1, 64, 4>}, {pipeline_mode = #tpu.pipeline_mode<synchronous>, transform_indices = @transform_1, window_bounds = array<i64: 4, 128>}, {pipeline_mode = #tpu.pipeline_mode<synchronous>, transform_indices = @transform_2, window_bounds = array<i64: 32, 128>}, {pipeline_mode = #tpu.pipeline_mode<synchronous>, transform_indices = @transform_3, window_bounds = array<i64: 1, 128>}, {pipeline_mode = #tpu.pipeline_mode<synchronous>, transform_indices = @transform_4, window_bounds = array<i64: 32, 128>}, {pipeline_mode = #tpu.pipeline_mode<synchronous>, transform_indices = @transform_5, window_bounds = array<i64: 32, 128>}, {pipeline_mode = #tpu.pipeline_mode<synchronous>, transform_indices = @transform_6, window_bounds = array<i64: 1, 128>}, {pipeline_mode = #tpu.pipeline_mode<synchronous>, transform_indices = @transform_7, window_bounds = array<i64: 32, 64>}, {pipeline_mode = #tpu.pipeline_mode<synchronous>, transform_indices = @transform_8, window_bounds = array<i64: 1, 64>}, {pipeline_mode = #tpu.pipeline_mode<synchronous>, transform_indices = @transform_9, window_bounds = array<i64: 1, 64>}, {pipeline_mode = #tpu.pipeline_mode<synchronous>, transform_indices = @transform_10, window_bounds = array<i64: 1, 1>}, {transform_indices = @transform_11, window_bounds = array<i64: 8, 1>}]} {
    %c0 = arith.constant 0 : index
    %c0_0 = arith.constant 0 : index
    %0 = vector.load %arg2[%c0, %c0_0] : memref<4x128xf32, #tpu.memory_space<vmem>>, vector<4x128xf32>
    %c0_1 = arith.constant 0 : index
    %c0_2 = arith.constant 0 : index
    %1 = vector.load %arg5[%c0_1, %c0_2] : memref<32x128xf32, #tpu.memory_space<vmem>>, vector<32x128xf32>
    %c0_3 = arith.constant 0 : index
    %c0_4 = arith.constant 0 : index
    %2 = vector.load %arg3[%c0_3, %c0_4] : memref<32x128xf32, #tpu.memory_space<vmem>>, vector<32x128xf32>
    %c0_5 = arith.constant 0 : index
    %c0_6 = arith.constant 0 : index
    %3 = vector.load %arg6[%c0_5, %c0_6] : memref<32x128xf32, #tpu.memory_space<vmem>>, vector<32x128xf32>
    %c0_7 = arith.constant 0 : index
    %c0_8 = arith.constant 0 : index
    %4 = vector.load %arg4[%c0_7, %c0_8] : memref<1x128xf32, #tpu.memory_space<vmem>>, vector<1x128xf32>
    %c0_9 = arith.constant 0 : index
    %c0_10 = arith.constant 0 : index
    %5 = vector.load %arg7[%c0_9, %c0_10] : memref<1x128xf32, #tpu.memory_space<vmem>>, vector<1x128xf32>
    %c0_11 = arith.constant 0 : index
    %c0_12 = arith.constant 0 : index
    %6 = vector.load %arg8[%c0_11, %c0_12] : memref<32x64xf32, #tpu.memory_space<vmem>>, vector<32x64xf32>
    %c0_13 = arith.constant 0 : index
    %c0_14 = arith.constant 0 : index
    %7 = vector.load %arg9[%c0_13, %c0_14] : memref<1x64xf32, #tpu.memory_space<vmem>>, vector<1x64xf32>
    %c0_15 = arith.constant 0 : index
    %c0_16 = arith.constant 0 : index
    %8 = vector.load %arg10[%c0_15, %c0_16] : memref<1x64xf32, #tpu.memory_space<vmem>>, vector<1x64xf32>
    %c0_17 = arith.constant 0 : index
    %c0_18 = arith.constant 0 : index
    %9 = vector.load %arg11[%c0_17, %c0_18] : memref<1x1xf32, #tpu.memory_space<vmem>>, vector<1x1xf32>
    %c0_19 = arith.constant 0 : index
    %c0_20 = arith.constant 0 : index
    %c0_21 = arith.constant 0 : index
    %10 = vector.load %arg1[%c0_19, %c0_20, %c0_21] : memref<1x64x4xf32, #tpu.memory_space<vmem>>, vector<1x64x4xf32>
    %11 = vector.shape_cast %10 : vector<1x64x4xf32> to vector<64x4xf32>
    %cst = arith.constant dense<0.000000e+00> : vector<64x128xf32>
    %12 = tpu.matmul %11, %0, %cst {dimension_numbers = #tpu.dot_dimension_numbers<[1], [0], [0], [1], [0, 0, 1, 1], [], []>} : vector<64x4xf32>, vector<4x128xf32>, vector<64x128xf32> -> vector<64x128xf32>
    %13 = vector.broadcast %4 : vector<1x128xf32> to vector<64x128xf32>
    %14 = arith.addf %12, %13 : vector<64x128xf32>
    %15 = vector.shape_cast %5 : vector<1x128xf32> to vector<1x128xf32>
    %16 = vector.broadcast %15 : vector<1x128xf32> to vector<8x128xf32>
    %cst_22 = arith.constant 0.000000e+00 : f32
    %17 = vector.broadcast %cst_22 : f32 to vector<8x32xf32>
    %cst_23 = arith.constant 0.000000e+00 : f32
    %18 = vector.broadcast %cst_23 : f32 to vector<8x32xf32>
    %cst_24 = arith.constant 0.000000e+00 : f32
    %19 = vector.broadcast %cst_24 : f32 to vector<8x32xf32>
    %cst_25 = arith.constant 0.000000e+00 : f32
    %20 = vector.broadcast %cst_25 : f32 to vector<8x32xf32>
    %21 = vector.extract_strided_slice %14 {offsets = [0, 0], sizes = [8, 128], strides = [1, 1]} : vector<64x128xf32> to vector<8x128xf32>
    %cst_26 = arith.constant dense<0.000000e+00> : vector<8x128xf32>
    %22 = tpu.matmul %17, %2, %cst_26 {dimension_numbers = #tpu.dot_dimension_numbers<[1], [0], [0], [1], [0, 0, 1, 1], [], []>} : vector<8x32xf32>, vector<32x128xf32>, vector<8x128xf32> -> vector<8x128xf32>
    %23 = arith.addf %21, %22 : vector<8x128xf32>
    %cst_27 = arith.constant 5.000000e-01 : f32
    %24 = vector.broadcast %cst_27 : f32 to vector<8x128xf32>
    %25 = arith.mulf %24, %23 : vector<8x128xf32>
    %26 = math.tanh %25 : vector<8x128xf32>
    %27 = vector.extract_strided_slice %26 {offsets = [0, 0], sizes = [8, 96], strides = [1, 1]} : vector<8x128xf32> to vector<8x96xf32>
    %cst_28 = arith.constant 5.000000e-01 : f32
    %28 = vector.broadcast %cst_28 : f32 to vector<8x96xf32>
    %29 = arith.mulf %28, %27 : vector<8x96xf32>
    %cst_29 = arith.constant 5.000000e-01 : f32
    %30 = vector.broadcast %cst_29 : f32 to vector<8x96xf32>
    %31 = arith.addf %29, %30 : vector<8x96xf32>
    %32 = vector.extract_strided_slice %31 {offsets = [0, 0], sizes = [8, 32], strides = [1, 1]} : vector<8x96xf32> to vector<8x32xf32>
    %33 = vector.extract_strided_slice %31 {offsets = [0, 32], sizes = [8, 32], strides = [1, 1]} : vector<8x96xf32> to vector<8x32xf32>
    %34 = vector.extract_strided_slice %31 {offsets = [0, 64], sizes = [8, 32], strides = [1, 1]} : vector<8x96xf32> to vector<8x32xf32>
    %35 = vector.extract_strided_slice %26 {offsets = [0, 96], sizes = [8, 32], strides = [1, 1]} : vector<8x128xf32> to vector<8x32xf32>
    %36 = arith.mulf %33, %19 : vector<8x32xf32>
    %37 = arith.mulf %32, %35 : vector<8x32xf32>
    %38 = arith.addf %36, %37 : vector<8x32xf32>
    %39 = math.tanh %38 : vector<8x32xf32>
    %40 = arith.mulf %34, %39 : vector<8x32xf32>
    %cst_30 = arith.constant dense<0.000000e+00> : vector<8x128xf32>
    %41 = tpu.matmul %40, %1, %cst_30 {dimension_numbers = #tpu.dot_dimension_numbers<[1], [0], [0], [1], [0, 0, 1, 1], [], []>} : vector<8x32xf32>, vector<32x128xf32>, vector<8x128xf32> -> vector<8x128xf32>
    %cst_31 = arith.constant dense<0.000000e+00> : vector<8x128xf32>
    %42 = tpu.matmul %18, %3, %cst_31 {dimension_numbers = #tpu.dot_dimension_numbers<[1], [0], [0], [1], [0, 0, 1, 1], [], []>} : vector<8x32xf32>, vector<32x128xf32>, vector<8x128xf32> -> vector<8x128xf32>
    %43 = arith.addf %41, %42 : vector<8x128xf32>
    %44 = arith.addf %43, %16 : vector<8x128xf32>
    %cst_32 = arith.constant 5.000000e-01 : f32
    %45 = vector.broadcast %cst_32 : f32 to vector<8x128xf32>
    %46 = arith.mulf %45, %44 : vector<8x128xf32>
    %47 = math.tanh %46 : vector<8x128xf32>
    %48 = vector.extract_strided_slice %47 {offsets = [0, 0], sizes = [8, 96], strides = [1, 1]} : vector<8x128xf32> to vector<8x96xf32>
    %cst_33 = arith.constant 5.000000e-01 : f32
    %49 = vector.broadcast %cst_33 : f32 to vector<8x96xf32>
    %50 = arith.mulf %49, %48 : vector<8x96xf32>
    %cst_34 = arith.constant 5.000000e-01 : f32
    %51 = vector.broadcast %cst_34 : f32 to vector<8x96xf32>
    %52 = arith.addf %50, %51 : vector<8x96xf32>
    %53 = vector.extract_strided_slice %52 {offsets = [0, 0], sizes = [8, 32], strides = [1, 1]} : vector<8x96xf32> to vector<8x32xf32>
    %54 = vector.extract_strided_slice %52 {offsets = [0, 32], sizes = [8, 32], strides = [1, 1]} : vector<8x96xf32> to vector<8x32xf32>
    %55 = vector.extract_strided_slice %52 {offsets = [0, 64], sizes = [8, 32], strides = [1, 1]} : vector<8x96xf32> to vector<8x32xf32>
    %56 = vector.extract_strided_slice %47 {offsets = [0, 96], sizes = [8, 32], strides = [1, 1]} : vector<8x128xf32> to vector<8x32xf32>
    %57 = arith.mulf %54, %20 : vector<8x32xf32>
    %58 = arith.mulf %53, %56 : vector<8x32xf32>
    %59 = arith.addf %57, %58 : vector<8x32xf32>
    %60 = math.tanh %59 : vector<8x32xf32>
    %61 = arith.mulf %55, %60 : vector<8x32xf32>
    %62 = vector.extract_strided_slice %14 {offsets = [8, 0], sizes = [8, 128], strides = [1, 1]} : vector<64x128xf32> to vector<8x128xf32>
    %cst_35 = arith.constant dense<0.000000e+00> : vector<8x128xf32>
    %63 = tpu.matmul %40, %2, %cst_35 {dimension_numbers = #tpu.dot_dimension_numbers<[1], [0], [0], [1], [0, 0, 1, 1], [], []>} : vector<8x32xf32>, vector<32x128xf32>, vector<8x128xf32> -> vector<8x128xf32>
    %64 = arith.addf %62, %63 : vector<8x128xf32>
    %cst_36 = arith.constant 5.000000e-01 : f32
    %65 = vector.broadcast %cst_36 : f32 to vector<8x128xf32>
    %66 = arith.mulf %65, %64 : vector<8x128xf32>
    %67 = math.tanh %66 : vector<8x128xf32>
    %68 = vector.extract_strided_slice %67 {offsets = [0, 0], sizes = [8, 96], strides = [1, 1]} : vector<8x128xf32> to vector<8x96xf32>
    %cst_37 = arith.constant 5.000000e-01 : f32
    %69 = vector.broadcast %cst_37 : f32 to vector<8x96xf32>
    %70 = arith.mulf %69, %68 : vector<8x96xf32>
    %cst_38 = arith.constant 5.000000e-01 : f32
    %71 = vector.broadcast %cst_38 : f32 to vector<8x96xf32>
    %72 = arith.addf %70, %71 : vector<8x96xf32>
    %73 = vector.extract_strided_slice %72 {offsets = [0, 0], sizes = [8, 32], strides = [1, 1]} : vector<8x96xf32> to vector<8x32xf32>
    %74 = vector.extract_strided_slice %72 {offsets = [0, 32], sizes = [8, 32], strides = [1, 1]} : vector<8x96xf32> to vector<8x32xf32>
    %75 = vector.extract_strided_slice %72 {offsets = [0, 64], sizes = [8, 32], strides = [1, 1]} : vector<8x96xf32> to vector<8x32xf32>
    %76 = vector.extract_strided_slice %67 {offsets = [0, 96], sizes = [8, 32], strides = [1, 1]} : vector<8x128xf32> to vector<8x32xf32>
    %77 = arith.mulf %74, %38 : vector<8x32xf32>
    %78 = arith.mulf %73, %76 : vector<8x32xf32>
    %79 = arith.addf %77, %78 : vector<8x32xf32>
    %80 = math.tanh %79 : vector<8x32xf32>
    %81 = arith.mulf %75, %80 : vector<8x32xf32>
    %cst_39 = arith.constant dense<0.000000e+00> : vector<8x128xf32>
    %82 = tpu.matmul %81, %1, %cst_39 {dimension_numbers = #tpu.dot_dimension_numbers<[1], [0], [0], [1], [0, 0, 1, 1], [], []>} : vector<8x32xf32>, vector<32x128xf32>, vector<8x128xf32> -> vector<8x128xf32>
    %cst_40 = arith.constant dense<0.000000e+00> : vector<8x128xf32>
    %83 = tpu.matmul %61, %3, %cst_40 {dimension_numbers = #tpu.dot_dimension_numbers<[1], [0], [0], [1], [0, 0, 1, 1], [], []>} : vector<8x32xf32>, vector<32x128xf32>, vector<8x128xf32> -> vector<8x128xf32>
    %84 = arith.addf %82, %83 : vector<8x128xf32>
    %85 = arith.addf %84, %16 : vector<8x128xf32>
    %cst_41 = arith.constant 5.000000e-01 : f32
    %86 = vector.broadcast %cst_41 : f32 to vector<8x128xf32>
    %87 = arith.mulf %86, %85 : vector<8x128xf32>
    %88 = math.tanh %87 : vector<8x128xf32>
    %89 = vector.extract_strided_slice %88 {offsets = [0, 0], sizes = [8, 96], strides = [1, 1]} : vector<8x128xf32> to vector<8x96xf32>
    %cst_42 = arith.constant 5.000000e-01 : f32
    %90 = vector.broadcast %cst_42 : f32 to vector<8x96xf32>
    %91 = arith.mulf %90, %89 : vector<8x96xf32>
    %cst_43 = arith.constant 5.000000e-01 : f32
    %92 = vector.broadcast %cst_43 : f32 to vector<8x96xf32>
    %93 = arith.addf %91, %92 : vector<8x96xf32>
    %94 = vector.extract_strided_slice %93 {offsets = [0, 0], sizes = [8, 32], strides = [1, 1]} : vector<8x96xf32> to vector<8x32xf32>
    %95 = vector.extract_strided_slice %93 {offsets = [0, 32], sizes = [8, 32], strides = [1, 1]} : vector<8x96xf32> to vector<8x32xf32>
    %96 = vector.extract_strided_slice %93 {offsets = [0, 64], sizes = [8, 32], strides = [1, 1]} : vector<8x96xf32> to vector<8x32xf32>
    %97 = vector.extract_strided_slice %88 {offsets = [0, 96], sizes = [8, 32], strides = [1, 1]} : vector<8x128xf32> to vector<8x32xf32>
    %98 = arith.mulf %95, %59 : vector<8x32xf32>
    %99 = arith.mulf %94, %97 : vector<8x32xf32>
    %100 = arith.addf %98, %99 : vector<8x32xf32>
    %101 = math.tanh %100 : vector<8x32xf32>
    %102 = arith.mulf %96, %101 : vector<8x32xf32>
    %103 = vector.extract_strided_slice %14 {offsets = [16, 0], sizes = [8, 128], strides = [1, 1]} : vector<64x128xf32> to vector<8x128xf32>
    %cst_44 = arith.constant dense<0.000000e+00> : vector<8x128xf32>
    %104 = tpu.matmul %81, %2, %cst_44 {dimension_numbers = #tpu.dot_dimension_numbers<[1], [0], [0], [1], [0, 0, 1, 1], [], []>} : vector<8x32xf32>, vector<32x128xf32>, vector<8x128xf32> -> vector<8x128xf32>
    %105 = arith.addf %103, %104 : vector<8x128xf32>
    %cst_45 = arith.constant 5.000000e-01 : f32
    %106 = vector.broadcast %cst_45 : f32 to vector<8x128xf32>
    %107 = arith.mulf %106, %105 : vector<8x128xf32>
    %108 = math.tanh %107 : vector<8x128xf32>
    %109 = vector.extract_strided_slice %108 {offsets = [0, 0], sizes = [8, 96], strides = [1, 1]} : vector<8x128xf32> to vector<8x96xf32>
    %cst_46 = arith.constant 5.000000e-01 : f32
    %110 = vector.broadcast %cst_46 : f32 to vector<8x96xf32>
    %111 = arith.mulf %110, %109 : vector<8x96xf32>
    %cst_47 = arith.constant 5.000000e-01 : f32
    %112 = vector.broadcast %cst_47 : f32 to vector<8x96xf32>
    %113 = arith.addf %111, %112 : vector<8x96xf32>
    %114 = vector.extract_strided_slice %113 {offsets = [0, 0], sizes = [8, 32], strides = [1, 1]} : vector<8x96xf32> to vector<8x32xf32>
    %115 = vector.extract_strided_slice %113 {offsets = [0, 32], sizes = [8, 32], strides = [1, 1]} : vector<8x96xf32> to vector<8x32xf32>
    %116 = vector.extract_strided_slice %113 {offsets = [0, 64], sizes = [8, 32], strides = [1, 1]} : vector<8x96xf32> to vector<8x32xf32>
    %117 = vector.extract_strided_slice %108 {offsets = [0, 96], sizes = [8, 32], strides = [1, 1]} : vector<8x128xf32> to vector<8x32xf32>
    %118 = arith.mulf %115, %79 : vector<8x32xf32>
    %119 = arith.mulf %114, %117 : vector<8x32xf32>
    %120 = arith.addf %118, %119 : vector<8x32xf32>
    %121 = math.tanh %120 : vector<8x32xf32>
    %122 = arith.mulf %116, %121 : vector<8x32xf32>
    %cst_48 = arith.constant dense<0.000000e+00> : vector<8x128xf32>
    %123 = tpu.matmul %122, %1, %cst_48 {dimension_numbers = #tpu.dot_dimension_numbers<[1], [0], [0], [1], [0, 0, 1, 1], [], []>} : vector<8x32xf32>, vector<32x128xf32>, vector<8x128xf32> -> vector<8x128xf32>
    %cst_49 = arith.constant dense<0.000000e+00> : vector<8x128xf32>
    %124 = tpu.matmul %102, %3, %cst_49 {dimension_numbers = #tpu.dot_dimension_numbers<[1], [0], [0], [1], [0, 0, 1, 1], [], []>} : vector<8x32xf32>, vector<32x128xf32>, vector<8x128xf32> -> vector<8x128xf32>
    %125 = arith.addf %123, %124 : vector<8x128xf32>
    %126 = arith.addf %125, %16 : vector<8x128xf32>
    %cst_50 = arith.constant 5.000000e-01 : f32
    %127 = vector.broadcast %cst_50 : f32 to vector<8x128xf32>
    %128 = arith.mulf %127, %126 : vector<8x128xf32>
    %129 = math.tanh %128 : vector<8x128xf32>
    %130 = vector.extract_strided_slice %129 {offsets = [0, 0], sizes = [8, 96], strides = [1, 1]} : vector<8x128xf32> to vector<8x96xf32>
    %cst_51 = arith.constant 5.000000e-01 : f32
    %131 = vector.broadcast %cst_51 : f32 to vector<8x96xf32>
    %132 = arith.mulf %131, %130 : vector<8x96xf32>
    %cst_52 = arith.constant 5.000000e-01 : f32
    %133 = vector.broadcast %cst_52 : f32 to vector<8x96xf32>
    %134 = arith.addf %132, %133 : vector<8x96xf32>
    %135 = vector.extract_strided_slice %134 {offsets = [0, 0], sizes = [8, 32], strides = [1, 1]} : vector<8x96xf32> to vector<8x32xf32>
    %136 = vector.extract_strided_slice %134 {offsets = [0, 32], sizes = [8, 32], strides = [1, 1]} : vector<8x96xf32> to vector<8x32xf32>
    %137 = vector.extract_strided_slice %134 {offsets = [0, 64], sizes = [8, 32], strides = [1, 1]} : vector<8x96xf32> to vector<8x32xf32>
    %138 = vector.extract_strided_slice %129 {offsets = [0, 96], sizes = [8, 32], strides = [1, 1]} : vector<8x128xf32> to vector<8x32xf32>
    %139 = arith.mulf %136, %100 : vector<8x32xf32>
    %140 = arith.mulf %135, %138 : vector<8x32xf32>
    %141 = arith.addf %139, %140 : vector<8x32xf32>
    %142 = math.tanh %141 : vector<8x32xf32>
    %143 = arith.mulf %137, %142 : vector<8x32xf32>
    %144 = vector.extract_strided_slice %14 {offsets = [24, 0], sizes = [8, 128], strides = [1, 1]} : vector<64x128xf32> to vector<8x128xf32>
    %cst_53 = arith.constant dense<0.000000e+00> : vector<8x128xf32>
    %145 = tpu.matmul %122, %2, %cst_53 {dimension_numbers = #tpu.dot_dimension_numbers<[1], [0], [0], [1], [0, 0, 1, 1], [], []>} : vector<8x32xf32>, vector<32x128xf32>, vector<8x128xf32> -> vector<8x128xf32>
    %146 = arith.addf %144, %145 : vector<8x128xf32>
    %cst_54 = arith.constant 5.000000e-01 : f32
    %147 = vector.broadcast %cst_54 : f32 to vector<8x128xf32>
    %148 = arith.mulf %147, %146 : vector<8x128xf32>
    %149 = math.tanh %148 : vector<8x128xf32>
    %150 = vector.extract_strided_slice %149 {offsets = [0, 0], sizes = [8, 96], strides = [1, 1]} : vector<8x128xf32> to vector<8x96xf32>
    %cst_55 = arith.constant 5.000000e-01 : f32
    %151 = vector.broadcast %cst_55 : f32 to vector<8x96xf32>
    %152 = arith.mulf %151, %150 : vector<8x96xf32>
    %cst_56 = arith.constant 5.000000e-01 : f32
    %153 = vector.broadcast %cst_56 : f32 to vector<8x96xf32>
    %154 = arith.addf %152, %153 : vector<8x96xf32>
    %155 = vector.extract_strided_slice %154 {offsets = [0, 0], sizes = [8, 32], strides = [1, 1]} : vector<8x96xf32> to vector<8x32xf32>
    %156 = vector.extract_strided_slice %154 {offsets = [0, 32], sizes = [8, 32], strides = [1, 1]} : vector<8x96xf32> to vector<8x32xf32>
    %157 = vector.extract_strided_slice %154 {offsets = [0, 64], sizes = [8, 32], strides = [1, 1]} : vector<8x96xf32> to vector<8x32xf32>
    %158 = vector.extract_strided_slice %149 {offsets = [0, 96], sizes = [8, 32], strides = [1, 1]} : vector<8x128xf32> to vector<8x32xf32>
    %159 = arith.mulf %156, %120 : vector<8x32xf32>
    %160 = arith.mulf %155, %158 : vector<8x32xf32>
    %161 = arith.addf %159, %160 : vector<8x32xf32>
    %162 = math.tanh %161 : vector<8x32xf32>
    %163 = arith.mulf %157, %162 : vector<8x32xf32>
    %cst_57 = arith.constant dense<0.000000e+00> : vector<8x128xf32>
    %164 = tpu.matmul %163, %1, %cst_57 {dimension_numbers = #tpu.dot_dimension_numbers<[1], [0], [0], [1], [0, 0, 1, 1], [], []>} : vector<8x32xf32>, vector<32x128xf32>, vector<8x128xf32> -> vector<8x128xf32>
    %cst_58 = arith.constant dense<0.000000e+00> : vector<8x128xf32>
    %165 = tpu.matmul %143, %3, %cst_58 {dimension_numbers = #tpu.dot_dimension_numbers<[1], [0], [0], [1], [0, 0, 1, 1], [], []>} : vector<8x32xf32>, vector<32x128xf32>, vector<8x128xf32> -> vector<8x128xf32>
    %166 = arith.addf %164, %165 : vector<8x128xf32>
    %167 = arith.addf %166, %16 : vector<8x128xf32>
    %cst_59 = arith.constant 5.000000e-01 : f32
    %168 = vector.broadcast %cst_59 : f32 to vector<8x128xf32>
    %169 = arith.mulf %168, %167 : vector<8x128xf32>
    %170 = math.tanh %169 : vector<8x128xf32>
    %171 = vector.extract_strided_slice %170 {offsets = [0, 0], sizes = [8, 96], strides = [1, 1]} : vector<8x128xf32> to vector<8x96xf32>
    %cst_60 = arith.constant 5.000000e-01 : f32
    %172 = vector.broadcast %cst_60 : f32 to vector<8x96xf32>
    %173 = arith.mulf %172, %171 : vector<8x96xf32>
    %cst_61 = arith.constant 5.000000e-01 : f32
    %174 = vector.broadcast %cst_61 : f32 to vector<8x96xf32>
    %175 = arith.addf %173, %174 : vector<8x96xf32>
    %176 = vector.extract_strided_slice %175 {offsets = [0, 0], sizes = [8, 32], strides = [1, 1]} : vector<8x96xf32> to vector<8x32xf32>
    %177 = vector.extract_strided_slice %175 {offsets = [0, 32], sizes = [8, 32], strides = [1, 1]} : vector<8x96xf32> to vector<8x32xf32>
    %178 = vector.extract_strided_slice %175 {offsets = [0, 64], sizes = [8, 32], strides = [1, 1]} : vector<8x96xf32> to vector<8x32xf32>
    %179 = vector.extract_strided_slice %170 {offsets = [0, 96], sizes = [8, 32], strides = [1, 1]} : vector<8x128xf32> to vector<8x32xf32>
    %180 = arith.mulf %177, %141 : vector<8x32xf32>
    %181 = arith.mulf %176, %179 : vector<8x32xf32>
    %182 = arith.addf %180, %181 : vector<8x32xf32>
    %183 = math.tanh %182 : vector<8x32xf32>
    %184 = arith.mulf %178, %183 : vector<8x32xf32>
    %185 = vector.extract_strided_slice %14 {offsets = [32, 0], sizes = [8, 128], strides = [1, 1]} : vector<64x128xf32> to vector<8x128xf32>
    %cst_62 = arith.constant dense<0.000000e+00> : vector<8x128xf32>
    %186 = tpu.matmul %163, %2, %cst_62 {dimension_numbers = #tpu.dot_dimension_numbers<[1], [0], [0], [1], [0, 0, 1, 1], [], []>} : vector<8x32xf32>, vector<32x128xf32>, vector<8x128xf32> -> vector<8x128xf32>
    %187 = arith.addf %185, %186 : vector<8x128xf32>
    %cst_63 = arith.constant 5.000000e-01 : f32
    %188 = vector.broadcast %cst_63 : f32 to vector<8x128xf32>
    %189 = arith.mulf %188, %187 : vector<8x128xf32>
    %190 = math.tanh %189 : vector<8x128xf32>
    %191 = vector.extract_strided_slice %190 {offsets = [0, 0], sizes = [8, 96], strides = [1, 1]} : vector<8x128xf32> to vector<8x96xf32>
    %cst_64 = arith.constant 5.000000e-01 : f32
    %192 = vector.broadcast %cst_64 : f32 to vector<8x96xf32>
    %193 = arith.mulf %192, %191 : vector<8x96xf32>
    %cst_65 = arith.constant 5.000000e-01 : f32
    %194 = vector.broadcast %cst_65 : f32 to vector<8x96xf32>
    %195 = arith.addf %193, %194 : vector<8x96xf32>
    %196 = vector.extract_strided_slice %195 {offsets = [0, 0], sizes = [8, 32], strides = [1, 1]} : vector<8x96xf32> to vector<8x32xf32>
    %197 = vector.extract_strided_slice %195 {offsets = [0, 32], sizes = [8, 32], strides = [1, 1]} : vector<8x96xf32> to vector<8x32xf32>
    %198 = vector.extract_strided_slice %195 {offsets = [0, 64], sizes = [8, 32], strides = [1, 1]} : vector<8x96xf32> to vector<8x32xf32>
    %199 = vector.extract_strided_slice %190 {offsets = [0, 96], sizes = [8, 32], strides = [1, 1]} : vector<8x128xf32> to vector<8x32xf32>
    %200 = arith.mulf %197, %161 : vector<8x32xf32>
    %201 = arith.mulf %196, %199 : vector<8x32xf32>
    %202 = arith.addf %200, %201 : vector<8x32xf32>
    %203 = math.tanh %202 : vector<8x32xf32>
    %204 = arith.mulf %198, %203 : vector<8x32xf32>
    %cst_66 = arith.constant dense<0.000000e+00> : vector<8x128xf32>
    %205 = tpu.matmul %204, %1, %cst_66 {dimension_numbers = #tpu.dot_dimension_numbers<[1], [0], [0], [1], [0, 0, 1, 1], [], []>} : vector<8x32xf32>, vector<32x128xf32>, vector<8x128xf32> -> vector<8x128xf32>
    %cst_67 = arith.constant dense<0.000000e+00> : vector<8x128xf32>
    %206 = tpu.matmul %184, %3, %cst_67 {dimension_numbers = #tpu.dot_dimension_numbers<[1], [0], [0], [1], [0, 0, 1, 1], [], []>} : vector<8x32xf32>, vector<32x128xf32>, vector<8x128xf32> -> vector<8x128xf32>
    %207 = arith.addf %205, %206 : vector<8x128xf32>
    %208 = arith.addf %207, %16 : vector<8x128xf32>
    %cst_68 = arith.constant 5.000000e-01 : f32
    %209 = vector.broadcast %cst_68 : f32 to vector<8x128xf32>
    %210 = arith.mulf %209, %208 : vector<8x128xf32>
    %211 = math.tanh %210 : vector<8x128xf32>
    %212 = vector.extract_strided_slice %211 {offsets = [0, 0], sizes = [8, 96], strides = [1, 1]} : vector<8x128xf32> to vector<8x96xf32>
    %cst_69 = arith.constant 5.000000e-01 : f32
    %213 = vector.broadcast %cst_69 : f32 to vector<8x96xf32>
    %214 = arith.mulf %213, %212 : vector<8x96xf32>
    %cst_70 = arith.constant 5.000000e-01 : f32
    %215 = vector.broadcast %cst_70 : f32 to vector<8x96xf32>
    %216 = arith.addf %214, %215 : vector<8x96xf32>
    %217 = vector.extract_strided_slice %216 {offsets = [0, 0], sizes = [8, 32], strides = [1, 1]} : vector<8x96xf32> to vector<8x32xf32>
    %218 = vector.extract_strided_slice %216 {offsets = [0, 32], sizes = [8, 32], strides = [1, 1]} : vector<8x96xf32> to vector<8x32xf32>
    %219 = vector.extract_strided_slice %216 {offsets = [0, 64], sizes = [8, 32], strides = [1, 1]} : vector<8x96xf32> to vector<8x32xf32>
    %220 = vector.extract_strided_slice %211 {offsets = [0, 96], sizes = [8, 32], strides = [1, 1]} : vector<8x128xf32> to vector<8x32xf32>
    %221 = arith.mulf %218, %182 : vector<8x32xf32>
    %222 = arith.mulf %217, %220 : vector<8x32xf32>
    %223 = arith.addf %221, %222 : vector<8x32xf32>
    %224 = math.tanh %223 : vector<8x32xf32>
    %225 = arith.mulf %219, %224 : vector<8x32xf32>
    %226 = vector.extract_strided_slice %14 {offsets = [40, 0], sizes = [8, 128], strides = [1, 1]} : vector<64x128xf32> to vector<8x128xf32>
    %cst_71 = arith.constant dense<0.000000e+00> : vector<8x128xf32>
    %227 = tpu.matmul %204, %2, %cst_71 {dimension_numbers = #tpu.dot_dimension_numbers<[1], [0], [0], [1], [0, 0, 1, 1], [], []>} : vector<8x32xf32>, vector<32x128xf32>, vector<8x128xf32> -> vector<8x128xf32>
    %228 = arith.addf %226, %227 : vector<8x128xf32>
    %cst_72 = arith.constant 5.000000e-01 : f32
    %229 = vector.broadcast %cst_72 : f32 to vector<8x128xf32>
    %230 = arith.mulf %229, %228 : vector<8x128xf32>
    %231 = math.tanh %230 : vector<8x128xf32>
    %232 = vector.extract_strided_slice %231 {offsets = [0, 0], sizes = [8, 96], strides = [1, 1]} : vector<8x128xf32> to vector<8x96xf32>
    %cst_73 = arith.constant 5.000000e-01 : f32
    %233 = vector.broadcast %cst_73 : f32 to vector<8x96xf32>
    %234 = arith.mulf %233, %232 : vector<8x96xf32>
    %cst_74 = arith.constant 5.000000e-01 : f32
    %235 = vector.broadcast %cst_74 : f32 to vector<8x96xf32>
    %236 = arith.addf %234, %235 : vector<8x96xf32>
    %237 = vector.extract_strided_slice %236 {offsets = [0, 0], sizes = [8, 32], strides = [1, 1]} : vector<8x96xf32> to vector<8x32xf32>
    %238 = vector.extract_strided_slice %236 {offsets = [0, 32], sizes = [8, 32], strides = [1, 1]} : vector<8x96xf32> to vector<8x32xf32>
    %239 = vector.extract_strided_slice %236 {offsets = [0, 64], sizes = [8, 32], strides = [1, 1]} : vector<8x96xf32> to vector<8x32xf32>
    %240 = vector.extract_strided_slice %231 {offsets = [0, 96], sizes = [8, 32], strides = [1, 1]} : vector<8x128xf32> to vector<8x32xf32>
    %241 = arith.mulf %238, %202 : vector<8x32xf32>
    %242 = arith.mulf %237, %240 : vector<8x32xf32>
    %243 = arith.addf %241, %242 : vector<8x32xf32>
    %244 = math.tanh %243 : vector<8x32xf32>
    %245 = arith.mulf %239, %244 : vector<8x32xf32>
    %cst_75 = arith.constant dense<0.000000e+00> : vector<8x128xf32>
    %246 = tpu.matmul %245, %1, %cst_75 {dimension_numbers = #tpu.dot_dimension_numbers<[1], [0], [0], [1], [0, 0, 1, 1], [], []>} : vector<8x32xf32>, vector<32x128xf32>, vector<8x128xf32> -> vector<8x128xf32>
    %cst_76 = arith.constant dense<0.000000e+00> : vector<8x128xf32>
    %247 = tpu.matmul %225, %3, %cst_76 {dimension_numbers = #tpu.dot_dimension_numbers<[1], [0], [0], [1], [0, 0, 1, 1], [], []>} : vector<8x32xf32>, vector<32x128xf32>, vector<8x128xf32> -> vector<8x128xf32>
    %248 = arith.addf %246, %247 : vector<8x128xf32>
    %249 = arith.addf %248, %16 : vector<8x128xf32>
    %cst_77 = arith.constant 5.000000e-01 : f32
    %250 = vector.broadcast %cst_77 : f32 to vector<8x128xf32>
    %251 = arith.mulf %250, %249 : vector<8x128xf32>
    %252 = math.tanh %251 : vector<8x128xf32>
    %253 = vector.extract_strided_slice %252 {offsets = [0, 0], sizes = [8, 96], strides = [1, 1]} : vector<8x128xf32> to vector<8x96xf32>
    %cst_78 = arith.constant 5.000000e-01 : f32
    %254 = vector.broadcast %cst_78 : f32 to vector<8x96xf32>
    %255 = arith.mulf %254, %253 : vector<8x96xf32>
    %cst_79 = arith.constant 5.000000e-01 : f32
    %256 = vector.broadcast %cst_79 : f32 to vector<8x96xf32>
    %257 = arith.addf %255, %256 : vector<8x96xf32>
    %258 = vector.extract_strided_slice %257 {offsets = [0, 0], sizes = [8, 32], strides = [1, 1]} : vector<8x96xf32> to vector<8x32xf32>
    %259 = vector.extract_strided_slice %257 {offsets = [0, 32], sizes = [8, 32], strides = [1, 1]} : vector<8x96xf32> to vector<8x32xf32>
    %260 = vector.extract_strided_slice %257 {offsets = [0, 64], sizes = [8, 32], strides = [1, 1]} : vector<8x96xf32> to vector<8x32xf32>
    %261 = vector.extract_strided_slice %252 {offsets = [0, 96], sizes = [8, 32], strides = [1, 1]} : vector<8x128xf32> to vector<8x32xf32>
    %262 = arith.mulf %259, %223 : vector<8x32xf32>
    %263 = arith.mulf %258, %261 : vector<8x32xf32>
    %264 = arith.addf %262, %263 : vector<8x32xf32>
    %265 = math.tanh %264 : vector<8x32xf32>
    %266 = arith.mulf %260, %265 : vector<8x32xf32>
    %267 = vector.extract_strided_slice %14 {offsets = [48, 0], sizes = [8, 128], strides = [1, 1]} : vector<64x128xf32> to vector<8x128xf32>
    %cst_80 = arith.constant dense<0.000000e+00> : vector<8x128xf32>
    %268 = tpu.matmul %245, %2, %cst_80 {dimension_numbers = #tpu.dot_dimension_numbers<[1], [0], [0], [1], [0, 0, 1, 1], [], []>} : vector<8x32xf32>, vector<32x128xf32>, vector<8x128xf32> -> vector<8x128xf32>
    %269 = arith.addf %267, %268 : vector<8x128xf32>
    %cst_81 = arith.constant 5.000000e-01 : f32
    %270 = vector.broadcast %cst_81 : f32 to vector<8x128xf32>
    %271 = arith.mulf %270, %269 : vector<8x128xf32>
    %272 = math.tanh %271 : vector<8x128xf32>
    %273 = vector.extract_strided_slice %272 {offsets = [0, 0], sizes = [8, 96], strides = [1, 1]} : vector<8x128xf32> to vector<8x96xf32>
    %cst_82 = arith.constant 5.000000e-01 : f32
    %274 = vector.broadcast %cst_82 : f32 to vector<8x96xf32>
    %275 = arith.mulf %274, %273 : vector<8x96xf32>
    %cst_83 = arith.constant 5.000000e-01 : f32
    %276 = vector.broadcast %cst_83 : f32 to vector<8x96xf32>
    %277 = arith.addf %275, %276 : vector<8x96xf32>
    %278 = vector.extract_strided_slice %277 {offsets = [0, 0], sizes = [8, 32], strides = [1, 1]} : vector<8x96xf32> to vector<8x32xf32>
    %279 = vector.extract_strided_slice %277 {offsets = [0, 32], sizes = [8, 32], strides = [1, 1]} : vector<8x96xf32> to vector<8x32xf32>
    %280 = vector.extract_strided_slice %277 {offsets = [0, 64], sizes = [8, 32], strides = [1, 1]} : vector<8x96xf32> to vector<8x32xf32>
    %281 = vector.extract_strided_slice %272 {offsets = [0, 96], sizes = [8, 32], strides = [1, 1]} : vector<8x128xf32> to vector<8x32xf32>
    %282 = arith.mulf %279, %243 : vector<8x32xf32>
    %283 = arith.mulf %278, %281 : vector<8x32xf32>
    %284 = arith.addf %282, %283 : vector<8x32xf32>
    %285 = math.tanh %284 : vector<8x32xf32>
    %286 = arith.mulf %280, %285 : vector<8x32xf32>
    %cst_84 = arith.constant dense<0.000000e+00> : vector<8x128xf32>
    %287 = tpu.matmul %286, %1, %cst_84 {dimension_numbers = #tpu.dot_dimension_numbers<[1], [0], [0], [1], [0, 0, 1, 1], [], []>} : vector<8x32xf32>, vector<32x128xf32>, vector<8x128xf32> -> vector<8x128xf32>
    %cst_85 = arith.constant dense<0.000000e+00> : vector<8x128xf32>
    %288 = tpu.matmul %266, %3, %cst_85 {dimension_numbers = #tpu.dot_dimension_numbers<[1], [0], [0], [1], [0, 0, 1, 1], [], []>} : vector<8x32xf32>, vector<32x128xf32>, vector<8x128xf32> -> vector<8x128xf32>
    %289 = arith.addf %287, %288 : vector<8x128xf32>
    %290 = arith.addf %289, %16 : vector<8x128xf32>
    %cst_86 = arith.constant 5.000000e-01 : f32
    %291 = vector.broadcast %cst_86 : f32 to vector<8x128xf32>
    %292 = arith.mulf %291, %290 : vector<8x128xf32>
    %293 = math.tanh %292 : vector<8x128xf32>
    %294 = vector.extract_strided_slice %293 {offsets = [0, 0], sizes = [8, 96], strides = [1, 1]} : vector<8x128xf32> to vector<8x96xf32>
    %cst_87 = arith.constant 5.000000e-01 : f32
    %295 = vector.broadcast %cst_87 : f32 to vector<8x96xf32>
    %296 = arith.mulf %295, %294 : vector<8x96xf32>
    %cst_88 = arith.constant 5.000000e-01 : f32
    %297 = vector.broadcast %cst_88 : f32 to vector<8x96xf32>
    %298 = arith.addf %296, %297 : vector<8x96xf32>
    %299 = vector.extract_strided_slice %298 {offsets = [0, 0], sizes = [8, 32], strides = [1, 1]} : vector<8x96xf32> to vector<8x32xf32>
    %300 = vector.extract_strided_slice %298 {offsets = [0, 32], sizes = [8, 32], strides = [1, 1]} : vector<8x96xf32> to vector<8x32xf32>
    %301 = vector.extract_strided_slice %298 {offsets = [0, 64], sizes = [8, 32], strides = [1, 1]} : vector<8x96xf32> to vector<8x32xf32>
    %302 = vector.extract_strided_slice %293 {offsets = [0, 96], sizes = [8, 32], strides = [1, 1]} : vector<8x128xf32> to vector<8x32xf32>
    %303 = arith.mulf %300, %264 : vector<8x32xf32>
    %304 = arith.mulf %299, %302 : vector<8x32xf32>
    %305 = arith.addf %303, %304 : vector<8x32xf32>
    %306 = math.tanh %305 : vector<8x32xf32>
    %307 = arith.mulf %301, %306 : vector<8x32xf32>
    %308 = vector.extract_strided_slice %14 {offsets = [56, 0], sizes = [8, 128], strides = [1, 1]} : vector<64x128xf32> to vector<8x128xf32>
    %cst_89 = arith.constant dense<0.000000e+00> : vector<8x128xf32>
    %309 = tpu.matmul %286, %2, %cst_89 {dimension_numbers = #tpu.dot_dimension_numbers<[1], [0], [0], [1], [0, 0, 1, 1], [], []>} : vector<8x32xf32>, vector<32x128xf32>, vector<8x128xf32> -> vector<8x128xf32>
    %310 = arith.addf %308, %309 : vector<8x128xf32>
    %cst_90 = arith.constant 5.000000e-01 : f32
    %311 = vector.broadcast %cst_90 : f32 to vector<8x128xf32>
    %312 = arith.mulf %311, %310 : vector<8x128xf32>
    %313 = math.tanh %312 : vector<8x128xf32>
    %314 = vector.extract_strided_slice %313 {offsets = [0, 0], sizes = [8, 96], strides = [1, 1]} : vector<8x128xf32> to vector<8x96xf32>
    %cst_91 = arith.constant 5.000000e-01 : f32
    %315 = vector.broadcast %cst_91 : f32 to vector<8x96xf32>
    %316 = arith.mulf %315, %314 : vector<8x96xf32>
    %cst_92 = arith.constant 5.000000e-01 : f32
    %317 = vector.broadcast %cst_92 : f32 to vector<8x96xf32>
    %318 = arith.addf %316, %317 : vector<8x96xf32>
    %319 = vector.extract_strided_slice %318 {offsets = [0, 0], sizes = [8, 32], strides = [1, 1]} : vector<8x96xf32> to vector<8x32xf32>
    %320 = vector.extract_strided_slice %318 {offsets = [0, 32], sizes = [8, 32], strides = [1, 1]} : vector<8x96xf32> to vector<8x32xf32>
    %321 = vector.extract_strided_slice %318 {offsets = [0, 64], sizes = [8, 32], strides = [1, 1]} : vector<8x96xf32> to vector<8x32xf32>
    %322 = vector.extract_strided_slice %313 {offsets = [0, 96], sizes = [8, 32], strides = [1, 1]} : vector<8x128xf32> to vector<8x32xf32>
    %323 = arith.mulf %320, %284 : vector<8x32xf32>
    %324 = arith.mulf %319, %322 : vector<8x32xf32>
    %325 = arith.addf %323, %324 : vector<8x32xf32>
    %326 = math.tanh %325 : vector<8x32xf32>
    %327 = arith.mulf %321, %326 : vector<8x32xf32>
    %cst_93 = arith.constant dense<0.000000e+00> : vector<8x128xf32>
    %328 = tpu.matmul %327, %1, %cst_93 {dimension_numbers = #tpu.dot_dimension_numbers<[1], [0], [0], [1], [0, 0, 1, 1], [], []>} : vector<8x32xf32>, vector<32x128xf32>, vector<8x128xf32> -> vector<8x128xf32>
    %cst_94 = arith.constant dense<0.000000e+00> : vector<8x128xf32>
    %329 = tpu.matmul %307, %3, %cst_94 {dimension_numbers = #tpu.dot_dimension_numbers<[1], [0], [0], [1], [0, 0, 1, 1], [], []>} : vector<8x32xf32>, vector<32x128xf32>, vector<8x128xf32> -> vector<8x128xf32>
    %330 = arith.addf %328, %329 : vector<8x128xf32>
    %331 = arith.addf %330, %16 : vector<8x128xf32>
    %cst_95 = arith.constant 5.000000e-01 : f32
    %332 = vector.broadcast %cst_95 : f32 to vector<8x128xf32>
    %333 = arith.mulf %332, %331 : vector<8x128xf32>
    %334 = math.tanh %333 : vector<8x128xf32>
    %335 = vector.extract_strided_slice %334 {offsets = [0, 0], sizes = [8, 96], strides = [1, 1]} : vector<8x128xf32> to vector<8x96xf32>
    %cst_96 = arith.constant 5.000000e-01 : f32
    %336 = vector.broadcast %cst_96 : f32 to vector<8x96xf32>
    %337 = arith.mulf %336, %335 : vector<8x96xf32>
    %cst_97 = arith.constant 5.000000e-01 : f32
    %338 = vector.broadcast %cst_97 : f32 to vector<8x96xf32>
    %339 = arith.addf %337, %338 : vector<8x96xf32>
    %340 = vector.extract_strided_slice %339 {offsets = [0, 0], sizes = [8, 32], strides = [1, 1]} : vector<8x96xf32> to vector<8x32xf32>
    %341 = vector.extract_strided_slice %339 {offsets = [0, 32], sizes = [8, 32], strides = [1, 1]} : vector<8x96xf32> to vector<8x32xf32>
    %342 = vector.extract_strided_slice %339 {offsets = [0, 64], sizes = [8, 32], strides = [1, 1]} : vector<8x96xf32> to vector<8x32xf32>
    %343 = vector.extract_strided_slice %334 {offsets = [0, 96], sizes = [8, 32], strides = [1, 1]} : vector<8x128xf32> to vector<8x32xf32>
    %344 = arith.mulf %341, %305 : vector<8x32xf32>
    %345 = arith.mulf %340, %343 : vector<8x32xf32>
    %346 = arith.addf %344, %345 : vector<8x32xf32>
    %347 = math.tanh %346 : vector<8x32xf32>
    %348 = arith.mulf %342, %347 : vector<8x32xf32>
    %cst_98 = arith.constant dense<0.000000e+00> : vector<8x64xf32>
    %349 = tpu.matmul %348, %6, %cst_98 {dimension_numbers = #tpu.dot_dimension_numbers<[1], [0], [0], [1], [0, 0, 1, 1], [], []>} : vector<8x32xf32>, vector<32x64xf32>, vector<8x64xf32> -> vector<8x64xf32>
    %350 = vector.broadcast %7 : vector<1x64xf32> to vector<8x64xf32>
    %351 = arith.addf %349, %350 : vector<8x64xf32>
    %cst_99 = arith.constant 0.000000e+00 : f32
    %352 = vector.broadcast %cst_99 : f32 to vector<8x64xf32>
    %353 = arith.maximumf %351, %352 : vector<8x64xf32>
    %354 = vector.broadcast %8 : vector<1x64xf32> to vector<8x64xf32>
    %355 = arith.mulf %353, %354 : vector<8x64xf32>
    %cst_100 = arith.constant dense<0.000000e+00> : vector<8xf32>
    %356 = vector.multi_reduction <add>, %355, %cst_100 [1] : vector<8x64xf32> to vector<8xf32>
    %357 = vector.shape_cast %356 : vector<8xf32> to vector<8x1xf32>
    %358 = vector.broadcast %9 : vector<1x1xf32> to vector<8x1xf32>
    %359 = arith.addf %357, %358 : vector<8x1xf32>
    %c0_101 = arith.constant 0 : index
    %c0_102 = arith.constant 0 : index
    %360 = vector.load %arg12[%c0_101, %c0_102] : memref<8x1xf32, #tpu.memory_space<vmem>>, vector<8x1xf32>
    tpu.vector_store %arg12[%c0_101, %c0_102], %359 {strides = array<i32>} : memref<8x1xf32, #tpu.memory_space<vmem>>, vector<8x1xf32>,
    return
  }
  func.func @transform_0(%arg0: i32) -> (i32, i32, i32) {
    %c0_i32 = arith.constant 0 : i32
    %c0_i32_0 = arith.constant 0 : i32
    %c0_i32_1 = arith.constant 0 : i32
    return %arg0, %c0_i32, %c0_i32_0 : i32, i32, i32
  }
  func.func @transform_1(%arg0: i32) -> (i32, i32) {
    %c0_i32 = arith.constant 0 : i32
    %c0_i32_0 = arith.constant 0 : i32
    %c0_i32_1 = arith.constant 0 : i32
    return %c0_i32, %c0_i32_0 : i32, i32
  }
  func.func @transform_2(%arg0: i32) -> (i32, i32) {
    %c0_i32 = arith.constant 0 : i32
    %c0_i32_0 = arith.constant 0 : i32
    %c0_i32_1 = arith.constant 0 : i32
    return %c0_i32, %c0_i32_0 : i32, i32
  }
  func.func @transform_3(%arg0: i32) -> (i32, i32) {
    %c0_i32 = arith.constant 0 : i32
    %c0_i32_0 = arith.constant 0 : i32
    %c0_i32_1 = arith.constant 0 : i32
    return %c0_i32, %c0_i32_0 : i32, i32
  }
  func.func @transform_4(%arg0: i32) -> (i32, i32) {
    %c0_i32 = arith.constant 0 : i32
    %c0_i32_0 = arith.constant 0 : i32
    %c0_i32_1 = arith.constant 0 : i32
    return %c0_i32, %c0_i32_0 : i32, i32
  }
  func.func @transform_5(%arg0: i32) -> (i32, i32) {
    %c0_i32 = arith.constant 0 : i32
    %c0_i32_0 = arith.constant 0 : i32
    %c0_i32_1 = arith.constant 0 : i32
    return %c0_i32, %c0_i32_0 : i32, i32
  }
  func.func @transform_6(%arg0: i32) -> (i32, i32) {
    %c0_i32 = arith.constant 0 : i32
    %c0_i32_0 = arith.constant 0 : i32
    %c0_i32_1 = arith.constant 0 : i32
    return %c0_i32, %c0_i32_0 : i32, i32
  }
  func.func @transform_7(%arg0: i32) -> (i32, i32) {
    %c0_i32 = arith.constant 0 : i32
    %c0_i32_0 = arith.constant 0 : i32
    %c0_i32_1 = arith.constant 0 : i32
    return %c0_i32, %c0_i32_0 : i32, i32
  }
  func.func @transform_8(%arg0: i32) -> (i32, i32) {
    %c0_i32 = arith.constant 0 : i32
    %c0_i32_0 = arith.constant 0 : i32
    %c0_i32_1 = arith.constant 0 : i32
    return %c0_i32, %c0_i32_0 : i32, i32
  }
  func.func @transform_9(%arg0: i32) -> (i32, i32) {
    %c0_i32 = arith.constant 0 : i32
    %c0_i32_0 = arith.constant 0 : i32
    %c0_i32_1 = arith.constant 0 : i32
    return %c0_i32, %c0_i32_0 : i32, i32
  }
  func.func @transform_10(%arg0: i32) -> (i32, i32) {
    %c0_i32 = arith.constant 0 : i32
    %c0_i32_0 = arith.constant 0 : i32
    %c0_i32_1 = arith.constant 0 : i32
    return %c0_i32, %c0_i32_0 : i32, i32
  }
  func.func @transform_11(%arg0: i32) -> (i32, i32) {
    %c0_i32 = arith.constant 0 : i32
    %c0_i32_0 = arith.constant 0 : i32
    return %arg0, %c0_i32 : i32, i32
  }
}

</mosaic_0001>

<llo_original>
// kernel: tpu_custom_call.1
$region0: #{tpu_custom_call.1}
  #allocation0 [shape = 'u32[]', space=smem, size = 0x4, offset = 0x4, fixed_abs, tag = 'smem constant byte address 0x4 - core index']
  #allocation1 [shape = 'u32[144,128]{1,0:T(1,128)}', space=vmem, size = 0x12000, scoped, tag = 'internal scratch']
  #allocation2 [shape = 'f32[1,1]{1,0:T(1,128)S(1)}', space=vmem, size = 0x200, scoped, tag = 'scoped memory for tpu_custom_call.1']
  %s0 = inlined_call_operand.vmem [shape: f32[1,64,4], index: 0, kind: input, shape index: {}]
  %s1 = inlined_call_operand.hbm [shape: f32[4,128], index: 1, kind: input, shape index: {}]
  %s2 = inlined_call_operand.vmem [shape: f32[32,128], index: 2, kind: input, shape index: {}]
  %s3 = inlined_call_operand.vmem [shape: f32[1,128], index: 3, kind: input, shape index: {}]
  %s4 = inlined_call_operand.vmem [shape: f32[32,128], index: 4, kind: input, shape index: {}]
  %s5 = inlined_call_operand.hbm [shape: f32[32,128], index: 5, kind: input, shape index: {}]
  %s6 = inlined_call_operand.vmem [shape: f32[1,128], index: 6, kind: input, shape index: {}]
  %s7 = inlined_call_operand.vmem [shape: f32[32,64], index: 7, kind: input, shape index: {}]
  %s8 = inlined_call_operand.vmem [shape: f32[1,64], index: 8, kind: input, shape index: {}]
  %s9 = inlined_call_operand.vmem [shape: f32[1,64], index: 9, kind: input, shape index: {}]
  %s10 = inlined_call_operand.<no memory space> [shape: f32[1,1], index: 10, kind: input, shape index: {}]
  %s11 = inlined_call_operand.vmem [shape: f32[8,1], index: 11, kind: output, shape index: {}]
  %s12 = sld [smem:[#allocation0]]
  $region62: #{tpu_custom_call.1} parent=0
    _
  %s14 = ssub.s32 1, %s12
  %s15 = scalar_select 0, %s14, %s12
  %v16 = vstv %s10
  %17 = vst [vmem:[#allocation2] sm:$0x1] %v16
  $region1: #{tpu_custom_call.1} parent=0
    #allocation3 [shape = 'u8[2048]{0}', space=vmem, size = 0x800, scoped, tag = 'input window, operand 1, single buffered']
    #allocation4 [shape = 's32[1]{0}', space=sflag, size = 0x4, scoped, tag = 'scoped memory for tpu_custom_call.1']
    #allocation5 [shape = 'u8[16384]{0}', space=vmem, size = 0x4000, scoped, tag = 'input window, operand 5, single buffered']
    #allocation6 [shape = 's32[1]{0}', space=sflag, size = 0x4, scoped, tag = 'scoped memory for tpu_custom_call.1']
    %18 = vsyncpa [#allocation4], 0
    %19 = vsyncpa [#allocation6], 0
    // Predicated region
    $region2: #{tpu_custom_call.1} parent=1 // pred_check
      _
    $region3: #{tpu_custom_call.1} parent=1 // pred_check_branch
      %21 = sbr.rel (0) target = $region5
    $region4: #{tpu_custom_call.1} parent=1 // pred_region
      _
    $region5: #{tpu_custom_call.1} parent=1 // pred_fallthru
      _
    // Predicated region
    $region6: #{tpu_custom_call.1} parent=1 // pred_check
      _
    $region7: #{tpu_custom_call.1} parent=1 // pred_check_branch
      %23 = sbr.rel (0) target = $region9
    $region8: #{tpu_custom_call.1} parent=1 // pred_region
      %s25 = ssub.s32 64, 64
      %26 = vsyncadd [#allocation4], %s25
      %s28 = sshll.u32 [#allocation3], 4
      %s29 = int_to_ptr.vmem [resolvable:$true] %s28
      %31 = dma.hbm_to_vmem [thread:$0]  %s1, 64, %s29, [#allocation4]
    $region9: #{tpu_custom_call.1} parent=1 // pred_fallthru
      _
    // Predicated region
    $region10: #{tpu_custom_call.1} parent=1 // pred_check
      _
    $region11: #{tpu_custom_call.1} parent=1 // pred_check_branch
      %33 = sbr.rel (0) target = $region13
    $region12: #{tpu_custom_call.1} parent=1 // pred_region
      _
    $region13: #{tpu_custom_call.1} parent=1 // pred_fallthru
      _
    // Predicated region
    $region14: #{tpu_custom_call.1} parent=1 // pred_check
      _
    $region15: #{tpu_custom_call.1} parent=1 // pred_check_branch
      %35 = sbr.rel (0) target = $region17
    $region16: #{tpu_custom_call.1} parent=1 // pred_region
      _
    $region17: #{tpu_custom_call.1} parent=1 // pred_fallthru
      _
    // Predicated region
    $region18: #{tpu_custom_call.1} parent=1 // pred_check
      _
    $region19: #{tpu_custom_call.1} parent=1 // pred_check_branch
      %37 = sbr.rel (0) target = $region21
    $region20: #{tpu_custom_call.1} parent=1 // pred_region
      _
    $region21: #{tpu_custom_call.1} parent=1 // pred_fallthru
      _
    // Predicated region
    $region22: #{tpu_custom_call.1} parent=1 // pred_check
      _
    $region23: #{tpu_custom_call.1} parent=1 // pred_check_branch
      %39 = sbr.rel (0) target = $region25
    $region24: #{tpu_custom_call.1} parent=1 // pred_region
      %s41 = ssub.s32 512, 512
      %42 = vsyncadd [#allocation6], %s41
      %s43 = sshll.u32 [#allocation5], 4
      %s44 = int_to_ptr.vmem [resolvable:$true] %s43
      %49 = dma.hbm_to_vmem [thread:$0]  %s5, 512, %s44, [#allocation6], 128, 128, 8
    $region25: #{tpu_custom_call.1} parent=1 // pred_fallthru
      _
    // Predicated region
    $region26: #{tpu_custom_call.1} parent=1 // pred_check
      _
    $region27: #{tpu_custom_call.1} parent=1 // pred_check_branch
      %51 = sbr.rel (0) target = $region29
    $region28: #{tpu_custom_call.1} parent=1 // pred_region
      _
    $region29: #{tpu_custom_call.1} parent=1 // pred_fallthru
      _
    // Predicated region
    $region30: #{tpu_custom_call.1} parent=1 // pred_check
      _
    $region31: #{tpu_custom_call.1} parent=1 // pred_check_branch
      %53 = sbr.rel (0) target = $region33
    $region32: #{tpu_custom_call.1} parent=1 // pred_region
      _
    $region33: #{tpu_custom_call.1} parent=1 // pred_fallthru
      _
    // Predicated region
    $region34: #{tpu_custom_call.1} parent=1 // pred_check
      _
    $region35: #{tpu_custom_call.1} parent=1 // pred_check_branch
      %55 = sbr.rel (0) target = $region37
    $region36: #{tpu_custom_call.1} parent=1 // pred_region
      _
    $region37: #{tpu_custom_call.1} parent=1 // pred_fallthru
      _
    // Predicated region
    $region38: #{tpu_custom_call.1} parent=1 // pred_check
      _
    $region39: #{tpu_custom_call.1} parent=1 // pred_check_branch
      %57 = sbr.rel (0) target = $region41
    $region40: #{tpu_custom_call.1} parent=1 // pred_region
      _
    $region41: #{tpu_custom_call.1} parent=1 // pred_fallthru
      _
    // Predicated region
    $region42: #{tpu_custom_call.1} parent=1 // pred_check
      _
    $region43: #{tpu_custom_call.1} parent=1 // pred_check_branch
      %59 = sbr.rel (0) target = $region45
    $region44: #{tpu_custom_call.1} parent=1 // pred_region
      _
    $region45: #{tpu_custom_call.1} parent=1 // pred_fallthru
      _
    // Predicated region
    $region46: #{tpu_custom_call.1} parent=1 // pred_check
      _
    $region47: #{tpu_custom_call.1} parent=1 // pred_check_branch
      %61 = sbr.rel (0) target = $region49
    $region48: #{tpu_custom_call.1} parent=1 // pred_region
      %62 = dma.done [#allocation4], 64
    $region49: #{tpu_custom_call.1} parent=1 // pred_fallthru
      _
    // Predicated region
    $region50: #{tpu_custom_call.1} parent=1 // pred_check
      _
    $region51: #{tpu_custom_call.1} parent=1 // pred_check_branch
      %64 = sbr.rel (0) target = $region53
    $region52: #{tpu_custom_call.1} parent=1 // pred_region
      %65 = dma.done [#allocation6], 512
    $region53: #{tpu_custom_call.1} parent=1 // pred_fallthru
      _
    %v66 = vld [vmem:[#allocation3] sm:$0xf]
    %v67 = vld [vmem:[%s4] sm:$0xff]
    %v68 = vld [vmem:[%s4 + $0x8] sm:$0xff]
    %v69 = vld [vmem:[%s4 + $0x10] sm:$0xff]
    %v70 = vld [vmem:[%s4 + $0x18] sm:$0xff]
    %v71 = vld [vmem:[%s2] sm:$0xff]
    %v72 = vld [vmem:[%s2 + $0x8] sm:$0xff]
    %v73 = vld [vmem:[%s2 + $0x10] sm:$0xff]
    %v74 = vld [vmem:[%s2 + $0x18] sm:$0xff]
    %v75 = vld [vmem:[#allocation5] sm:$0xff]
    %v76 = vld [vmem:[#allocation5 + $0x8] sm:$0xff]
    %v77 = vld [vmem:[#allocation5 + $0x10] sm:$0xff]
    %v78 = vld [vmem:[#allocation5 + $0x18] sm:$0xff]
    %v79 = vld [vmem:[%s3] sm:$0x1]
    %v80 = vld [vmem:[%s6] sm:$0x1]
    %v81 = vld [vmem:[%s7] sm:$0xff]
    %v82 = vld [vmem:[%s7 + $0x8] sm:$0xff]
    %v83 = vld [vmem:[%s7 + $0x10] sm:$0xff]
    %v84 = vld [vmem:[%s7 + $0x18] sm:$0xff]
    %v85 = vld [vmem:[%s8] sm:$0x1]
    %v86 = vld [vmem:[%s9] sm:$0x1]
    %v87 = vld [vmem:[#allocation2] sm:$0x1]
    %v88 = vld [vmem:[%s0] sm:$0xff]
    %v89 = vld [vmem:[%s0 + $0x8] sm:$0xff]
    %v90 = vld [vmem:[%s0 + $0x10] sm:$0xff]
    %v91 = vld [vmem:[%s0 + $0x18] sm:$0xff]
    %v92 = vld [vmem:[%s0 + $0x20] sm:$0xff]
    %v93 = vld [vmem:[%s0 + $0x28] sm:$0xff]
    %v94 = vld [vmem:[%s0 + $0x30] sm:$0xff]
    %v95 = vld [vmem:[%s0 + $0x38] sm:$0xff]
    %v97 = vlaneseq
    %v98 = vshrl.u32 %v97, 7
    %v99 = vsub.s32 0, %v98
    %v100 = vrot.slane %v79, %v99
    %vm102 = vcmask 31744
    %v104 = vsel %vm102, %v88, 0
    %v107 = vsel %vm102, %v89, 0
    %v110 = vsel %vm102, %v90, 0
    %v113 = vsel %vm102, %v91, 0
    %v116 = vsel %vm102, %v92, 0
    %v119 = vsel %vm102, %v93, 0
    %v122 = vsel %vm102, %v94, 0
    %v125 = vsel %vm102, %v95, 0
    %vm127 = vcmask 1043456
    %v129 = vsel %vm127, %v66, 0
    %131 = vmatprep.subr.mxu0 0.0
    %132 = vmatpush1.msra.mxu0 %v129
    %133 = vmatprep.subr.mxu0 0.0
    %134 = vmatpush1.msra.mxu0 0.0
    %135 = vmatprep.subr.mxu0 0.0
    %136 = vmatpush1.msra.mxu0 0.0
    %137 = vmatprep.subr.mxu0 0.0
    %138 = vmatpush1.msra.mxu0 0.0
    %139 = vmatprep.subr.mxu0 0.0
    %140 = vmatpush1.msra.mxu0 0.0
    %141 = vmatprep.subr.mxu0 0.0
    %142 = vmatpush1.msra.mxu0 0.0
    %143 = vmatprep.subr.mxu0 0.0
    %144 = vmatpush1.msra.mxu0 0.0
    %145 = vmatprep.subr.mxu0 0.0
    %146 = vmatpush1.msra.mxu0 0.0
    %147 = vmatprep.subr.mxu0 0.0
    %148 = vmatpush1.msra.mxu0 0.0
    %149 = vmatprep.subr.mxu0 0.0
    %150 = vmatpush1.msra.mxu0 0.0
    %151 = vmatprep.subr.mxu0 0.0
    %152 = vmatpush1.msra.mxu0 0.0
    %153 = vmatprep.subr.mxu0 0.0
    %154 = vmatpush1.msra.mxu0 0.0
    %155 = vmatprep.subr.mxu0 0.0
    %156 = vmatpush1.msra.mxu0 0.0
    %157 = vmatprep.subr.mxu0 0.0
    %158 = vmatpush1.msra.mxu0 0.0
    %159 = vmatprep.subr.mxu0 0.0
    %160 = vmatpush1.msra.mxu0 0.0
    %161 = vmatprep.subr.mxu0 0.0
    %162 = vmatpush1.msra.mxu0 0.0
    %163 = vmatprep.subr.mxu0 0.0
    %164 = vmatpush1.msra.mxu0 0.0
    %165 = vmatprep.subr.mxu0 0.0
    %166 = vmatpush1.msra.mxu0 0.0
    %167 = vmatprep.subr.mxu0 0.0
    %168 = vmatpush1.msra.mxu0 0.0
    %169 = vmatprep.subr.mxu0 0.0
    %170 = vmatpush1.msra.mxu0 0.0
    %171 = vmatprep.subr.mxu0 0.0
    %172 = vmatpush1.msra.mxu0 0.0
    %173 = vmatprep.subr.mxu0 0.0
    %174 = vmatpush1.msra.mxu0 0.0
    %175 = vmatprep.subr.mxu0 0.0
    %176 = vmatpush1.msra.mxu0 0.0
    %177 = vmatprep.subr.mxu0 0.0
    %178 = vmatpush1.msra.mxu0 0.0
    %179 = vmatprep.subr.mxu0 0.0
    %180 = vmatpush1.msra.mxu0 0.0
    %181 = vmatprep.subr.mxu0 0.0
    %182 = vmatpush1.msra.mxu0 0.0
    %183 = vmatprep.subr.mxu0 0.0
    %184 = vmatpush1.msra.mxu0 0.0
    %185 = vmatprep.subr.mxu0 0.0
    %186 = vmatpush1.msra.mxu0 0.0
    %187 = vmatprep.subr.mxu0 0.0
    %188 = vmatpush1.msra.mxu0 0.0
    %189 = vmatprep.subr.mxu0 0.0
    %190 = vmatpush1.msra.mxu0 0.0
    %191 = vmatprep.subr.mxu0 0.0
    %192 = vmatpush1.msra.mxu0 0.0
    %193 = vmatprep.subr.mxu0 0.0
    %194 = vmatpush1.msra.mxu0 0.0
    %195 = vmatprep.mubr.f32.mxu0 0.0
    %196 = vmatmul.mubr.f32.gmra.mrb[0].mxu0 %v104
    %v197 = vpop.f32.mrb[0].mxu0
    %v198 = vadd.f32 %v100, %v197
    %v199 = vpop.f32.mrb[0].mxu0
    %200 = vmatprep.mubr.f32.mxu0 0.0
    %201 = vmatmul.mubr.f32.gmra.mrb[0].mxu0 %v107
    %v202 = vpop.f32.mrb[0].mxu0
    %v203 = vadd.f32 %v100, %v202
    %v204 = vpop.f32.mrb[0].mxu0
    %205 = vmatprep.mubr.f32.mxu0 0.0
    %206 = vmatmul.mubr.f32.gmra.mrb[0].mxu0 %v110
    %v207 = vpop.f32.mrb[0].mxu0
    %v208 = vadd.f32 %v100, %v207
    %v209 = vpop.f32.mrb[0].mxu0
    %210 = vmatprep.mubr.f32.mxu0 0.0
    %211 = vmatmul.mubr.f32.gmra.mrb[0].mxu0 %v113
    %v212 = vpop.f32.mrb[0].mxu0
    %v213 = vadd.f32 %v100, %v212
    %v214 = vpop.f32.mrb[0].mxu0
    %215 = vmatprep.mubr.f32.mxu0 0.0
    %216 = vmatmul.mubr.f32.gmra.mrb[0].mxu0 %v116
    %v217 = vpop.f32.mrb[0].mxu0
    %v218 = vadd.f32 %v100, %v217
    %v219 = vpop.f32.mrb[0].mxu0
    %220 = vmatprep.mubr.f32.mxu0 0.0
    %221 = vmatmul.mubr.f32.gmra.mrb[0].mxu0 %v119
    %v222 = vpop.f32.mrb[0].mxu0
    %v223 = vadd.f32 %v100, %v222
    %v224 = vpop.f32.mrb[0].mxu0
    %225 = vmatprep.mubr.f32.mxu0 0.0
    %226 = vmatmul.mubr.f32.gmra.mrb[0].mxu0 %v122
    %v227 = vpop.f32.mrb[0].mxu0
    %v228 = vadd.f32 %v100, %v227
    %v229 = vpop.f32.mrb[0].mxu0
    %230 = vmatprep.mubr.f32.mxu0 0.0
    %231 = vmatmul.mubr.f32.gmra.mrb[0].mxu0 %v125
    %v232 = vpop.f32.mrb[0].mxu0
    %v233 = vadd.f32 %v100, %v232
    %v234 = vpop.f32.mrb[0].mxu0
    %235 = vdwg.mxu0
    %v237 = vlaneseq
    %v238 = vshrl.u32 %v237, 7
    %v239 = vsub.s32 0, %v238
    %v240 = vrot.slane %v80, %v239
    %vm242 = vcmask 261120
    %v244 = vsel %vm242, 0.0, 0
    %246 = vmatprep.subr.mxu0 0.0
    %247 = vmatpush1.msra.mxu0 %v71
    %248 = vmatprep.subr.mxu0 0.0
    %249 = vmatpush1.msra.mxu0 %v72
    %250 = vmatprep.subr.mxu0 0.0
    %251 = vmatpush1.msra.mxu0 %v73
    %252 = vmatprep.subr.mxu0 0.0
    %253 = vmatpush1.msra.mxu0 %v74
    %254 = vmatprep.subr.mxu0 0.0
    %255 = vmatpush1.msra.mxu0 0.0
    %256 = vmatprep.subr.mxu0 0.0
    %257 = vmatpush1.msra.mxu0 0.0
    %258 = vmatprep.subr.mxu0 0.0
    %259 = vmatpush1.msra.mxu0 0.0
    %260 = vmatprep.subr.mxu0 0.0
    %261 = vmatpush1.msra.mxu0 0.0
    %262 = vmatprep.subr.mxu0 0.0
    %263 = vmatpush1.msra.mxu0 0.0
    %264 = vmatprep.subr.mxu0 0.0
    %265 = vmatpush1.msra.mxu0 0.0
    %266 = vmatprep.subr.mxu0 0.0
    %267 = vmatpush1.msra.mxu0 0.0
    %268 = vmatprep.subr.mxu0 0.0
    %269 = vmatpush1.msra.mxu0 0.0
    %270 = vmatprep.subr.mxu0 0.0
    %271 = vmatpush1.msra.mxu0 0.0
    %272 = vmatprep.subr.mxu0 0.0
    %273 = vmatpush1.msra.mxu0 0.0
    %274 = vmatprep.subr.mxu0 0.0
    %275 = vmatpush1.msra.mxu0 0.0
    %276 = vmatprep.subr.mxu0 0.0
    %277 = vmatpush1.msra.mxu0 0.0
    %278 = vmatprep.subr.mxu0 0.0
    %279 = vmatpush1.msra.mxu0 0.0
    %280 = vmatprep.subr.mxu0 0.0
    %281 = vmatpush1.msra.mxu0 0.0
    %282 = vmatprep.subr.mxu0 0.0
    %283 = vmatpush1.msra.mxu0 0.0
    %284 = vmatprep.subr.mxu0 0.0
    %285 = vmatpush1.msra.mxu0 0.0
    %286 = vmatprep.subr.mxu0 0.0
    %287 = vmatpush1.msra.mxu0 0.0
    %288 = vmatprep.subr.mxu0 0.0
    %289 = vmatpush1.msra.mxu0 0.0
    %290 = vmatprep.subr.mxu0 0.0
    %291 = vmatpush1.msra.mxu0 0.0
    %292 = vmatprep.subr.mxu0 0.0
    %293 = vmatpush1.msra.mxu0 0.0
    %294 = vmatprep.subr.mxu0 0.0
    %295 = vmatpush1.msra.mxu0 0.0
    %296 = vmatprep.subr.mxu0 0.0
    %297 = vmatpush1.msra.mxu0 0.0
    %298 = vmatprep.subr.mxu0 0.0
    %299 = vmatpush1.msra.mxu0 0.0
    %300 = vmatprep.subr.mxu0 0.0
    %301 = vmatpush1.msra.mxu0 0.0
    %302 = vmatprep.subr.mxu0 0.0
    %303 = vmatpush1.msra.mxu0 0.0
    %304 = vmatprep.subr.mxu0 0.0
    %305 = vmatpush1.msra.mxu0 0.0
    %306 = vmatprep.subr.mxu0 0.0
    %307 = vmatpush1.msra.mxu0 0.0
    %308 = vmatprep.subr.mxu0 0.0
    %309 = vmatpush1.msra.mxu0 0.0
    %310 = vmatprep.mubr.f32.mxu0 0.0
    %311 = vmatmul.mubr.f32.gmra.mrb[0].mxu0 %v244
    %v312 = vpop.f32.mrb[0].mxu0
    %v313 = vadd.f32 0.0, %v312
    %v314 = vpop.f32.mrb[0].mxu0
    %315 = vdwg.mxu0
    %v316 = vadd.f32 %v198, %v313
    %v317 = vmul.f32 %v316, 0.5
    %v318 = vtanh.pop %v317
    %v319 = vmul.f32 %v318, 0.5
    %v320 = vadd.f32 %v319, 0.5
    %v321 = vmul.f32 %v320, 0.0
    %323 = vrot.lane.b32.xlu0 %v318, 32
    %v324 = vpop.permute.xlu0 %323
    %v326 = vmul.f32 %v320, %v324
    %328 = vrot.lane.b32.xlu0 %v326, 32
    %v329 = vpop.permute.xlu0 %328
    %v331 = vadd.f32 %v321, %v329
    %v332 = vtanh.pop %v331
    %334 = vrot.lane.b32.xlu0 %v332, 32
    %v335 = vpop.permute.xlu0 %334
    %v337 = vmul.f32 %v320, %v335
    %338 = vmatprep.subr.mxu0 0.0
    %339 = vmatpush1.msra.mxu0 %v75
    %340 = vmatprep.subr.mxu0 0.0
    %341 = vmatpush1.msra.mxu0 %v76
    %342 = vmatprep.subr.mxu0 0.0
    %343 = vmatpush1.msra.mxu0 %v77
    %344 = vmatprep.subr.mxu0 0.0
    %345 = vmatpush1.msra.mxu0 %v78
    %346 = vmatprep.subr.mxu0 0.0
    %347 = vmatpush1.msra.mxu0 0.0
    %348 = vmatprep.subr.mxu0 0.0
    %349 = vmatpush1.msra.mxu0 0.0
    %350 = vmatprep.subr.mxu0 0.0
    %351 = vmatpush1.msra.mxu0 0.0
    %352 = vmatprep.subr.mxu0 0.0
    %353 = vmatpush1.msra.mxu0 0.0
    %354 = vmatprep.subr.mxu0 0.0
    %355 = vmatpush1.msra.mxu0 0.0
    %356 = vmatprep.subr.mxu0 0.0
    %357 = vmatpush1.msra.mxu0 0.0
    %358 = vmatprep.subr.mxu0 0.0
    %359 = vmatpush1.msra.mxu0 0.0
    %360 = vmatprep.subr.mxu0 0.0
    %361 = vmatpush1.msra.mxu0 0.0
    %362 = vmatprep.subr.mxu0 0.0
    %363 = vmatpush1.msra.mxu0 0.0
    %364 = vmatprep.subr.mxu0 0.0
    %365 = vmatpush1.msra.mxu0 0.0
    %366 = vmatprep.subr.mxu0 0.0
    %367 = vmatpush1.msra.mxu0 0.0
    %368 = vmatprep.subr.mxu0 0.0
    %369 = vmatpush1.msra.mxu0 0.0
    %370 = vmatprep.subr.mxu0 0.0
    %371 = vmatpush1.msra.mxu0 0.0
    %372 = vmatprep.subr.mxu0 0.0
    %373 = vmatpush1.msra.mxu0 0.0
    %374 = vmatprep.subr.mxu0 0.0
    %375 = vmatpush1.msra.mxu0 0.0
    %376 = vmatprep.subr.mxu0 0.0
    %377 = vmatpush1.msra.mxu0 0.0
    %378 = vmatprep.subr.mxu0 0.0
    %379 = vmatpush1.msra.mxu0 0.0
    %380 = vmatprep.subr.mxu0 0.0
    %381 = vmatpush1.msra.mxu0 0.0
    %382 = vmatprep.subr.mxu0 0.0
    %383 = vmatpush1.msra.mxu0 0.0
    %384 = vmatprep.subr.mxu0 0.0
    %385 = vmatpush1.msra.mxu0 0.0
    %386 = vmatprep.subr.mxu0 0.0
    %387 = vmatpush1.msra.mxu0 0.0
    %388 = vmatprep.subr.mxu0 0.0
    %389 = vmatpush1.msra.mxu0 0.0
    %390 = vmatprep.subr.mxu0 0.0
    %391 = vmatpush1.msra.mxu0 0.0
    %392 = vmatprep.subr.mxu0 0.0
    %393 = vmatpush1.msra.mxu0 0.0
    %394 = vmatprep.subr.mxu0 0.0
    %395 = vmatpush1.msra.mxu0 0.0
    %396 = vmatprep.subr.mxu0 0.0
    %397 = vmatpush1.msra.mxu0 0.0
    %398 = vmatprep.subr.mxu0 0.0
    %399 = vmatpush1.msra.mxu0 0.0
    %400 = vmatprep.subr.mxu0 0.0
    %401 = vmatpush1.msra.mxu0 0.0
    %402 = vmatprep.mubr.f32.mxu0 0.0
    %403 = vmatmul.mubr.f32.gmra.mrb[0].mxu0 %v244
    %v404 = vpop.f32.mrb[0].mxu0
    %v405 = vadd.f32 0.0, %v404
    %v406 = vpop.f32.mrb[0].mxu0
    %407 = vdwg.mxu0
    %409 = vrot.lane.b32.xlu0 %v337, 64
    %v410 = vpop.permute.xlu0 %409
    %v411 = vsel %vm242, %v410, 0
    %413 = vmatprep.subr.mxu0 0.0
    %414 = vmatpush1.msra.mxu0 %v67
    %415 = vmatprep.subr.mxu0 0.0
    %416 = vmatpush1.msra.mxu0 %v68
    %417 = vmatprep.subr.mxu0 0.0
    %418 = vmatpush1.msra.mxu0 %v69
    %419 = vmatprep.subr.mxu0 0.0
    %420 = vmatpush1.msra.mxu0 %v70
    %421 = vmatprep.subr.mxu0 0.0
    %422 = vmatpush1.msra.mxu0 0.0
    %423 = vmatprep.subr.mxu0 0.0
    %424 = vmatpush1.msra.mxu0 0.0
    %425 = vmatprep.subr.mxu0 0.0
    %426 = vmatpush1.msra.mxu0 0.0
    %427 = vmatprep.subr.mxu0 0.0
    %428 = vmatpush1.msra.mxu0 0.0
    %429 = vmatprep.subr.mxu0 0.0
    %430 = vmatpush1.msra.mxu0 0.0
    %431 = vmatprep.subr.mxu0 0.0
    %432 = vmatpush1.msra.mxu0 0.0
    %433 = vmatprep.subr.mxu0 0.0
    %434 = vmatpush1.msra.mxu0 0.0
    %435 = vmatprep.subr.mxu0 0.0
    %436 = vmatpush1.msra.mxu0 0.0
    %437 = vmatprep.subr.mxu0 0.0
    %438 = vmatpush1.msra.mxu0 0.0
    %439 = vmatprep.subr.mxu0 0.0
    %440 = vmatpush1.msra.mxu0 0.0
    %441 = vmatprep.subr.mxu0 0.0
    %442 = vmatpush1.msra.mxu0 0.0
    %443 = vmatprep.subr.mxu0 0.0
    %444 = vmatpush1.msra.mxu0 0.0
    %445 = vmatprep.subr.mxu0 0.0
    %446 = vmatpush1.msra.mxu0 0.0
    %447 = vmatprep.subr.mxu0 0.0
    %448 = vmatpush1.msra.mxu0 0.0
    %449 = vmatprep.subr.mxu0 0.0
    %450 = vmatpush1.msra.mxu0 0.0
    %451 = vmatprep.subr.mxu0 0.0
    %452 = vmatpush1.msra.mxu0 0.0
    %453 = vmatprep.subr.mxu0 0.0
    %454 = vmatpush1.msra.mxu0 0.0
    %455 = vmatprep.subr.mxu0 0.0
    %456 = vmatpush1.msra.mxu0 0.0
    %457 = vmatprep.subr.mxu0 0.0
    %458 = vmatpush1.msra.mxu0 0.0
    %459 = vmatprep.subr.mxu0 0.0
    %460 = vmatpush1.msra.mxu0 0.0
    %461 = vmatprep.subr.mxu0 0.0
    %462 = vmatpush1.msra.mxu0 0.0
    %463 = vmatprep.subr.mxu0 0.0
    %464 = vmatpush1.msra.mxu0 0.0
    %465 = vmatprep.subr.mxu0 0.0
    %466 = vmatpush1.msra.mxu0 0.0
    %467 = vmatprep.subr.mxu0 0.0
    %468 = vmatpush1.msra.mxu0 0.0
    %469 = vmatprep.subr.mxu0 0.0
    %470 = vmatpush1.msra.mxu0 0.0
    %471 = vmatprep.subr.mxu0 0.0
    %472 = vmatpush1.msra.mxu0 0.0
    %473 = vmatprep.subr.mxu0 0.0
    %474 = vmatpush1.msra.mxu0 0.0
    %475 = vmatprep.subr.mxu0 0.0
    %476 = vmatpush1.msra.mxu0 0.0
    %477 = vmatprep.mubr.f32.mxu0 0.0
    %478 = vmatmul.mubr.f32.gmra.mrb[0].mxu0 %v411
    %v479 = vpop.f32.mrb[0].mxu0
    %v480 = vadd.f32 %v405, %v479
    %v481 = vpop.f32.mrb[0].mxu0
    %482 = vdwg.mxu0
    %v483 = vadd.f32 %v480, %v240
    %v484 = vmul.f32 %v483, 0.5
    %v485 = vtanh.pop %v484
    %v486 = vmul.f32 %v485, 0.5
    %v487 = vadd.f32 %v486, 0.5
    %v488 = vmul.f32 %v487, 0.0
    %490 = vrot.lane.b32.xlu0 %v485, 32
    %v491 = vpop.permute.xlu0 %490
    %v493 = vmul.f32 %v487, %v491
    %495 = vrot.lane.b32.xlu0 %v493, 32
    %v496 = vpop.permute.xlu0 %495
    %v498 = vadd.f32 %v488, %v496
    %v499 = vtanh.pop %v498
    %501 = vrot.lane.b32.xlu0 %v499, 32
    %v502 = vpop.permute.xlu0 %501
    %v504 = vmul.f32 %v487, %v502
    %505 = vmatprep.subr.mxu0 0.0
    %506 = vmatpush1.msra.mxu0 %v71
    %507 = vmatprep.subr.mxu0 0.0
    %508 = vmatpush1.msra.mxu0 %v72
    %509 = vmatprep.subr.mxu0 0.0
    %510 = vmatpush1.msra.mxu0 %v73
    %511 = vmatprep.subr.mxu0 0.0
    %512 = vmatpush1.msra.mxu0 %v74
    %513 = vmatprep.subr.mxu0 0.0
    %514 = vmatpush1.msra.mxu0 0.0
    %515 = vmatprep.subr.mxu0 0.0
    %516 = vmatpush1.msra.mxu0 0.0
    %517 = vmatprep.subr.mxu0 0.0
    %518 = vmatpush1.msra.mxu0 0.0
    %519 = vmatprep.subr.mxu0 0.0
    %520 = vmatpush1.msra.mxu0 0.0
    %521 = vmatprep.subr.mxu0 0.0
    %522 = vmatpush1.msra.mxu0 0.0
    %523 = vmatprep.subr.mxu0 0.0
    %524 = vmatpush1.msra.mxu0 0.0
    %525 = vmatprep.subr.mxu0 0.0
    %526 = vmatpush1.msra.mxu0 0.0
    %527 = vmatprep.subr.mxu0 0.0
    %528 = vmatpush1.msra.mxu0 0.0
    %529 = vmatprep.subr.mxu0 0.0
    %530 = vmatpush1.msra.mxu0 0.0
    %531 = vmatprep.subr.mxu0 0.0
    %532 = vmatpush1.msra.mxu0 0.0
    %533 = vmatprep.subr.mxu0 0.0
    %534 = vmatpush1.msra.mxu0 0.0
    %535 = vmatprep.subr.mxu0 0.0
    %536 = vmatpush1.msra.mxu0 0.0
    %537 = vmatprep.subr.mxu0 0.0
    %538 = vmatpush1.msra.mxu0 0.0
    %539 = vmatprep.subr.mxu0 0.0
    %540 = vmatpush1.msra.mxu0 0.0
    %541 = vmatprep.subr.mxu0 0.0
    %542 = vmatpush1.msra.mxu0 0.0
    %543 = vmatprep.subr.mxu0 0.0
    %544 = vmatpush1.msra.mxu0 0.0
    %545 = vmatprep.subr.mxu0 0.0
    %546 = vmatpush1.msra.mxu0 0.0
    %547 = vmatprep.subr.mxu0 0.0
    %548 = vmatpush1.msra.mxu0 0.0
    %549 = vmatprep.subr.mxu0 0.0
    %550 = vmatpush1.msra.mxu0 0.0
    %551 = vmatprep.subr.mxu0 0.0
    %552 = vmatpush1.msra.mxu0 0.0
    %553 = vmatprep.subr.mxu0 0.0
    %554 = vmatpush1.msra.mxu0 0.0
    %555 = vmatprep.subr.mxu0 0.0
    %556 = vmatpush1.msra.mxu0 0.0
    %557 = vmatprep.subr.mxu0 0.0
    %558 = vmatpush1.msra.mxu0 0.0
    %559 = vmatprep.subr.mxu0 0.0
    %560 = vmatpush1.msra.mxu0 0.0
    %561 = vmatprep.subr.mxu0 0.0
    %562 = vmatpush1.msra.mxu0 0.0
    %563 = vmatprep.subr.mxu0 0.0
    %564 = vmatpush1.msra.mxu0 0.0
    %565 = vmatprep.subr.mxu0 0.0
    %566 = vmatpush1.msra.mxu0 0.0
    %567 = vmatprep.subr.mxu0 0.0
    %568 = vmatpush1.msra.mxu0 0.0
    %569 = vmatprep.mubr.f32.mxu0 0.0
    %570 = vmatmul.mubr.f32.gmra.mrb[0].mxu0 %v411
    %v571 = vpop.f32.mrb[0].mxu0
    %v572 = vadd.f32 0.0, %v571
    %v573 = vpop.f32.mrb[0].mxu0
    %574 = vdwg.mxu0
    %v575 = vadd.f32 %v203, %v572
    %v576 = vmul.f32 %v575, 0.5
    %v577 = vtanh.pop %v576
    %v578 = vmul.f32 %v577, 0.5
    %v579 = vadd.f32 %v578, 0.5
    %v580 = vmul.f32 %v579, %v331
    %582 = vrot.lane.b32.xlu0 %v577, 32
    %v583 = vpop.permute.xlu0 %582
    %v585 = vmul.f32 %v579, %v583
    %587 = vrot.lane.b32.xlu0 %v585, 32
    %v588 = vpop.permute.xlu0 %587
    %v590 = vadd.f32 %v580, %v588
    %v591 = vtanh.pop %v590
    %593 = vrot.lane.b32.xlu0 %v591, 32
    %v594 = vpop.permute.xlu0 %593
    %v596 = vmul.f32 %v579, %v594
    %598 = vrot.lane.b32.xlu0 %v504, 64
    %v599 = vpop.permute.xlu0 %598
    %v600 = vsel %vm242, %v599, 0
    %602 = vmatprep.subr.mxu0 0.0
    %603 = vmatpush1.msra.mxu0 %v75
    %604 = vmatprep.subr.mxu0 0.0
    %605 = vmatpush1.msra.mxu0 %v76
    %606 = vmatprep.subr.mxu0 0.0
    %607 = vmatpush1.msra.mxu0 %v77
    %608 = vmatprep.subr.mxu0 0.0
    %609 = vmatpush1.msra.mxu0 %v78
    %610 = vmatprep.subr.mxu0 0.0
    %611 = vmatpush1.msra.mxu0 0.0
    %612 = vmatprep.subr.mxu0 0.0
    %613 = vmatpush1.msra.mxu0 0.0
    %614 = vmatprep.subr.mxu0 0.0
    %615 = vmatpush1.msra.mxu0 0.0
    %616 = vmatprep.subr.mxu0 0.0
    %617 = vmatpush1.msra.mxu0 0.0
    %618 = vmatprep.subr.mxu0 0.0
    %619 = vmatpush1.msra.mxu0 0.0
    %620 = vmatprep.subr.mxu0 0.0
    %621 = vmatpush1.msra.mxu0 0.0
    %622 = vmatprep.subr.mxu0 0.0
    %623 = vmatpush1.msra.mxu0 0.0
    %624 = vmatprep.subr.mxu0 0.0
    %625 = vmatpush1.msra.mxu0 0.0
    %626 = vmatprep.subr.mxu0 0.0
    %627 = vmatpush1.msra.mxu0 0.0
    %628 = vmatprep.subr.mxu0 0.0
    %629 = vmatpush1.msra.mxu0 0.0
    %630 = vmatprep.subr.mxu0 0.0
    %631 = vmatpush1.msra.mxu0 0.0
    %632 = vmatprep.subr.mxu0 0.0
    %633 = vmatpush1.msra.mxu0 0.0
    %634 = vmatprep.subr.mxu0 0.0
    %635 = vmatpush1.msra.mxu0 0.0
    %636 = vmatprep.subr.mxu0 0.0
    %637 = vmatpush1.msra.mxu0 0.0
    %638 = vmatprep.subr.mxu0 0.0
    %639 = vmatpush1.msra.mxu0 0.0
    %640 = vmatprep.subr.mxu0 0.0
    %641 = vmatpush1.msra.mxu0 0.0
    %642 = vmatprep.subr.mxu0 0.0
    %643 = vmatpush1.msra.mxu0 0.0
    %644 = vmatprep.subr.mxu0 0.0
    %645 = vmatpush1.msra.mxu0 0.0
    %646 = vmatprep.subr.mxu0 0.0
    %647 = vmatpush1.msra.mxu0 0.0
    %648 = vmatprep.subr.mxu0 0.0
    %649 = vmatpush1.msra.mxu0 0.0
    %650 = vmatprep.subr.mxu0 0.0
    %651 = vmatpush1.msra.mxu0 0.0
    %652 = vmatprep.subr.mxu0 0.0
    %653 = vmatpush1.msra.mxu0 0.0
    %654 = vmatprep.subr.mxu0 0.0
    %655 = vmatpush1.msra.mxu0 0.0
    %656 = vmatprep.subr.mxu0 0.0
    %657 = vmatpush1.msra.mxu0 0.0
    %658 = vmatprep.subr.mxu0 0.0
    %659 = vmatpush1.msra.mxu0 0.0
    %660 = vmatprep.subr.mxu0 0.0
    %661 = vmatpush1.msra.mxu0 0.0
    %662 = vmatprep.subr.mxu0 0.0
    %663 = vmatpush1.msra.mxu0 0.0
    %664 = vmatprep.subr.mxu0 0.0
    %665 = vmatpush1.msra.mxu0 0.0
    %666 = vmatprep.mubr.f32.mxu0 0.0
    %667 = vmatmul.mubr.f32.gmra.mrb[0].mxu0 %v600
    %v668 = vpop.f32.mrb[0].mxu0
    %v669 = vadd.f32 0.0, %v668
    %v670 = vpop.f32.mrb[0].mxu0
    %671 = vdwg.mxu0
    %673 = vrot.lane.b32.xlu0 %v596, 64
    %v674 = vpop.permute.xlu0 %673
    %v675 = vsel %vm242, %v674, 0
    %677 = vmatprep.subr.mxu0 0.0
    %678 = vmatpush1.msra.mxu0 %v67
    %679 = vmatprep.subr.mxu0 0.0
    %680 = vmatpush1.msra.mxu0 %v68
    %681 = vmatprep.subr.mxu0 0.0
    %682 = vmatpush1.msra.mxu0 %v69
    %683 = vmatprep.subr.mxu0 0.0
    %684 = vmatpush1.msra.mxu0 %v70
    %685 = vmatprep.subr.mxu0 0.0
    %686 = vmatpush1.msra.mxu0 0.0
    %687 = vmatprep.subr.mxu0 0.0
    %688 = vmatpush1.msra.mxu0 0.0
    %689 = vmatprep.subr.mxu0 0.0
    %690 = vmatpush1.msra.mxu0 0.0
    %691 = vmatprep.subr.mxu0 0.0
    %692 = vmatpush1.msra.mxu0 0.0
    %693 = vmatprep.subr.mxu0 0.0
    %694 = vmatpush1.msra.mxu0 0.0
    %695 = vmatprep.subr.mxu0 0.0
    %696 = vmatpush1.msra.mxu0 0.0
    %697 = vmatprep.subr.mxu0 0.0
    %698 = vmatpush1.msra.mxu0 0.0
    %699 = vmatprep.subr.mxu0 0.0
    %700 = vmatpush1.msra.mxu0 0.0
    %701 = vmatprep.subr.mxu0 0.0
    %702 = vmatpush1.msra.mxu0 0.0
    %703 = vmatprep.subr.mxu0 0.0
    %704 = vmatpush1.msra.mxu0 0.0
    %705 = vmatprep.subr.mxu0 0.0
    %706 = vmatpush1.msra.mxu0 0.0
    %707 = vmatprep.subr.mxu0 0.0
    %708 = vmatpush1.msra.mxu0 0.0
    %709 = vmatprep.subr.mxu0 0.0
    %710 = vmatpush1.msra.mxu0 0.0
    %711 = vmatprep.subr.mxu0 0.0
    %712 = vmatpush1.msra.mxu0 0.0
    %713 = vmatprep.subr.mxu0 0.0
    %714 = vmatpush1.msra.mxu0 0.0
    %715 = vmatprep.subr.mxu0 0.0
    %716 = vmatpush1.msra.mxu0 0.0
    %717 = vmatprep.subr.mxu0 0.0
    %718 = vmatpush1.msra.mxu0 0.0
    %719 = vmatprep.subr.mxu0 0.0
    %720 = vmatpush1.msra.mxu0 0.0
    %721 = vmatprep.subr.mxu0 0.0
    %722 = vmatpush1.msra.mxu0 0.0
    %723 = vmatprep.subr.mxu0 0.0
    %724 = vmatpush1.msra.mxu0 0.0
    %725 = vmatprep.subr.mxu0 0.0
    %726 = vmatpush1.msra.mxu0 0.0
    %727 = vmatprep.subr.mxu0 0.0
    %728 = vmatpush1.msra.mxu0 0.0
    %729 = vmatprep.subr.mxu0 0.0
    %730 = vmatpush1.msra.mxu0 0.0
    %731 = vmatprep.subr.mxu0 0.0
    %732 = vmatpush1.msra.mxu0 0.0
    %733 = vmatprep.subr.mxu0 0.0
    %734 = vmatpush1.msra.mxu0 0.0
    %735 = vmatprep.subr.mxu0 0.0
    %736 = vmatpush1.msra.mxu0 0.0
    %737 = vmatprep.subr.mxu0 0.0
    %738 = vmatpush1.msra.mxu0 0.0
    %739 = vmatprep.subr.mxu0 0.0
    %740 = vmatpush1.msra.mxu0 0.0
    %741 = vmatprep.mubr.f32.mxu0 0.0
    %742 = vmatmul.mubr.f32.gmra.mrb[0].mxu0 %v675
    %v743 = vpop.f32.mrb[0].mxu0
    %v744 = vadd.f32 %v669, %v743
    %v745 = vpop.f32.mrb[0].mxu0
    %746 = vdwg.mxu0
    %v747 = vadd.f32 %v744, %v240
    %v748 = vmul.f32 %v747, 0.5
    %v749 = vtanh.pop %v748
    %v750 = vmul.f32 %v749, 0.5
    %v751 = vadd.f32 %v750, 0.5
    %v752 = vmul.f32 %v751, %v498
    %754 = vrot.lane.b32.xlu0 %v749, 32
    %v755 = vpop.permute.xlu0 %754
    %v757 = vmul.f32 %v751, %v755
    %759 = vrot.lane.b32.xlu0 %v757, 32
    %v760 = vpop.permute.xlu0 %759
    %v762 = vadd.f32 %v752, %v760
    %v763 = vtanh.pop %v762
    %765 = vrot.lane.b32.xlu0 %v763, 32
    %v766 = vpop.permute.xlu0 %765
    %v768 = vmul.f32 %v751, %v766
    %769 = vmatprep.subr.mxu0 0.0
    %770 = vmatpush1.msra.mxu0 %v71
    %771 = vmatprep.subr.mxu0 0.0
    %772 = vmatpush1.msra.mxu0 %v72
    %773 = vmatprep.subr.mxu0 0.0
    %774 = vmatpush1.msra.mxu0 %v73
    %775 = vmatprep.subr.mxu0 0.0
    %776 = vmatpush1.msra.mxu0 %v74
    %777 = vmatprep.subr.mxu0 0.0
    %778 = vmatpush1.msra.mxu0 0.0
    %779 = vmatprep.subr.mxu0 0.0
    %780 = vmatpush1.msra.mxu0 0.0
    %781 = vmatprep.subr.mxu0 0.0
    %782 = vmatpush1.msra.mxu0 0.0
    %783 = vmatprep.subr.mxu0 0.0
    %784 = vmatpush1.msra.mxu0 0.0
    %785 = vmatprep.subr.mxu0 0.0
    %786 = vmatpush1.msra.mxu0 0.0
    %787 = vmatprep.subr.mxu0 0.0
    %788 = vmatpush1.msra.mxu0 0.0
    %789 = vmatprep.subr.mxu0 0.0
    %790 = vmatpush1.msra.mxu0 0.0
    %791 = vmatprep.subr.mxu0 0.0
    %792 = vmatpush1.msra.mxu0 0.0
    %793 = vmatprep.subr.mxu0 0.0
    %794 = vmatpush1.msra.mxu0 0.0
    %795 = vmatprep.subr.mxu0 0.0
    %796 = vmatpush1.msra.mxu0 0.0
    %797 = vmatprep.subr.mxu0 0.0
    %798 = vmatpush1.msra.mxu0 0.0
    %799 = vmatprep.subr.mxu0 0.0
    %800 = vmatpush1.msra.mxu0 0.0
    %801 = vmatprep.subr.mxu0 0.0
    %802 = vmatpush1.msra.mxu0 0.0
    %803 = vmatprep.subr.mxu0 0.0
    %804 = vmatpush1.msra.mxu0 0.0
    %805 = vmatprep.subr.mxu0 0.0
    %806 = vmatpush1.msra.mxu0 0.0
    %807 = vmatprep.subr.mxu0 0.0
    %808 = vmatpush1.msra.mxu0 0.0
    %809 = vmatprep.subr.mxu0 0.0
    %810 = vmatpush1.msra.mxu0 0.0
    %811 = vmatprep.subr.mxu0 0.0
    %812 = vmatpush1.msra.mxu0 0.0
    %813 = vmatprep.subr.mxu0 0.0
    %814 = vmatpush1.msra.mxu0 0.0
    %815 = vmatprep.subr.mxu0 0.0
    %816 = vmatpush1.msra.mxu0 0.0
    %817 = vmatprep.subr.mxu0 0.0
    %818 = vmatpush1.msra.mxu0 0.0
    %819 = vmatprep.subr.mxu0 0.0
    %820 = vmatpush1.msra.mxu0 0.0
    %821 = vmatprep.subr.mxu0 0.0
    %822 = vmatpush1.msra.mxu0 0.0
    %823 = vmatprep.subr.mxu0 0.0
    %824 = vmatpush1.msra.mxu0 0.0
    %825 = vmatprep.subr.mxu0 0.0
    %826 = vmatpush1.msra.mxu0 0.0
    %827 = vmatprep.subr.mxu0 0.0
    %828 = vmatpush1.msra.mxu0 0.0
    %829 = vmatprep.subr.mxu0 0.0
    %830 = vmatpush1.msra.mxu0 0.0
    %831 = vmatprep.subr.mxu0 0.0
    %832 = vmatpush1.msra.mxu0 0.0
    %833 = vmatprep.mubr.f32.mxu0 0.0
    %834 = vmatmul.mubr.f32.gmra.mrb[0].mxu0 %v675
    %v835 = vpop.f32.mrb[0].mxu0
    %v836 = vadd.f32 0.0, %v835
    %v837 = vpop.f32.mrb[0].mxu0
    %838 = vdwg.mxu0
    %v839 = vadd.f32 %v208, %v836
    %v840 = vmul.f32 %v839, 0.5
    %v841 = vtanh.pop %v840
    %v842 = vmul.f32 %v841, 0.5
    %v843 = vadd.f32 %v842, 0.5
    %v844 = vmul.f32 %v843, %v590
    %846 = vrot.lane.b32.xlu0 %v841, 32
    %v847 = vpop.permute.xlu0 %846
    %v849 = vmul.f32 %v843, %v847
    %851 = vrot.lane.b32.xlu0 %v849, 32
    %v852 = vpop.permute.xlu0 %851
    %v854 = vadd.f32 %v844, %v852
    %v855 = vtanh.pop %v854
    %857 = vrot.lane.b32.xlu0 %v855, 32
    %v858 = vpop.permute.xlu0 %857
    %v860 = vmul.f32 %v843, %v858
    %862 = vrot.lane.b32.xlu0 %v768, 64
    %v863 = vpop.permute.xlu0 %862
    %v864 = vsel %vm242, %v863, 0
    %866 = vmatprep.subr.mxu0 0.0
    %867 = vmatpush1.msra.mxu0 %v75
    %868 = vmatprep.subr.mxu0 0.0
    %869 = vmatpush1.msra.mxu0 %v76
    %870 = vmatprep.subr.mxu0 0.0
    %871 = vmatpush1.msra.mxu0 %v77
    %872 = vmatprep.subr.mxu0 0.0
    %873 = vmatpush1.msra.mxu0 %v78
    %874 = vmatprep.subr.mxu0 0.0
    %875 = vmatpush1.msra.mxu0 0.0
    %876 = vmatprep.subr.mxu0 0.0
    %877 = vmatpush1.msra.mxu0 0.0
    %878 = vmatprep.subr.mxu0 0.0
    %879 = vmatpush1.msra.mxu0 0.0
    %880 = vmatprep.subr.mxu0 0.0
    %881 = vmatpush1.msra.mxu0 0.0
    %882 = vmatprep.subr.mxu0 0.0
    %883 = vmatpush1.msra.mxu0 0.0
    %884 = vmatprep.subr.mxu0 0.0
    %885 = vmatpush1.msra.mxu0 0.0
    %886 = vmatprep.subr.mxu0 0.0
    %887 = vmatpush1.msra.mxu0 0.0
    %888 = vmatprep.subr.mxu0 0.0
    %889 = vmatpush1.msra.mxu0 0.0
    %890 = vmatprep.subr.mxu0 0.0
    %891 = vmatpush1.msra.mxu0 0.0
    %892 = vmatprep.subr.mxu0 0.0
    %893 = vmatpush1.msra.mxu0 0.0
    %894 = vmatprep.subr.mxu0 0.0
    %895 = vmatpush1.msra.mxu0 0.0
    %896 = vmatprep.subr.mxu0 0.0
    %897 = vmatpush1.msra.mxu0 0.0
    %898 = vmatprep.subr.mxu0 0.0
    %899 = vmatpush1.msra.mxu0 0.0
    %900 = vmatprep.subr.mxu0 0.0
    %901 = vmatpush1.msra.mxu0 0.0
    %902 = vmatprep.subr.mxu0 0.0
    %903 = vmatpush1.msra.mxu0 0.0
    %904 = vmatprep.subr.mxu0 0.0
    %905 = vmatpush1.msra.mxu0 0.0
    %906 = vmatprep.subr.mxu0 0.0
    %907 = vmatpush1.msra.mxu0 0.0
    %908 = vmatprep.subr.mxu0 0.0
    %909 = vmatpush1.msra.mxu0 0.0
    %910 = vmatprep.subr.mxu0 0.0
    %911 = vmatpush1.msra.mxu0 0.0
    %912 = vmatprep.subr.mxu0 0.0
    %913 = vmatpush1.msra.mxu0 0.0
    %914 = vmatprep.subr.mxu0 0.0
    %915 = vmatpush1.msra.mxu0 0.0
    %916 = vmatprep.subr.mxu0 0.0
    %917 = vmatpush1.msra.mxu0 0.0
    %918 = vmatprep.subr.mxu0 0.0
    %919 = vmatpush1.msra.mxu0 0.0
    %920 = vmatprep.subr.mxu0 0.0
    %921 = vmatpush1.msra.mxu0 0.0
    %922 = vmatprep.subr.mxu0 0.0
    %923 = vmatpush1.msra.mxu0 0.0
    %924 = vmatprep.subr.mxu0 0.0
    %925 = vmatpush1.msra.mxu0 0.0
    %926 = vmatprep.subr.mxu0 0.0
    %927 = vmatpush1.msra.mxu0 0.0
    %928 = vmatprep.subr.mxu0 0.0
    %929 = vmatpush1.msra.mxu0 0.0
    %930 = vmatprep.mubr.f32.mxu0 0.0
    %931 = vmatmul.mubr.f32.gmra.mrb[0].mxu0 %v864
    %v932 = vpop.f32.mrb[0].mxu0
    %v933 = vadd.f32 0.0, %v932
    %v934 = vpop.f32.mrb[0].mxu0
    %935 = vdwg.mxu0
    %937 = vrot.lane.b32.xlu0 %v860, 64
    %v938 = vpop.permute.xlu0 %937
    %v939 = vsel %vm242, %v938, 0
    %941 = vmatprep.subr.mxu0 0.0
    %942 = vmatpush1.msra.mxu0 %v67
    %943 = vmatprep.subr.mxu0 0.0
    %944 = vmatpush1.msra.mxu0 %v68
    %945 = vmatprep.subr.mxu0 0.0
    %946 = vmatpush1.msra.mxu0 %v69
    %947 = vmatprep.subr.mxu0 0.0
    %948 = vmatpush1.msra.mxu0 %v70
    %949 = vmatprep.subr.mxu0 0.0
    %950 = vmatpush1.msra.mxu0 0.0
    %951 = vmatprep.subr.mxu0 0.0
    %952 = vmatpush1.msra.mxu0 0.0
    %953 = vmatprep.subr.mxu0 0.0
    %954 = vmatpush1.msra.mxu0 0.0
    %955 = vmatprep.subr.mxu0 0.0
    %956 = vmatpush1.msra.mxu0 0.0
    %957 = vmatprep.subr.mxu0 0.0
    %958 = vmatpush1.msra.mxu0 0.0
    %959 = vmatprep.subr.mxu0 0.0
    %960 = vmatpush1.msra.mxu0 0.0
    %961 = vmatprep.subr.mxu0 0.0
    %962 = vmatpush1.msra.mxu0 0.0
    %963 = vmatprep.subr.mxu0 0.0
    %964 = vmatpush1.msra.mxu0 0.0
    %965 = vmatprep.subr.mxu0 0.0
    %966 = vmatpush1.msra.mxu0 0.0
    %967 = vmatprep.subr.mxu0 0.0
    %968 = vmatpush1.msra.mxu0 0.0
    %969 = vmatprep.subr.mxu0 0.0
    %970 = vmatpush1.msra.mxu0 0.0
    %971 = vmatprep.subr.mxu0 0.0
    %972 = vmatpush1.msra.mxu0 0.0
    %973 = vmatprep.subr.mxu0 0.0
    %974 = vmatpush1.msra.mxu0 0.0
    %975 = vmatprep.subr.mxu0 0.0
    %976 = vmatpush1.msra.mxu0 0.0
    %977 = vmatprep.subr.mxu0 0.0
    %978 = vmatpush1.msra.mxu0 0.0
    %979 = vmatprep.subr.mxu0 0.0
    %980 = vmatpush1.msra.mxu0 0.0
    %981 = vmatprep.subr.mxu0 0.0
    %982 = vmatpush1.msra.mxu0 0.0
    %983 = vmatprep.subr.mxu0 0.0
    %984 = vmatpush1.msra.mxu0 0.0
    %985 = vmatprep.subr.mxu0 0.0
    %986 = vmatpush1.msra.mxu0 0.0
    %987 = vmatprep.subr.mxu0 0.0
    %988 = vmatpush1.msra.mxu0 0.0
    %989 = vmatprep.subr.mxu0 0.0
    %990 = vmatpush1.msra.mxu0 0.0
    %991 = vmatprep.subr.mxu0 0.0
    %992 = vmatpush1.msra.mxu0 0.0
    %993 = vmatprep.subr.mxu0 0.0
    %994 = vmatpush1.msra.mxu0 0.0
    %995 = vmatprep.subr.mxu0 0.0
    %996 = vmatpush1.msra.mxu0 0.0
    %997 = vmatprep.subr.mxu0 0.0
    %998 = vmatpush1.msra.mxu0 0.0
    %999 = vmatprep.subr.mxu0 0.0
    %1000 = vmatpush1.msra.mxu0 0.0
    %1001 = vmatprep.subr.mxu0 0.0
    %1002 = vmatpush1.msra.mxu0 0.0
    %1003 = vmatprep.subr.mxu0 0.0
    %1004 = vmatpush1.msra.mxu0 0.0
    %1005 = vmatprep.mubr.f32.mxu0 0.0
    %1006 = vmatmul.mubr.f32.gmra.mrb[0].mxu0 %v939
    %v1007 = vpop.f32.mrb[0].mxu0
    %v1008 = vadd.f32 %v933, %v1007
    %v1009 = vpop.f32.mrb[0].mxu0
    %1010 = vdwg.mxu0
    %v1011 = vadd.f32 %v1008, %v240
    %v1012 = vmul.f32 %v1011, 0.5
    %v1013 = vtanh.pop %v1012
    %v1014 = vmul.f32 %v1013, 0.5
    %v1015 = vadd.f32 %v1014, 0.5
    %v1016 = vmul.f32 %v1015, %v762
    %1018 = vrot.lane.b32.xlu0 %v1013, 32
    %v1019 = vpop.permute.xlu0 %1018
    %v1021 = vmul.f32 %v1015, %v1019
    %1023 = vrot.lane.b32.xlu0 %v1021, 32
    %v1024 = vpop.permute.xlu0 %1023
    %v1026 = vadd.f32 %v1016, %v1024
    %v1027 = vtanh.pop %v1026
    %1029 = vrot.lane.b32.xlu0 %v1027, 32
    %v1030 = vpop.permute.xlu0 %1029
    %v1032 = vmul.f32 %v1015, %v1030
    %1033 = vmatprep.subr.mxu0 0.0
    %1034 = vmatpush1.msra.mxu0 %v71
    %1035 = vmatprep.subr.mxu0 0.0
    %1036 = vmatpush1.msra.mxu0 %v72
    %1037 = vmatprep.subr.mxu0 0.0
    %1038 = vmatpush1.msra.mxu0 %v73
    %1039 = vmatprep.subr.mxu0 0.0
    %1040 = vmatpush1.msra.mxu0 %v74
    %1041 = vmatprep.subr.mxu0 0.0
    %1042 = vmatpush1.msra.mxu0 0.0
    %1043 = vmatprep.subr.mxu0 0.0
    %1044 = vmatpush1.msra.mxu0 0.0
    %1045 = vmatprep.subr.mxu0 0.0
    %1046 = vmatpush1.msra.mxu0 0.0
    %1047 = vmatprep.subr.mxu0 0.0
    %1048 = vmatpush1.msra.mxu0 0.0
    %1049 = vmatprep.subr.mxu0 0.0
    %1050 = vmatpush1.msra.mxu0 0.0
    %1051 = vmatprep.subr.mxu0 0.0
    %1052 = vmatpush1.msra.mxu0 0.0
    %1053 = vmatprep.subr.mxu0 0.0
    %1054 = vmatpush1.msra.mxu0 0.0
    %1055 = vmatprep.subr.mxu0 0.0
    %1056 = vmatpush1.msra.mxu0 0.0
    %1057 = vmatprep.subr.mxu0 0.0
    %1058 = vmatpush1.msra.mxu0 0.0
    %1059 = vmatprep.subr.mxu0 0.0
    %1060 = vmatpush1.msra.mxu0 0.0
    %1061 = vmatprep.subr.mxu0 0.0
    %1062 = vmatpush1.msra.mxu0 0.0
    %1063 = vmatprep.subr.mxu0 0.0
    %1064 = vmatpush1.msra.mxu0 0.0
    %1065 = vmatprep.subr.mxu0 0.0
    %1066 = vmatpush1.msra.mxu0 0.0
    %1067 = vmatprep.subr.mxu0 0.0
    %1068 = vmatpush1.msra.mxu0 0.0
    %1069 = vmatprep.subr.mxu0 0.0
    %1070 = vmatpush1.msra.mxu0 0.0
    %1071 = vmatprep.subr.mxu0 0.0
    %1072 = vmatpush1.msra.mxu0 0.0
    %1073 = vmatprep.subr.mxu0 0.0
    %1074 = vmatpush1.msra.mxu0 0.0
    %1075 = vmatprep.subr.mxu0 0.0
    %1076 = vmatpush1.msra.mxu0 0.0
    %1077 = vmatprep.subr.mxu0 0.0
    %1078 = vmatpush1.msra.mxu0 0.0
    %1079 = vmatprep.subr.mxu0 0.0
    %1080 = vmatpush1.msra.mxu0 0.0
    %1081 = vmatprep.subr.mxu0 0.0
    %1082 = vmatpush1.msra.mxu0 0.0
    %1083 = vmatprep.subr.mxu0 0.0
    %1084 = vmatpush1.msra.mxu0 0.0
    %1085 = vmatprep.subr.mxu0 0.0
    %1086 = vmatpush1.msra.mxu0 0.0
    %1087 = vmatprep.subr.mxu0 0.0
    %1088 = vmatpush1.msra.mxu0 0.0
    %1089 = vmatprep.subr.mxu0 0.0
    %1090 = vmatpush1.msra.mxu0 0.0
    %1091 = vmatprep.subr.mxu0 0.0
    %1092 = vmatpush1.msra.mxu0 0.0
    %1093 = vmatprep.subr.mxu0 0.0
    %1094 = vmatpush1.msra.mxu0 0.0
    %1095 = vmatprep.subr.mxu0 0.0
    %1096 = vmatpush1.msra.mxu0 0.0
    %1097 = vmatprep.mubr.f32.mxu0 0.0
    %1098 = vmatmul.mubr.f32.gmra.mrb[0].mxu0 %v939
    %v1099 = vpop.f32.mrb[0].mxu0
    %v1100 = vadd.f32 0.0, %v1099
    %v1101 = vpop.f32.mrb[0].mxu0
    %1102 = vdwg.mxu0
    %v1103 = vadd.f32 %v213, %v1100
    %v1104 = vmul.f32 %v1103, 0.5
    %v1105 = vtanh.pop %v1104
    %v1106 = vmul.f32 %v1105, 0.5
    %v1107 = vadd.f32 %v1106, 0.5
    %v1108 = vmul.f32 %v1107, %v854
    %1110 = vrot.lane.b32.xlu0 %v1105, 32
    %v1111 = vpop.permute.xlu0 %1110
    %v1113 = vmul.f32 %v1107, %v1111
    %1115 = vrot.lane.b32.xlu0 %v1113, 32
    %v1116 = vpop.permute.xlu0 %1115
    %v1118 = vadd.f32 %v1108, %v1116
    %v1119 = vtanh.pop %v1118
    %1121 = vrot.lane.b32.xlu0 %v1119, 32
    %v1122 = vpop.permute.xlu0 %1121
    %v1124 = vmul.f32 %v1107, %v1122
    %1126 = vrot.lane.b32.xlu0 %v1032, 64
    %v1127 = vpop.permute.xlu0 %1126
    %v1128 = vsel %vm242, %v1127, 0
    %1130 = vmatprep.subr.mxu0 0.0
    %1131 = vmatpush1.msra.mxu0 %v75
    %1132 = vmatprep.subr.mxu0 0.0
    %1133 = vmatpush1.msra.mxu0 %v76
    %1134 = vmatprep.subr.mxu0 0.0
    %1135 = vmatpush1.msra.mxu0 %v77
    %1136 = vmatprep.subr.mxu0 0.0
    %1137 = vmatpush1.msra.mxu0 %v78
    %1138 = vmatprep.subr.mxu0 0.0
    %1139 = vmatpush1.msra.mxu0 0.0
    %1140 = vmatprep.subr.mxu0 0.0
    %1141 = vmatpush1.msra.mxu0 0.0
    %1142 = vmatprep.subr.mxu0 0.0
    %1143 = vmatpush1.msra.mxu0 0.0
    %1144 = vmatprep.subr.mxu0 0.0
    %1145 = vmatpush1.msra.mxu0 0.0
    %1146 = vmatprep.subr.mxu0 0.0
    %1147 = vmatpush1.msra.mxu0 0.0
    %1148 = vmatprep.subr.mxu0 0.0
    %1149 = vmatpush1.msra.mxu0 0.0
    %1150 = vmatprep.subr.mxu0 0.0
    %1151 = vmatpush1.msra.mxu0 0.0
    %1152 = vmatprep.subr.mxu0 0.0
    %1153 = vmatpush1.msra.mxu0 0.0
    %1154 = vmatprep.subr.mxu0 0.0
    %1155 = vmatpush1.msra.mxu0 0.0
    %1156 = vmatprep.subr.mxu0 0.0
    %1157 = vmatpush1.msra.mxu0 0.0
    %1158 = vmatprep.subr.mxu0 0.0
    %1159 = vmatpush1.msra.mxu0 0.0
    %1160 = vmatprep.subr.mxu0 0.0
    %1161 = vmatpush1.msra.mxu0 0.0
    %1162 = vmatprep.subr.mxu0 0.0
    %1163 = vmatpush1.msra.mxu0 0.0
    %1164 = vmatprep.subr.mxu0 0.0
    %1165 = vmatpush1.msra.mxu0 0.0
    %1166 = vmatprep.subr.mxu0 0.0
    %1167 = vmatpush1.msra.mxu0 0.0
    %1168 = vmatprep.subr.mxu0 0.0
    %1169 = vmatpush1.msra.mxu0 0.0
    %1170 = vmatprep.subr.mxu0 0.0
    %1171 = vmatpush1.msra.mxu0 0.0
    %1172 = vmatprep.subr.mxu0 0.0
    %1173 = vmatpush1.msra.mxu0 0.0
    %1174 = vmatprep.subr.mxu0 0.0
    %1175 = vmatpush1.msra.mxu0 0.0
    %1176 = vmatprep.subr.mxu0 0.0
    %1177 = vmatpush1.msra.mxu0 0.0
    %1178 = vmatprep.subr.mxu0 0.0
    %1179 = vmatpush1.msra.mxu0 0.0
    %1180 = vmatprep.subr.mxu0 0.0
    %1181 = vmatpush1.msra.mxu0 0.0
    %1182 = vmatprep.subr.mxu0 0.0
    %1183 = vmatpush1.msra.mxu0 0.0
    %1184 = vmatprep.subr.mxu0 0.0
    %1185 = vmatpush1.msra.mxu0 0.0
    %1186 = vmatprep.subr.mxu0 0.0
    %1187 = vmatpush1.msra.mxu0 0.0
    %1188 = vmatprep.subr.mxu0 0.0
    %1189 = vmatpush1.msra.mxu0 0.0
    %1190 = vmatprep.subr.mxu0 0.0
    %1191 = vmatpush1.msra.mxu0 0.0
    %1192 = vmatprep.subr.mxu0 0.0
    %1193 = vmatpush1.msra.mxu0 0.0
    %1194 = vmatprep.mubr.f32.mxu0 0.0
    %1195 = vmatmul.mubr.f32.gmra.mrb[0].mxu0 %v1128
    %v1196 = vpop.f32.mrb[0].mxu0
    %v1197 = vadd.f32 0.0, %v1196
    %v1198 = vpop.f32.mrb[0].mxu0
    %1199 = vdwg.mxu0
    %1201 = vrot.lane.b32.xlu0 %v1124, 64
    %v1202 = vpop.permute.xlu0 %1201
    %v1203 = vsel %vm242, %v1202, 0
    %1205 = vmatprep.subr.mxu0 0.0
    %1206 = vmatpush1.msra.mxu0 %v67
    %1207 = vmatprep.subr.mxu0 0.0
    %1208 = vmatpush1.msra.mxu0 %v68
    %1209 = vmatprep.subr.mxu0 0.0
    %1210 = vmatpush1.msra.mxu0 %v69
    %1211 = vmatprep.subr.mxu0 0.0
    %1212 = vmatpush1.msra.mxu0 %v70
    %1213 = vmatprep.subr.mxu0 0.0
    %1214 = vmatpush1.msra.mxu0 0.0
    %1215 = vmatprep.subr.mxu0 0.0
    %1216 = vmatpush1.msra.mxu0 0.0
    %1217 = vmatprep.subr.mxu0 0.0
    %1218 = vmatpush1.msra.mxu0 0.0
    %1219 = vmatprep.subr.mxu0 0.0
    %1220 = vmatpush1.msra.mxu0 0.0
    %1221 = vmatprep.subr.mxu0 0.0
    %1222 = vmatpush1.msra.mxu0 0.0
    %1223 = vmatprep.subr.mxu0 0.0
    %1224 = vmatpush1.msra.mxu0 0.0
    %1225 = vmatprep.subr.mxu0 0.0
    %1226 = vmatpush1.msra.mxu0 0.0
    %1227 = vmatprep.subr.mxu0 0.0
    %1228 = vmatpush1.msra.mxu0 0.0
    %1229 = vmatprep.subr.mxu0 0.0
    %1230 = vmatpush1.msra.mxu0 0.0
    %1231 = vmatprep.subr.mxu0 0.0
    %1232 = vmatpush1.msra.mxu0 0.0
    %1233 = vmatprep.subr.mxu0 0.0
    %1234 = vmatpush1.msra.mxu0 0.0
    %1235 = vmatprep.subr.mxu0 0.0
    %1236 = vmatpush1.msra.mxu0 0.0
    %1237 = vmatprep.subr.mxu0 0.0
    %1238 = vmatpush1.msra.mxu0 0.0
    %1239 = vmatprep.subr.mxu0 0.0
    %1240 = vmatpush1.msra.mxu0 0.0
    %1241 = vmatprep.subr.mxu0 0.0
    %1242 = vmatpush1.msra.mxu0 0.0
    %1243 = vmatprep.subr.mxu0 0.0
    %1244 = vmatpush1.msra.mxu0 0.0
    %1245 = vmatprep.subr.mxu0 0.0
    %1246 = vmatpush1.msra.mxu0 0.0
    %1247 = vmatprep.subr.mxu0 0.0
    %1248 = vmatpush1.msra.mxu0 0.0
    %1249 = vmatprep.subr.mxu0 0.0
    %1250 = vmatpush1.msra.mxu0 0.0
    %1251 = vmatprep.subr.mxu0 0.0
    %1252 = vmatpush1.msra.mxu0 0.0
    %1253 = vmatprep.subr.mxu0 0.0
    %1254 = vmatpush1.msra.mxu0 0.0
    %1255 = vmatprep.subr.mxu0 0.0
    %1256 = vmatpush1.msra.mxu0 0.0
    %1257 = vmatprep.subr.mxu0 0.0
    %1258 = vmatpush1.msra.mxu0 0.0
    %1259 = vmatprep.subr.mxu0 0.0
    %1260 = vmatpush1.msra.mxu0 0.0
    %1261 = vmatprep.subr.mxu0 0.0
    %1262 = vmatpush1.msra.mxu0 0.0
    %1263 = vmatprep.subr.mxu0 0.0
    %1264 = vmatpush1.msra.mxu0 0.0
    %1265 = vmatprep.subr.mxu0 0.0
    %1266 = vmatpush1.msra.mxu0 0.0
    %1267 = vmatprep.subr.mxu0 0.0
    %1268 = vmatpush1.msra.mxu0 0.0
    %1269 = vmatprep.mubr.f32.mxu0 0.0
    %1270 = vmatmul.mubr.f32.gmra.mrb[0].mxu0 %v1203
    %v1271 = vpop.f32.mrb[0].mxu0
    %v1272 = vadd.f32 %v1197, %v1271
    %v1273 = vpop.f32.mrb[0].mxu0
    %1274 = vdwg.mxu0
    %v1275 = vadd.f32 %v1272, %v240
    %v1276 = vmul.f32 %v1275, 0.5
    %v1277 = vtanh.pop %v1276
    %v1278 = vmul.f32 %v1277, 0.5
    %v1279 = vadd.f32 %v1278, 0.5
    %v1280 = vmul.f32 %v1279, %v1026
    %1282 = vrot.lane.b32.xlu0 %v1277, 32
    %v1283 = vpop.permute.xlu0 %1282
    %v1285 = vmul.f32 %v1279, %v1283
    %1287 = vrot.lane.b32.xlu0 %v1285, 32
    %v1288 = vpop.permute.xlu0 %1287
    %v1290 = vadd.f32 %v1280, %v1288
    %v1291 = vtanh.pop %v1290
    %1293 = vrot.lane.b32.xlu0 %v1291, 32
    %v1294 = vpop.permute.xlu0 %1293
    %v1296 = vmul.f32 %v1279, %v1294
    %1297 = vmatprep.subr.mxu0 0.0
    %1298 = vmatpush1.msra.mxu0 %v71
    %1299 = vmatprep.subr.mxu0 0.0
    %1300 = vmatpush1.msra.mxu0 %v72
    %1301 = vmatprep.subr.mxu0 0.0
    %1302 = vmatpush1.msra.mxu0 %v73
    %1303 = vmatprep.subr.mxu0 0.0
    %1304 = vmatpush1.msra.mxu0 %v74
    %1305 = vmatprep.subr.mxu0 0.0
    %1306 = vmatpush1.msra.mxu0 0.0
    %1307 = vmatprep.subr.mxu0 0.0
    %1308 = vmatpush1.msra.mxu0 0.0
    %1309 = vmatprep.subr.mxu0 0.0
    %1310 = vmatpush1.msra.mxu0 0.0
    %1311 = vmatprep.subr.mxu0 0.0
    %1312 = vmatpush1.msra.mxu0 0.0
    %1313 = vmatprep.subr.mxu0 0.0
    %1314 = vmatpush1.msra.mxu0 0.0
    %1315 = vmatprep.subr.mxu0 0.0
    %1316 = vmatpush1.msra.mxu0 0.0
    %1317 = vmatprep.subr.mxu0 0.0
    %1318 = vmatpush1.msra.mxu0 0.0
    %1319 = vmatprep.subr.mxu0 0.0
    %1320 = vmatpush1.msra.mxu0 0.0
    %1321 = vmatprep.subr.mxu0 0.0
    %1322 = vmatpush1.msra.mxu0 0.0
    %1323 = vmatprep.subr.mxu0 0.0
    %1324 = vmatpush1.msra.mxu0 0.0
    %1325 = vmatprep.subr.mxu0 0.0
    %1326 = vmatpush1.msra.mxu0 0.0
    %1327 = vmatprep.subr.mxu0 0.0
    %1328 = vmatpush1.msra.mxu0 0.0
    %1329 = vmatprep.subr.mxu0 0.0
    %1330 = vmatpush1.msra.mxu0 0.0
    %1331 = vmatprep.subr.mxu0 0.0
    %1332 = vmatpush1.msra.mxu0 0.0
    %1333 = vmatprep.subr.mxu0 0.0
    %1334 = vmatpush1.msra.mxu0 0.0
    %1335 = vmatprep.subr.mxu0 0.0
    %1336 = vmatpush1.msra.mxu0 0.0
    %1337 = vmatprep.subr.mxu0 0.0
    %1338 = vmatpush1.msra.mxu0 0.0
    %1339 = vmatprep.subr.mxu0 0.0
    %1340 = vmatpush1.msra.mxu0 0.0
    %1341 = vmatprep.subr.mxu0 0.0
    %1342 = vmatpush1.msra.mxu0 0.0
    %1343 = vmatprep.subr.mxu0 0.0
    %1344 = vmatpush1.msra.mxu0 0.0
    %1345 = vmatprep.subr.mxu0 0.0
    %1346 = vmatpush1.msra.mxu0 0.0
    %1347 = vmatprep.subr.mxu0 0.0
    %1348 = vmatpush1.msra.mxu0 0.0
    %1349 = vmatprep.subr.mxu0 0.0
    %1350 = vmatpush1.msra.mxu0 0.0
    %1351 = vmatprep.subr.mxu0 0.0
    %1352 = vmatpush1.msra.mxu0 0.0
    %1353 = vmatprep.subr.mxu0 0.0
    %1354 = vmatpush1.msra.mxu0 0.0
    %1355 = vmatprep.subr.mxu0 0.0
    %1356 = vmatpush1.msra.mxu0 0.0
    %1357 = vmatprep.subr.mxu0 0.0
    %1358 = vmatpush1.msra.mxu0 0.0
    %1359 = vmatprep.subr.mxu0 0.0
    %1360 = vmatpush1.msra.mxu0 0.0
    %1361 = vmatprep.mubr.f32.mxu0 0.0
    %1362 = vmatmul.mubr.f32.gmra.mrb[0].mxu0 %v1203
    %v1363 = vpop.f32.mrb[0].mxu0
    %v1364 = vadd.f32 0.0, %v1363
    %v1365 = vpop.f32.mrb[0].mxu0
    %1366 = vdwg.mxu0
    %v1367 = vadd.f32 %v218, %v1364
    %v1368 = vmul.f32 %v1367, 0.5
    %v1369 = vtanh.pop %v1368
    %v1370 = vmul.f32 %v1369, 0.5
    %v1371 = vadd.f32 %v1370, 0.5
    %v1372 = vmul.f32 %v1371, %v1118
    %1374 = vrot.lane.b32.xlu0 %v1369, 32
    %v1375 = vpop.permute.xlu0 %1374
    %v1377 = vmul.f32 %v1371, %v1375
    %1379 = vrot.lane.b32.xlu0 %v1377, 32
    %v1380 = vpop.permute.xlu0 %1379
    %v1382 = vadd.f32 %v1372, %v1380
    %v1383 = vtanh.pop %v1382
    %1385 = vrot.lane.b32.xlu0 %v1383, 32
    %v1386 = vpop.permute.xlu0 %1385
    %v1388 = vmul.f32 %v1371, %v1386
    %1390 = vrot.lane.b32.xlu0 %v1296, 64
    %v1391 = vpop.permute.xlu0 %1390
    %v1392 = vsel %vm242, %v1391, 0
    %1394 = vmatprep.subr.mxu0 0.0
    %1395 = vmatpush1.msra.mxu0 %v75
    %1396 = vmatprep.subr.mxu0 0.0
    %1397 = vmatpush1.msra.mxu0 %v76
    %1398 = vmatprep.subr.mxu0 0.0
    %1399 = vmatpush1.msra.mxu0 %v77
    %1400 = vmatprep.subr.mxu0 0.0
    %1401 = vmatpush1.msra.mxu0 %v78
    %1402 = vmatprep.subr.mxu0 0.0
    %1403 = vmatpush1.msra.mxu0 0.0
    %1404 = vmatprep.subr.mxu0 0.0
    %1405 = vmatpush1.msra.mxu0 0.0
    %1406 = vmatprep.subr.mxu0 0.0
    %1407 = vmatpush1.msra.mxu0 0.0
    %1408 = vmatprep.subr.mxu0 0.0
    %1409 = vmatpush1.msra.mxu0 0.0
    %1410 = vmatprep.subr.mxu0 0.0
    %1411 = vmatpush1.msra.mxu0 0.0
    %1412 = vmatprep.subr.mxu0 0.0
    %1413 = vmatpush1.msra.mxu0 0.0
    %1414 = vmatprep.subr.mxu0 0.0
    %1415 = vmatpush1.msra.mxu0 0.0
    %1416 = vmatprep.subr.mxu0 0.0
    %1417 = vmatpush1.msra.mxu0 0.0
    %1418 = vmatprep.subr.mxu0 0.0
    %1419 = vmatpush1.msra.mxu0 0.0
    %1420 = vmatprep.subr.mxu0 0.0
    %1421 = vmatpush1.msra.mxu0 0.0
    %1422 = vmatprep.subr.mxu0 0.0
    %1423 = vmatpush1.msra.mxu0 0.0
    %1424 = vmatprep.subr.mxu0 0.0
    %1425 = vmatpush1.msra.mxu0 0.0
    %1426 = vmatprep.subr.mxu0 0.0
    %1427 = vmatpush1.msra.mxu0 0.0
    %1428 = vmatprep.subr.mxu0 0.0
    %1429 = vmatpush1.msra.mxu0 0.0
    %1430 = vmatprep.subr.mxu0 0.0
    %1431 = vmatpush1.msra.mxu0 0.0
    %1432 = vmatprep.subr.mxu0 0.0
    %1433 = vmatpush1.msra.mxu0 0.0
    %1434 = vmatprep.subr.mxu0 0.0
    %1435 = vmatpush1.msra.mxu0 0.0
    %1436 = vmatprep.subr.mxu0 0.0
    %1437 = vmatpush1.msra.mxu0 0.0
    %1438 = vmatprep.subr.mxu0 0.0
    %1439 = vmatpush1.msra.mxu0 0.0
    %1440 = vmatprep.subr.mxu0 0.0
    %1441 = vmatpush1.msra.mxu0 0.0
    %1442 = vmatprep.subr.mxu0 0.0
    %1443 = vmatpush1.msra.mxu0 0.0
    %1444 = vmatprep.subr.mxu0 0.0
    %1445 = vmatpush1.msra.mxu0 0.0
    %1446 = vmatprep.subr.mxu0 0.0
    %1447 = vmatpush1.msra.mxu0 0.0
    %1448 = vmatprep.subr.mxu0 0.0
    %1449 = vmatpush1.msra.mxu0 0.0
    %1450 = vmatprep.subr.mxu0 0.0
    %1451 = vmatpush1.msra.mxu0 0.0
    %1452 = vmatprep.subr.mxu0 0.0
    %1453 = vmatpush1.msra.mxu0 0.0
    %1454 = vmatprep.subr.mxu0 0.0
    %1455 = vmatpush1.msra.mxu0 0.0
    %1456 = vmatprep.subr.mxu0 0.0
    %1457 = vmatpush1.msra.mxu0 0.0
    %1458 = vmatprep.mubr.f32.mxu0 0.0
    %1459 = vmatmul.mubr.f32.gmra.mrb[0].mxu0 %v1392
    %v1460 = vpop.f32.mrb[0].mxu0
    %v1461 = vadd.f32 0.0, %v1460
    %v1462 = vpop.f32.mrb[0].mxu0
    %1463 = vdwg.mxu0
    %1465 = vrot.lane.b32.xlu0 %v1388, 64
    %v1466 = vpop.permute.xlu0 %1465
    %v1467 = vsel %vm242, %v1466, 0
    %1469 = vmatprep.subr.mxu0 0.0
    %1470 = vmatpush1.msra.mxu0 %v67
    %1471 = vmatprep.subr.mxu0 0.0
    %1472 = vmatpush1.msra.mxu0 %v68
    %1473 = vmatprep.subr.mxu0 0.0
    %1474 = vmatpush1.msra.mxu0 %v69
    %1475 = vmatprep.subr.mxu0 0.0
    %1476 = vmatpush1.msra.mxu0 %v70
    %1477 = vmatprep.subr.mxu0 0.0
    %1478 = vmatpush1.msra.mxu0 0.0
    %1479 = vmatprep.subr.mxu0 0.0
    %1480 = vmatpush1.msra.mxu0 0.0
    %1481 = vmatprep.subr.mxu0 0.0
    %1482 = vmatpush1.msra.mxu0 0.0
    %1483 = vmatprep.subr.mxu0 0.0
    %1484 = vmatpush1.msra.mxu0 0.0
    %1485 = vmatprep.subr.mxu0 0.0
    %1486 = vmatpush1.msra.mxu0 0.0
    %1487 = vmatprep.subr.mxu0 0.0
    %1488 = vmatpush1.msra.mxu0 0.0
    %1489 = vmatprep.subr.mxu0 0.0
    %1490 = vmatpush1.msra.mxu0 0.0
    %1491 = vmatprep.subr.mxu0 0.0
    %1492 = vmatpush1.msra.mxu0 0.0
    %1493 = vmatprep.subr.mxu0 0.0
    %1494 = vmatpush1.msra.mxu0 0.0
    %1495 = vmatprep.subr.mxu0 0.0
    %1496 = vmatpush1.msra.mxu0 0.0
    %1497 = vmatprep.subr.mxu0 0.0
    %1498 = vmatpush1.msra.mxu0 0.0
    %1499 = vmatprep.subr.mxu0 0.0
    %1500 = vmatpush1.msra.mxu0 0.0
    %1501 = vmatprep.subr.mxu0 0.0
    %1502 = vmatpush1.msra.mxu0 0.0
    %1503 = vmatprep.subr.mxu0 0.0
    %1504 = vmatpush1.msra.mxu0 0.0
    %1505 = vmatprep.subr.mxu0 0.0
    %1506 = vmatpush1.msra.mxu0 0.0
    %1507 = vmatprep.subr.mxu0 0.0
    %1508 = vmatpush1.msra.mxu0 0.0
    %1509 = vmatprep.subr.mxu0 0.0
    %1510 = vmatpush1.msra.mxu0 0.0
    %1511 = vmatprep.subr.mxu0 0.0
    %1512 = vmatpush1.msra.mxu0 0.0
    %1513 = vmatprep.subr.mxu0 0.0
    %1514 = vmatpush1.msra.mxu0 0.0
    %1515 = vmatprep.subr.mxu0 0.0
    %1516 = vmatpush1.msra.mxu0 0.0
    %1517 = vmatprep.subr.mxu0 0.0
    %1518 = vmatpush1.msra.mxu0 0.0
    %1519 = vmatprep.subr.mxu0 0.0
    %1520 = vmatpush1.msra.mxu0 0.0
    %1521 = vmatprep.subr.mxu0 0.0
    %1522 = vmatpush1.msra.mxu0 0.0
    %1523 = vmatprep.subr.mxu0 0.0
    %1524 = vmatpush1.msra.mxu0 0.0
    %1525 = vmatprep.subr.mxu0 0.0
    %1526 = vmatpush1.msra.mxu0 0.0
    %1527 = vmatprep.subr.mxu0 0.0
    %1528 = vmatpush1.msra.mxu0 0.0
    %1529 = vmatprep.subr.mxu0 0.0
    %1530 = vmatpush1.msra.mxu0 0.0
    %1531 = vmatprep.subr.mxu0 0.0
    %1532 = vmatpush1.msra.mxu0 0.0
    %1533 = vmatprep.mubr.f32.mxu0 0.0
    %1534 = vmatmul.mubr.f32.gmra.mrb[0].mxu0 %v1467
    %v1535 = vpop.f32.mrb[0].mxu0
    %v1536 = vadd.f32 %v1461, %v1535
    %v1537 = vpop.f32.mrb[0].mxu0
    %1538 = vdwg.mxu0
    %v1539 = vadd.f32 %v1536, %v240
    %v1540 = vmul.f32 %v1539, 0.5
    %v1541 = vtanh.pop %v1540
    %v1542 = vmul.f32 %v1541, 0.5
    %v1543 = vadd.f32 %v1542, 0.5
    %v1544 = vmul.f32 %v1543, %v1290
    %1546 = vrot.lane.b32.xlu0 %v1541, 32
    %v1547 = vpop.permute.xlu0 %1546
    %v1549 = vmul.f32 %v1543, %v1547
    %1551 = vrot.lane.b32.xlu0 %v1549, 32
    %v1552 = vpop.permute.xlu0 %1551
    %v1554 = vadd.f32 %v1544, %v1552
    %v1555 = vtanh.pop %v1554
    %1557 = vrot.lane.b32.xlu0 %v1555, 32
    %v1558 = vpop.permute.xlu0 %1557
    %v1560 = vmul.f32 %v1543, %v1558
    %1561 = vmatprep.subr.mxu0 0.0
    %1562 = vmatpush1.msra.mxu0 %v71
    %1563 = vmatprep.subr.mxu0 0.0
    %1564 = vmatpush1.msra.mxu0 %v72
    %1565 = vmatprep.subr.mxu0 0.0
    %1566 = vmatpush1.msra.mxu0 %v73
    %1567 = vmatprep.subr.mxu0 0.0
    %1568 = vmatpush1.msra.mxu0 %v74
    %1569 = vmatprep.subr.mxu0 0.0
    %1570 = vmatpush1.msra.mxu0 0.0
    %1571 = vmatprep.subr.mxu0 0.0
    %1572 = vmatpush1.msra.mxu0 0.0
    %1573 = vmatprep.subr.mxu0 0.0
    %1574 = vmatpush1.msra.mxu0 0.0
    %1575 = vmatprep.subr.mxu0 0.0
    %1576 = vmatpush1.msra.mxu0 0.0
    %1577 = vmatprep.subr.mxu0 0.0
    %1578 = vmatpush1.msra.mxu0 0.0
    %1579 = vmatprep.subr.mxu0 0.0
    %1580 = vmatpush1.msra.mxu0 0.0
    %1581 = vmatprep.subr.mxu0 0.0
    %1582 = vmatpush1.msra.mxu0 0.0
    %1583 = vmatprep.subr.mxu0 0.0
    %1584 = vmatpush1.msra.mxu0 0.0
    %1585 = vmatprep.subr.mxu0 0.0
    %1586 = vmatpush1.msra.mxu0 0.0
    %1587 = vmatprep.subr.mxu0 0.0
    %1588 = vmatpush1.msra.mxu0 0.0
    %1589 = vmatprep.subr.mxu0 0.0
    %1590 = vmatpush1.msra.mxu0 0.0
    %1591 = vmatprep.subr.mxu0 0.0
    %1592 = vmatpush1.msra.mxu0 0.0
    %1593 = vmatprep.subr.mxu0 0.0
    %1594 = vmatpush1.msra.mxu0 0.0
    %1595 = vmatprep.subr.mxu0 0.0
    %1596 = vmatpush1.msra.mxu0 0.0
    %1597 = vmatprep.subr.mxu0 0.0
    %1598 = vmatpush1.msra.mxu0 0.0
    %1599 = vmatprep.subr.mxu0 0.0
    %1600 = vmatpush1.msra.mxu0 0.0
    %1601 = vmatprep.subr.mxu0 0.0
    %1602 = vmatpush1.msra.mxu0 0.0
    %1603 = vmatprep.subr.mxu0 0.0
    %1604 = vmatpush1.msra.mxu0 0.0
    %1605 = vmatprep.subr.mxu0 0.0
    %1606 = vmatpush1.msra.mxu0 0.0
    %1607 = vmatprep.subr.mxu0 0.0
    %1608 = vmatpush1.msra.mxu0 0.0
    %1609 = vmatprep.subr.mxu0 0.0
    %1610 = vmatpush1.msra.mxu0 0.0
    %1611 = vmatprep.subr.mxu0 0.0
    %1612 = vmatpush1.msra.mxu0 0.0
    %1613 = vmatprep.subr.mxu0 0.0
    %1614 = vmatpush1.msra.mxu0 0.0
    %1615 = vmatprep.subr.mxu0 0.0
    %1616 = vmatpush1.msra.mxu0 0.0
    %1617 = vmatprep.subr.mxu0 0.0
    %1618 = vmatpush1.msra.mxu0 0.0
    %1619 = vmatprep.subr.mxu0 0.0
    %1620 = vmatpush1.msra.mxu0 0.0
    %1621 = vmatprep.subr.mxu0 0.0
    %1622 = vmatpush1.msra.mxu0 0.0
    %1623 = vmatprep.subr.mxu0 0.0
    %1624 = vmatpush1.msra.mxu0 0.0
    %1625 = vmatprep.mubr.f32.mxu0 0.0
    %1626 = vmatmul.mubr.f32.gmra.mrb[0].mxu0 %v1467
    %v1627 = vpop.f32.mrb[0].mxu0
    %v1628 = vadd.f32 0.0, %v1627
    %v1629 = vpop.f32.mrb[0].mxu0
    %1630 = vdwg.mxu0
    %v1631 = vadd.f32 %v223, %v1628
    %v1632 = vmul.f32 %v1631, 0.5
    %v1633 = vtanh.pop %v1632
    %v1634 = vmul.f32 %v1633, 0.5
    %v1635 = vadd.f32 %v1634, 0.5
    %v1636 = vmul.f32 %v1635, %v1382
    %1638 = vrot.lane.b32.xlu0 %v1633, 32
    %v1639 = vpop.permute.xlu0 %1638
    %v1641 = vmul.f32 %v1635, %v1639
    %1643 = vrot.lane.b32.xlu0 %v1641, 32
    %v1644 = vpop.permute.xlu0 %1643
    %v1646 = vadd.f32 %v1636, %v1644
    %v1647 = vtanh.pop %v1646
    %1649 = vrot.lane.b32.xlu0 %v1647, 32
    %v1650 = vpop.permute.xlu0 %1649
    %v1652 = vmul.f32 %v1635, %v1650
    %1654 = vrot.lane.b32.xlu0 %v1560, 64
    %v1655 = vpop.permute.xlu0 %1654
    %v1656 = vsel %vm242, %v1655, 0
    %1658 = vmatprep.subr.mxu0 0.0
    %1659 = vmatpush1.msra.mxu0 %v75
    %1660 = vmatprep.subr.mxu0 0.0
    %1661 = vmatpush1.msra.mxu0 %v76
    %1662 = vmatprep.subr.mxu0 0.0
    %1663 = vmatpush1.msra.mxu0 %v77
    %1664 = vmatprep.subr.mxu0 0.0
    %1665 = vmatpush1.msra.mxu0 %v78
    %1666 = vmatprep.subr.mxu0 0.0
    %1667 = vmatpush1.msra.mxu0 0.0
    %1668 = vmatprep.subr.mxu0 0.0
    %1669 = vmatpush1.msra.mxu0 0.0
    %1670 = vmatprep.subr.mxu0 0.0
    %1671 = vmatpush1.msra.mxu0 0.0
    %1672 = vmatprep.subr.mxu0 0.0
    %1673 = vmatpush1.msra.mxu0 0.0
    %1674 = vmatprep.subr.mxu0 0.0
    %1675 = vmatpush1.msra.mxu0 0.0
    %1676 = vmatprep.subr.mxu0 0.0
    %1677 = vmatpush1.msra.mxu0 0.0
    %1678 = vmatprep.subr.mxu0 0.0
    %1679 = vmatpush1.msra.mxu0 0.0
    %1680 = vmatprep.subr.mxu0 0.0
    %1681 = vmatpush1.msra.mxu0 0.0
    %1682 = vmatprep.subr.mxu0 0.0
    %1683 = vmatpush1.msra.mxu0 0.0
    %1684 = vmatprep.subr.mxu0 0.0
    %1685 = vmatpush1.msra.mxu0 0.0
    %1686 = vmatprep.subr.mxu0 0.0
    %1687 = vmatpush1.msra.mxu0 0.0
    %1688 = vmatprep.subr.mxu0 0.0
    %1689 = vmatpush1.msra.mxu0 0.0
    %1690 = vmatprep.subr.mxu0 0.0
    %1691 = vmatpush1.msra.mxu0 0.0
    %1692 = vmatprep.subr.mxu0 0.0
    %1693 = vmatpush1.msra.mxu0 0.0
    %1694 = vmatprep.subr.mxu0 0.0
    %1695 = vmatpush1.msra.mxu0 0.0
    %1696 = vmatprep.subr.mxu0 0.0
    %1697 = vmatpush1.msra.mxu0 0.0
    %1698 = vmatprep.subr.mxu0 0.0
    %1699 = vmatpush1.msra.mxu0 0.0
    %1700 = vmatprep.subr.mxu0 0.0
    %1701 = vmatpush1.msra.mxu0 0.0
    %1702 = vmatprep.subr.mxu0 0.0
    %1703 = vmatpush1.msra.mxu0 0.0
    %1704 = vmatprep.subr.mxu0 0.0
    %1705 = vmatpush1.msra.mxu0 0.0
    %1706 = vmatprep.subr.mxu0 0.0
    %1707 = vmatpush1.msra.mxu0 0.0
    %1708 = vmatprep.subr.mxu0 0.0
    %1709 = vmatpush1.msra.mxu0 0.0
    %1710 = vmatprep.subr.mxu0 0.0
    %1711 = vmatpush1.msra.mxu0 0.0
    %1712 = vmatprep.subr.mxu0 0.0
    %1713 = vmatpush1.msra.mxu0 0.0
    %1714 = vmatprep.subr.mxu0 0.0
    %1715 = vmatpush1.msra.mxu0 0.0
    %1716 = vmatprep.subr.mxu0 0.0
    %1717 = vmatpush1.msra.mxu0 0.0
    %1718 = vmatprep.subr.mxu0 0.0
    %1719 = vmatpush1.msra.mxu0 0.0
    %1720 = vmatprep.subr.mxu0 0.0
    %1721 = vmatpush1.msra.mxu0 0.0
    %1722 = vmatprep.mubr.f32.mxu0 0.0
    %1723 = vmatmul.mubr.f32.gmra.mrb[0].mxu0 %v1656
    %v1724 = vpop.f32.mrb[0].mxu0
    %v1725 = vadd.f32 0.0, %v1724
    %v1726 = vpop.f32.mrb[0].mxu0
    %1727 = vdwg.mxu0
    %1729 = vrot.lane.b32.xlu0 %v1652, 64
    %v1730 = vpop.permute.xlu0 %1729
    %v1731 = vsel %vm242, %v1730, 0
    %1733 = vmatprep.subr.mxu0 0.0
    %1734 = vmatpush1.msra.mxu0 %v67
    %1735 = vmatprep.subr.mxu0 0.0
    %1736 = vmatpush1.msra.mxu0 %v68
    %1737 = vmatprep.subr.mxu0 0.0
    %1738 = vmatpush1.msra.mxu0 %v69
    %1739 = vmatprep.subr.mxu0 0.0
    %1740 = vmatpush1.msra.mxu0 %v70
    %1741 = vmatprep.subr.mxu0 0.0
    %1742 = vmatpush1.msra.mxu0 0.0
    %1743 = vmatprep.subr.mxu0 0.0
    %1744 = vmatpush1.msra.mxu0 0.0
    %1745 = vmatprep.subr.mxu0 0.0
    %1746 = vmatpush1.msra.mxu0 0.0
    %1747 = vmatprep.subr.mxu0 0.0
    %1748 = vmatpush1.msra.mxu0 0.0
    %1749 = vmatprep.subr.mxu0 0.0
    %1750 = vmatpush1.msra.mxu0 0.0
    %1751 = vmatprep.subr.mxu0 0.0
    %1752 = vmatpush1.msra.mxu0 0.0
    %1753 = vmatprep.subr.mxu0 0.0
    %1754 = vmatpush1.msra.mxu0 0.0
    %1755 = vmatprep.subr.mxu0 0.0
    %1756 = vmatpush1.msra.mxu0 0.0
    %1757 = vmatprep.subr.mxu0 0.0
    %1758 = vmatpush1.msra.mxu0 0.0
    %1759 = vmatprep.subr.mxu0 0.0
    %1760 = vmatpush1.msra.mxu0 0.0
    %1761 = vmatprep.subr.mxu0 0.0
    %1762 = vmatpush1.msra.mxu0 0.0
    %1763 = vmatprep.subr.mxu0 0.0
    %1764 = vmatpush1.msra.mxu0 0.0
    %1765 = vmatprep.subr.mxu0 0.0
    %1766 = vmatpush1.msra.mxu0 0.0
    %1767 = vmatprep.subr.mxu0 0.0
    %1768 = vmatpush1.msra.mxu0 0.0
    %1769 = vmatprep.subr.mxu0 0.0
    %1770 = vmatpush1.msra.mxu0 0.0
    %1771 = vmatprep.subr.mxu0 0.0
    %1772 = vmatpush1.msra.mxu0 0.0
    %1773 = vmatprep.subr.mxu0 0.0
    %1774 = vmatpush1.msra.mxu0 0.0
    %1775 = vmatprep.subr.mxu0 0.0
    %1776 = vmatpush1.msra.mxu0 0.0
    %1777 = vmatprep.subr.mxu0 0.0
    %1778 = vmatpush1.msra.mxu0 0.0
    %1779 = vmatprep.subr.mxu0 0.0
    %1780 = vmatpush1.msra.mxu0 0.0
    %1781 = vmatprep.subr.mxu0 0.0
    %1782 = vmatpush1.msra.mxu0 0.0
    %1783 = vmatprep.subr.mxu0 0.0
    %1784 = vmatpush1.msra.mxu0 0.0
    %1785 = vmatprep.subr.mxu0 0.0
    %1786 = vmatpush1.msra.mxu0 0.0
    %1787 = vmatprep.subr.mxu0 0.0
    %1788 = vmatpush1.msra.mxu0 0.0
    %1789 = vmatprep.subr.mxu0 0.0
    %1790 = vmatpush1.msra.mxu0 0.0
    %1791 = vmatprep.subr.mxu0 0.0
    %1792 = vmatpush1.msra.mxu0 0.0
    %1793 = vmatprep.subr.mxu0 0.0
    %1794 = vmatpush1.msra.mxu0 0.0
    %1795 = vmatprep.subr.mxu0 0.0
    %1796 = vmatpush1.msra.mxu0 0.0
    %1797 = vmatprep.mubr.f32.mxu0 0.0
    %1798 = vmatmul.mubr.f32.gmra.mrb[0].mxu0 %v1731
    %v1799 = vpop.f32.mrb[0].mxu0
    %v1800 = vadd.f32 %v1725, %v1799
    %v1801 = vpop.f32.mrb[0].mxu0
    %1802 = vdwg.mxu0
    %v1803 = vadd.f32 %v1800, %v240
    %v1804 = vmul.f32 %v1803, 0.5
    %v1805 = vtanh.pop %v1804
    %v1806 = vmul.f32 %v1805, 0.5
    %v1807 = vadd.f32 %v1806, 0.5
    %v1808 = vmul.f32 %v1807, %v1554
    %1810 = vrot.lane.b32.xlu0 %v1805, 32
    %v1811 = vpop.permute.xlu0 %1810
    %v1813 = vmul.f32 %v1807, %v1811
    %1815 = vrot.lane.b32.xlu0 %v1813, 32
    %v1816 = vpop.permute.xlu0 %1815
    %v1818 = vadd.f32 %v1808, %v1816
    %v1819 = vtanh.pop %v1818
    %1821 = vrot.lane.b32.xlu0 %v1819, 32
    %v1822 = vpop.permute.xlu0 %1821
    %v1824 = vmul.f32 %v1807, %v1822
    %1825 = vmatprep.subr.mxu0 0.0
    %1826 = vmatpush1.msra.mxu0 %v71
    %1827 = vmatprep.subr.mxu0 0.0
    %1828 = vmatpush1.msra.mxu0 %v72
    %1829 = vmatprep.subr.mxu0 0.0
    %1830 = vmatpush1.msra.mxu0 %v73
    %1831 = vmatprep.subr.mxu0 0.0
    %1832 = vmatpush1.msra.mxu0 %v74
    %1833 = vmatprep.subr.mxu0 0.0
    %1834 = vmatpush1.msra.mxu0 0.0
    %1835 = vmatprep.subr.mxu0 0.0
    %1836 = vmatpush1.msra.mxu0 0.0
    %1837 = vmatprep.subr.mxu0 0.0
    %1838 = vmatpush1.msra.mxu0 0.0
    %1839 = vmatprep.subr.mxu0 0.0
    %1840 = vmatpush1.msra.mxu0 0.0
    %1841 = vmatprep.subr.mxu0 0.0
    %1842 = vmatpush1.msra.mxu0 0.0
    %1843 = vmatprep.subr.mxu0 0.0
    %1844 = vmatpush1.msra.mxu0 0.0
    %1845 = vmatprep.subr.mxu0 0.0
    %1846 = vmatpush1.msra.mxu0 0.0
    %1847 = vmatprep.subr.mxu0 0.0
    %1848 = vmatpush1.msra.mxu0 0.0
    %1849 = vmatprep.subr.mxu0 0.0
    %1850 = vmatpush1.msra.mxu0 0.0
    %1851 = vmatprep.subr.mxu0 0.0
    %1852 = vmatpush1.msra.mxu0 0.0
    %1853 = vmatprep.subr.mxu0 0.0
    %1854 = vmatpush1.msra.mxu0 0.0
    %1855 = vmatprep.subr.mxu0 0.0
    %1856 = vmatpush1.msra.mxu0 0.0
    %1857 = vmatprep.subr.mxu0 0.0
    %1858 = vmatpush1.msra.mxu0 0.0
    %1859 = vmatprep.subr.mxu0 0.0
    %1860 = vmatpush1.msra.mxu0 0.0
    %1861 = vmatprep.subr.mxu0 0.0
    %1862 = vmatpush1.msra.mxu0 0.0
    %1863 = vmatprep.subr.mxu0 0.0
    %1864 = vmatpush1.msra.mxu0 0.0
    %1865 = vmatprep.subr.mxu0 0.0
    %1866 = vmatpush1.msra.mxu0 0.0
    %1867 = vmatprep.subr.mxu0 0.0
    %1868 = vmatpush1.msra.mxu0 0.0
    %1869 = vmatprep.subr.mxu0 0.0
    %1870 = vmatpush1.msra.mxu0 0.0
    %1871 = vmatprep.subr.mxu0 0.0
    %1872 = vmatpush1.msra.mxu0 0.0
    %1873 = vmatprep.subr.mxu0 0.0
    %1874 = vmatpush1.msra.mxu0 0.0
    %1875 = vmatprep.subr.mxu0 0.0
    %1876 = vmatpush1.msra.mxu0 0.0
    %1877 = vmatprep.subr.mxu0 0.0
    %1878 = vmatpush1.msra.mxu0 0.0
    %1879 = vmatprep.subr.mxu0 0.0
    %1880 = vmatpush1.msra.mxu0 0.0
    %1881 = vmatprep.subr.mxu0 0.0
    %1882 = vmatpush1.msra.mxu0 0.0
    %1883 = vmatprep.subr.mxu0 0.0
    %1884 = vmatpush1.msra.mxu0 0.0
    %1885 = vmatprep.subr.mxu0 0.0
    %1886 = vmatpush1.msra.mxu0 0.0
    %1887 = vmatprep.subr.mxu0 0.0
    %1888 = vmatpush1.msra.mxu0 0.0
    %1889 = vmatprep.mubr.f32.mxu0 0.0
    %1890 = vmatmul.mubr.f32.gmra.mrb[0].mxu0 %v1731
    %v1891 = vpop.f32.mrb[0].mxu0
    %v1892 = vadd.f32 0.0, %v1891
    %v1893 = vpop.f32.mrb[0].mxu0
    %1894 = vdwg.mxu0
    %v1895 = vadd.f32 %v228, %v1892
    %v1896 = vmul.f32 %v1895, 0.5
    %v1897 = vtanh.pop %v1896
    %v1898 = vmul.f32 %v1897, 0.5
    %v1899 = vadd.f32 %v1898, 0.5
    %v1900 = vmul.f32 %v1899, %v1646
    %1902 = vrot.lane.b32.xlu0 %v1897, 32
    %v1903 = vpop.permute.xlu0 %1902
    %v1905 = vmul.f32 %v1899, %v1903
    %1907 = vrot.lane.b32.xlu0 %v1905, 32
    %v1908 = vpop.permute.xlu0 %1907
    %v1910 = vadd.f32 %v1900, %v1908
    %v1911 = vtanh.pop %v1910
    %1913 = vrot.lane.b32.xlu0 %v1911, 32
    %v1914 = vpop.permute.xlu0 %1913
    %v1916 = vmul.f32 %v1899, %v1914
    %1918 = vrot.lane.b32.xlu0 %v1824, 64
    %v1919 = vpop.permute.xlu0 %1918
    %v1920 = vsel %vm242, %v1919, 0
    %1922 = vmatprep.subr.mxu0 0.0
    %1923 = vmatpush1.msra.mxu0 %v75
    %1924 = vmatprep.subr.mxu0 0.0
    %1925 = vmatpush1.msra.mxu0 %v76
    %1926 = vmatprep.subr.mxu0 0.0
    %1927 = vmatpush1.msra.mxu0 %v77
    %1928 = vmatprep.subr.mxu0 0.0
    %1929 = vmatpush1.msra.mxu0 %v78
    %1930 = vmatprep.subr.mxu0 0.0
    %1931 = vmatpush1.msra.mxu0 0.0
    %1932 = vmatprep.subr.mxu0 0.0
    %1933 = vmatpush1.msra.mxu0 0.0
    %1934 = vmatprep.subr.mxu0 0.0
    %1935 = vmatpush1.msra.mxu0 0.0
    %1936 = vmatprep.subr.mxu0 0.0
    %1937 = vmatpush1.msra.mxu0 0.0
    %1938 = vmatprep.subr.mxu0 0.0
    %1939 = vmatpush1.msra.mxu0 0.0
    %1940 = vmatprep.subr.mxu0 0.0
    %1941 = vmatpush1.msra.mxu0 0.0
    %1942 = vmatprep.subr.mxu0 0.0
    %1943 = vmatpush1.msra.mxu0 0.0
    %1944 = vmatprep.subr.mxu0 0.0
    %1945 = vmatpush1.msra.mxu0 0.0
    %1946 = vmatprep.subr.mxu0 0.0
    %1947 = vmatpush1.msra.mxu0 0.0
    %1948 = vmatprep.subr.mxu0 0.0
    %1949 = vmatpush1.msra.mxu0 0.0
    %1950 = vmatprep.subr.mxu0 0.0
    %1951 = vmatpush1.msra.mxu0 0.0
    %1952 = vmatprep.subr.mxu0 0.0
    %1953 = vmatpush1.msra.mxu0 0.0
    %1954 = vmatprep.subr.mxu0 0.0
    %1955 = vmatpush1.msra.mxu0 0.0
    %1956 = vmatprep.subr.mxu0 0.0
    %1957 = vmatpush1.msra.mxu0 0.0
    %1958 = vmatprep.subr.mxu0 0.0
    %1959 = vmatpush1.msra.mxu0 0.0
    %1960 = vmatprep.subr.mxu0 0.0
    %1961 = vmatpush1.msra.mxu0 0.0
    %1962 = vmatprep.subr.mxu0 0.0
    %1963 = vmatpush1.msra.mxu0 0.0
    %1964 = vmatprep.subr.mxu0 0.0
    %1965 = vmatpush1.msra.mxu0 0.0
    %1966 = vmatprep.subr.mxu0 0.0
    %1967 = vmatpush1.msra.mxu0 0.0
    %1968 = vmatprep.subr.mxu0 0.0
    %1969 = vmatpush1.msra.mxu0 0.0
    %1970 = vmatprep.subr.mxu0 0.0
    %1971 = vmatpush1.msra.mxu0 0.0
    %1972 = vmatprep.subr.mxu0 0.0
    %1973 = vmatpush1.msra.mxu0 0.0
    %1974 = vmatprep.subr.mxu0 0.0
    %1975 = vmatpush1.msra.mxu0 0.0
    %1976 = vmatprep.subr.mxu0 0.0
    %1977 = vmatpush1.msra.mxu0 0.0
    %1978 = vmatprep.subr.mxu0 0.0
    %1979 = vmatpush1.msra.mxu0 0.0
    %1980 = vmatprep.subr.mxu0 0.0
    %1981 = vmatpush1.msra.mxu0 0.0
    %1982 = vmatprep.subr.mxu0 0.0
    %1983 = vmatpush1.msra.mxu0 0.0
    %1984 = vmatprep.subr.mxu0 0.0
    %1985 = vmatpush1.msra.mxu0 0.0
    %1986 = vmatprep.mubr.f32.mxu0 0.0
    %1987 = vmatmul.mubr.f32.gmra.mrb[0].mxu0 %v1920
    %v1988 = vpop.f32.mrb[0].mxu0
    %v1989 = vadd.f32 0.0, %v1988
    %v1990 = vpop.f32.mrb[0].mxu0
    %1991 = vdwg.mxu0
    %1993 = vrot.lane.b32.xlu0 %v1916, 64
    %v1994 = vpop.permute.xlu0 %1993
    %v1995 = vsel %vm242, %v1994, 0
    %1997 = vmatprep.subr.mxu0 0.0
    %1998 = vmatpush1.msra.mxu0 %v67
    %1999 = vmatprep.subr.mxu0 0.0
    %2000 = vmatpush1.msra.mxu0 %v68
    %2001 = vmatprep.subr.mxu0 0.0
    %2002 = vmatpush1.msra.mxu0 %v69
    %2003 = vmatprep.subr.mxu0 0.0
    %2004 = vmatpush1.msra.mxu0 %v70
    %2005 = vmatprep.subr.mxu0 0.0
    %2006 = vmatpush1.msra.mxu0 0.0
    %2007 = vmatprep.subr.mxu0 0.0
    %2008 = vmatpush1.msra.mxu0 0.0
    %2009 = vmatprep.subr.mxu0 0.0
    %2010 = vmatpush1.msra.mxu0 0.0
    %2011 = vmatprep.subr.mxu0 0.0
    %2012 = vmatpush1.msra.mxu0 0.0
    %2013 = vmatprep.subr.mxu0 0.0
    %2014 = vmatpush1.msra.mxu0 0.0
    %2015 = vmatprep.subr.mxu0 0.0
    %2016 = vmatpush1.msra.mxu0 0.0
    %2017 = vmatprep.subr.mxu0 0.0
    %2018 = vmatpush1.msra.mxu0 0.0
    %2019 = vmatprep.subr.mxu0 0.0
    %2020 = vmatpush1.msra.mxu0 0.0
    %2021 = vmatprep.subr.mxu0 0.0
    %2022 = vmatpush1.msra.mxu0 0.0
    %2023 = vmatprep.subr.mxu0 0.0
    %2024 = vmatpush1.msra.mxu0 0.0
    %2025 = vmatprep.subr.mxu0 0.0
    %2026 = vmatpush1.msra.mxu0 0.0
    %2027 = vmatprep.subr.mxu0 0.0
    %2028 = vmatpush1.msra.mxu0 0.0
    %2029 = vmatprep.subr.mxu0 0.0
    %2030 = vmatpush1.msra.mxu0 0.0
    %2031 = vmatprep.subr.mxu0 0.0
    %2032 = vmatpush1.msra.mxu0 0.0
    %2033 = vmatprep.subr.mxu0 0.0
    %2034 = vmatpush1.msra.mxu0 0.0
    %2035 = vmatprep.subr.mxu0 0.0
    %2036 = vmatpush1.msra.mxu0 0.0
    %2037 = vmatprep.subr.mxu0 0.0
    %2038 = vmatpush1.msra.mxu0 0.0
    %2039 = vmatprep.subr.mxu0 0.0
    %2040 = vmatpush1.msra.mxu0 0.0
    %2041 = vmatprep.subr.mxu0 0.0
    %2042 = vmatpush1.msra.mxu0 0.0
    %2043 = vmatprep.subr.mxu0 0.0
    %2044 = vmatpush1.msra.mxu0 0.0
    %2045 = vmatprep.subr.mxu0 0.0
    %2046 = vmatpush1.msra.mxu0 0.0
    %2047 = vmatprep.subr.mxu0 0.0
    %2048 = vmatpush1.msra.mxu0 0.0
    %2049 = vmatprep.subr.mxu0 0.0
    %2050 = vmatpush1.msra.mxu0 0.0
    %2051 = vmatprep.subr.mxu0 0.0
    %2052 = vmatpush1.msra.mxu0 0.0
    %2053 = vmatprep.subr.mxu0 0.0
    %2054 = vmatpush1.msra.mxu0 0.0
    %2055 = vmatprep.subr.mxu0 0.0
    %2056 = vmatpush1.msra.mxu0 0.0
    %2057 = vmatprep.subr.mxu0 0.0
    %2058 = vmatpush1.msra.mxu0 0.0
    %2059 = vmatprep.subr.mxu0 0.0
    %2060 = vmatpush1.msra.mxu0 0.0
    %2061 = vmatprep.mubr.f32.mxu0 0.0
    %2062 = vmatmul.mubr.f32.gmra.mrb[0].mxu0 %v1995
    %v2063 = vpop.f32.mrb[0].mxu0
    %v2064 = vadd.f32 %v1989, %v2063
    %v2065 = vpop.f32.mrb[0].mxu0
    %2066 = vdwg.mxu0
    %v2067 = vadd.f32 %v2064, %v240
    %v2068 = vmul.f32 %v2067, 0.5
    %v2069 = vtanh.pop %v2068
    %v2070 = vmul.f32 %v2069, 0.5
    %v2071 = vadd.f32 %v2070, 0.5
    %v2072 = vmul.f32 %v2071, %v1818
    %2074 = vrot.lane.b32.xlu0 %v2069, 32
    %v2075 = vpop.permute.xlu0 %2074
    %v2077 = vmul.f32 %v2071, %v2075
    %2079 = vrot.lane.b32.xlu0 %v2077, 32
    %v2080 = vpop.permute.xlu0 %2079
    %v2082 = vadd.f32 %v2072, %v2080
    %v2083 = vtanh.pop %v2082
    %2085 = vrot.lane.b32.xlu0 %v2083, 32
    %v2086 = vpop.permute.xlu0 %2085
    %v2088 = vmul.f32 %v2071, %v2086
    %2089 = vmatprep.subr.mxu0 0.0
    %2090 = vmatpush1.msra.mxu0 %v71
    %2091 = vmatprep.subr.mxu0 0.0
    %2092 = vmatpush1.msra.mxu0 %v72
    %2093 = vmatprep.subr.mxu0 0.0
    %2094 = vmatpush1.msra.mxu0 %v73
    %2095 = vmatprep.subr.mxu0 0.0
    %2096 = vmatpush1.msra.mxu0 %v74
    %2097 = vmatprep.subr.mxu0 0.0
    %2098 = vmatpush1.msra.mxu0 0.0
    %2099 = vmatprep.subr.mxu0 0.0
    %2100 = vmatpush1.msra.mxu0 0.0
    %2101 = vmatprep.subr.mxu0 0.0
    %2102 = vmatpush1.msra.mxu0 0.0
    %2103 = vmatprep.subr.mxu0 0.0
    %2104 = vmatpush1.msra.mxu0 0.0
    %2105 = vmatprep.subr.mxu0 0.0
    %2106 = vmatpush1.msra.mxu0 0.0
    %2107 = vmatprep.subr.mxu0 0.0
    %2108 = vmatpush1.msra.mxu0 0.0
    %2109 = vmatprep.subr.mxu0 0.0
    %2110 = vmatpush1.msra.mxu0 0.0
    %2111 = vmatprep.subr.mxu0 0.0
    %2112 = vmatpush1.msra.mxu0 0.0
    %2113 = vmatprep.subr.mxu0 0.0
    %2114 = vmatpush1.msra.mxu0 0.0
    %2115 = vmatprep.subr.mxu0 0.0
    %2116 = vmatpush1.msra.mxu0 0.0
    %2117 = vmatprep.subr.mxu0 0.0
    %2118 = vmatpush1.msra.mxu0 0.0
    %2119 = vmatprep.subr.mxu0 0.0
    %2120 = vmatpush1.msra.mxu0 0.0
    %2121 = vmatprep.subr.mxu0 0.0
    %2122 = vmatpush1.msra.mxu0 0.0
    %2123 = vmatprep.subr.mxu0 0.0
    %2124 = vmatpush1.msra.mxu0 0.0
    %2125 = vmatprep.subr.mxu0 0.0
    %2126 = vmatpush1.msra.mxu0 0.0
    %2127 = vmatprep.subr.mxu0 0.0
    %2128 = vmatpush1.msra.mxu0 0.0
    %2129 = vmatprep.subr.mxu0 0.0
    %2130 = vmatpush1.msra.mxu0 0.0
    %2131 = vmatprep.subr.mxu0 0.0
    %2132 = vmatpush1.msra.mxu0 0.0
    %2133 = vmatprep.subr.mxu0 0.0
    %2134 = vmatpush1.msra.mxu0 0.0
    %2135 = vmatprep.subr.mxu0 0.0
    %2136 = vmatpush1.msra.mxu0 0.0
    %2137 = vmatprep.subr.mxu0 0.0
    %2138 = vmatpush1.msra.mxu0 0.0
    %2139 = vmatprep.subr.mxu0 0.0
    %2140 = vmatpush1.msra.mxu0 0.0
    %2141 = vmatprep.subr.mxu0 0.0
    %2142 = vmatpush1.msra.mxu0 0.0
    %2143 = vmatprep.subr.mxu0 0.0
    %2144 = vmatpush1.msra.mxu0 0.0
    %2145 = vmatprep.subr.mxu0 0.0
    %2146 = vmatpush1.msra.mxu0 0.0
    %2147 = vmatprep.subr.mxu0 0.0
    %2148 = vmatpush1.msra.mxu0 0.0
    %2149 = vmatprep.subr.mxu0 0.0
    %2150 = vmatpush1.msra.mxu0 0.0
    %2151 = vmatprep.subr.mxu0 0.0
    %2152 = vmatpush1.msra.mxu0 0.0
    %2153 = vmatprep.mubr.f32.mxu0 0.0
    %2154 = vmatmul.mubr.f32.gmra.mrb[0].mxu0 %v1995
    %v2155 = vpop.f32.mrb[0].mxu0
    %v2156 = vadd.f32 0.0, %v2155
    %v2157 = vpop.f32.mrb[0].mxu0
    %2158 = vdwg.mxu0
    %v2159 = vadd.f32 %v233, %v2156
    %v2160 = vmul.f32 %v2159, 0.5
    %v2161 = vtanh.pop %v2160
    %v2162 = vmul.f32 %v2161, 0.5
    %v2163 = vadd.f32 %v2162, 0.5
    %v2164 = vmul.f32 %v2163, %v1910
    %2166 = vrot.lane.b32.xlu0 %v2161, 32
    %v2167 = vpop.permute.xlu0 %2166
    %v2169 = vmul.f32 %v2163, %v2167
    %2171 = vrot.lane.b32.xlu0 %v2169, 32
    %v2172 = vpop.permute.xlu0 %2171
    %v2174 = vadd.f32 %v2164, %v2172
    %v2175 = vtanh.pop %v2174
    %2177 = vrot.lane.b32.xlu0 %v2175, 32
    %v2178 = vpop.permute.xlu0 %2177
    %v2180 = vmul.f32 %v2163, %v2178
    %2182 = vrot.lane.b32.xlu0 %v2088, 64
    %v2183 = vpop.permute.xlu0 %2182
    %v2184 = vsel %vm242, %v2183, 0
    %2186 = vmatprep.subr.mxu0 0.0
    %2187 = vmatpush1.msra.mxu0 %v75
    %2188 = vmatprep.subr.mxu0 0.0
    %2189 = vmatpush1.msra.mxu0 %v76
    %2190 = vmatprep.subr.mxu0 0.0
    %2191 = vmatpush1.msra.mxu0 %v77
    %2192 = vmatprep.subr.mxu0 0.0
    %2193 = vmatpush1.msra.mxu0 %v78
    %2194 = vmatprep.subr.mxu0 0.0
    %2195 = vmatpush1.msra.mxu0 0.0
    %2196 = vmatprep.subr.mxu0 0.0
    %2197 = vmatpush1.msra.mxu0 0.0
    %2198 = vmatprep.subr.mxu0 0.0
    %2199 = vmatpush1.msra.mxu0 0.0
    %2200 = vmatprep.subr.mxu0 0.0
    %2201 = vmatpush1.msra.mxu0 0.0
    %2202 = vmatprep.subr.mxu0 0.0
    %2203 = vmatpush1.msra.mxu0 0.0
    %2204 = vmatprep.subr.mxu0 0.0
    %2205 = vmatpush1.msra.mxu0 0.0
    %2206 = vmatprep.subr.mxu0 0.0
    %2207 = vmatpush1.msra.mxu0 0.0
    %2208 = vmatprep.subr.mxu0 0.0
    %2209 = vmatpush1.msra.mxu0 0.0
    %2210 = vmatprep.subr.mxu0 0.0
    %2211 = vmatpush1.msra.mxu0 0.0
    %2212 = vmatprep.subr.mxu0 0.0
    %2213 = vmatpush1.msra.mxu0 0.0
    %2214 = vmatprep.subr.mxu0 0.0
    %2215 = vmatpush1.msra.mxu0 0.0
    %2216 = vmatprep.subr.mxu0 0.0
    %2217 = vmatpush1.msra.mxu0 0.0
    %2218 = vmatprep.subr.mxu0 0.0
    %2219 = vmatpush1.msra.mxu0 0.0
    %2220 = vmatprep.subr.mxu0 0.0
    %2221 = vmatpush1.msra.mxu0 0.0
    %2222 = vmatprep.subr.mxu0 0.0
    %2223 = vmatpush1.msra.mxu0 0.0
    %2224 = vmatprep.subr.mxu0 0.0
    %2225 = vmatpush1.msra.mxu0 0.0
    %2226 = vmatprep.subr.mxu0 0.0
    %2227 = vmatpush1.msra.mxu0 0.0
    %2228 = vmatprep.subr.mxu0 0.0
    %2229 = vmatpush1.msra.mxu0 0.0
    %2230 = vmatprep.subr.mxu0 0.0
    %2231 = vmatpush1.msra.mxu0 0.0
    %2232 = vmatprep.subr.mxu0 0.0
    %2233 = vmatpush1.msra.mxu0 0.0
    %2234 = vmatprep.subr.mxu0 0.0
    %2235 = vmatpush1.msra.mxu0 0.0
    %2236 = vmatprep.subr.mxu0 0.0
    %2237 = vmatpush1.msra.mxu0 0.0
    %2238 = vmatprep.subr.mxu0 0.0
    %2239 = vmatpush1.msra.mxu0 0.0
    %2240 = vmatprep.subr.mxu0 0.0
    %2241 = vmatpush1.msra.mxu0 0.0
    %2242 = vmatprep.subr.mxu0 0.0
    %2243 = vmatpush1.msra.mxu0 0.0
    %2244 = vmatprep.subr.mxu0 0.0
    %2245 = vmatpush1.msra.mxu0 0.0
    %2246 = vmatprep.subr.mxu0 0.0
    %2247 = vmatpush1.msra.mxu0 0.0
    %2248 = vmatprep.subr.mxu0 0.0
    %2249 = vmatpush1.msra.mxu0 0.0
    %2250 = vmatprep.mubr.f32.mxu0 0.0
    %2251 = vmatmul.mubr.f32.gmra.mrb[0].mxu0 %v2184
    %v2252 = vpop.f32.mrb[0].mxu0
    %v2253 = vadd.f32 0.0, %v2252
    %v2254 = vpop.f32.mrb[0].mxu0
    %2255 = vdwg.mxu0
    %2257 = vrot.lane.b32.xlu0 %v2180, 64
    %v2258 = vpop.permute.xlu0 %2257
    %v2259 = vsel %vm242, %v2258, 0
    %2261 = vmatprep.subr.mxu0 0.0
    %2262 = vmatpush1.msra.mxu0 %v67
    %2263 = vmatprep.subr.mxu0 0.0
    %2264 = vmatpush1.msra.mxu0 %v68
    %2265 = vmatprep.subr.mxu0 0.0
    %2266 = vmatpush1.msra.mxu0 %v69
    %2267 = vmatprep.subr.mxu0 0.0
    %2268 = vmatpush1.msra.mxu0 %v70
    %2269 = vmatprep.subr.mxu0 0.0
    %2270 = vmatpush1.msra.mxu0 0.0
    %2271 = vmatprep.subr.mxu0 0.0
    %2272 = vmatpush1.msra.mxu0 0.0
    %2273 = vmatprep.subr.mxu0 0.0
    %2274 = vmatpush1.msra.mxu0 0.0
    %2275 = vmatprep.subr.mxu0 0.0
    %2276 = vmatpush1.msra.mxu0 0.0
    %2277 = vmatprep.subr.mxu0 0.0
    %2278 = vmatpush1.msra.mxu0 0.0
    %2279 = vmatprep.subr.mxu0 0.0
    %2280 = vmatpush1.msra.mxu0 0.0
    %2281 = vmatprep.subr.mxu0 0.0
    %2282 = vmatpush1.msra.mxu0 0.0
    %2283 = vmatprep.subr.mxu0 0.0
    %2284 = vmatpush1.msra.mxu0 0.0
    %2285 = vmatprep.subr.mxu0 0.0
    %2286 = vmatpush1.msra.mxu0 0.0
    %2287 = vmatprep.subr.mxu0 0.0
    %2288 = vmatpush1.msra.mxu0 0.0
    %2289 = vmatprep.subr.mxu0 0.0
    %2290 = vmatpush1.msra.mxu0 0.0
    %2291 = vmatprep.subr.mxu0 0.0
    %2292 = vmatpush1.msra.mxu0 0.0
    %2293 = vmatprep.subr.mxu0 0.0
    %2294 = vmatpush1.msra.mxu0 0.0
    %2295 = vmatprep.subr.mxu0 0.0
    %2296 = vmatpush1.msra.mxu0 0.0
    %2297 = vmatprep.subr.mxu0 0.0
    %2298 = vmatpush1.msra.mxu0 0.0
    %2299 = vmatprep.subr.mxu0 0.0
    %2300 = vmatpush1.msra.mxu0 0.0
    %2301 = vmatprep.subr.mxu0 0.0
    %2302 = vmatpush1.msra.mxu0 0.0
    %2303 = vmatprep.subr.mxu0 0.0
    %2304 = vmatpush1.msra.mxu0 0.0
    %2305 = vmatprep.subr.mxu0 0.0
    %2306 = vmatpush1.msra.mxu0 0.0
    %2307 = vmatprep.subr.mxu0 0.0
    %2308 = vmatpush1.msra.mxu0 0.0
    %2309 = vmatprep.subr.mxu0 0.0
    %2310 = vmatpush1.msra.mxu0 0.0
    %2311 = vmatprep.subr.mxu0 0.0
    %2312 = vmatpush1.msra.mxu0 0.0
    %2313 = vmatprep.subr.mxu0 0.0
    %2314 = vmatpush1.msra.mxu0 0.0
    %2315 = vmatprep.subr.mxu0 0.0
    %2316 = vmatpush1.msra.mxu0 0.0
    %2317 = vmatprep.subr.mxu0 0.0
    %2318 = vmatpush1.msra.mxu0 0.0
    %2319 = vmatprep.subr.mxu0 0.0
    %2320 = vmatpush1.msra.mxu0 0.0
    %2321 = vmatprep.subr.mxu0 0.0
    %2322 = vmatpush1.msra.mxu0 0.0
    %2323 = vmatprep.subr.mxu0 0.0
    %2324 = vmatpush1.msra.mxu0 0.0
    %2325 = vmatprep.mubr.f32.mxu0 0.0
    %2326 = vmatmul.mubr.f32.gmra.mrb[0].mxu0 %v2259
    %v2327 = vpop.f32.mrb[0].mxu0
    %v2328 = vadd.f32 %v2253, %v2327
    %v2329 = vpop.f32.mrb[0].mxu0
    %2330 = vdwg.mxu0
    %v2331 = vadd.f32 %v2328, %v240
    %v2332 = vmul.f32 %v2331, 0.5
    %v2333 = vtanh.pop %v2332
    %v2334 = vmul.f32 %v2333, 0.5
    %v2335 = vadd.f32 %v2334, 0.5
    %v2336 = vmul.f32 %v2335, %v2082
    %2338 = vrot.lane.b32.xlu0 %v2333, 32
    %v2339 = vpop.permute.xlu0 %2338
    %v2341 = vmul.f32 %v2335, %v2339
    %2343 = vrot.lane.b32.xlu0 %v2341, 32
    %v2344 = vpop.permute.xlu0 %2343
    %v2346 = vadd.f32 %v2336, %v2344
    %v2347 = vtanh.pop %v2346
    %2349 = vrot.lane.b32.xlu0 %v2347, 32
    %v2350 = vpop.permute.xlu0 %2349
    %v2352 = vmul.f32 %v2335, %v2350
    %v2354 = vlaneseq
    %v2355 = vshrl.u32 %v2354, 7
    %v2356 = vsub.s32 0, %v2355
    %v2357 = vrot.slane %v85, %v2356
    %2360 = vrot.lane.b32.xlu0 %v2352, 64
    %v2361 = vpop.permute.xlu0 %2360
    %v2362 = vsel %vm242, %v2361, 0
    %2364 = vmatprep.subr.mxu0 0.0
    %2365 = vmatpush1.msra.mxu0 %v81
    %2366 = vmatprep.subr.mxu0 0.0
    %2367 = vmatpush1.msra.mxu0 %v82
    %2368 = vmatprep.subr.mxu0 0.0
    %2369 = vmatpush1.msra.mxu0 %v83
    %2370 = vmatprep.subr.mxu0 0.0
    %2371 = vmatpush1.msra.mxu0 %v84
    %2372 = vmatprep.subr.mxu0 0.0
    %2373 = vmatpush1.msra.mxu0 0.0
    %2374 = vmatprep.subr.mxu0 0.0
    %2375 = vmatpush1.msra.mxu0 0.0
    %2376 = vmatprep.subr.mxu0 0.0
    %2377 = vmatpush1.msra.mxu0 0.0
    %2378 = vmatprep.subr.mxu0 0.0
    %2379 = vmatpush1.msra.mxu0 0.0
    %2380 = vmatprep.subr.mxu0 0.0
    %2381 = vmatpush1.msra.mxu0 0.0
    %2382 = vmatprep.subr.mxu0 0.0
    %2383 = vmatpush1.msra.mxu0 0.0
    %2384 = vmatprep.subr.mxu0 0.0
    %2385 = vmatpush1.msra.mxu0 0.0
    %2386 = vmatprep.subr.mxu0 0.0
    %2387 = vmatpush1.msra.mxu0 0.0
    %2388 = vmatprep.subr.mxu0 0.0
    %2389 = vmatpush1.msra.mxu0 0.0
    %2390 = vmatprep.subr.mxu0 0.0
    %2391 = vmatpush1.msra.mxu0 0.0
    %2392 = vmatprep.subr.mxu0 0.0
    %2393 = vmatpush1.msra.mxu0 0.0
    %2394 = vmatprep.subr.mxu0 0.0
    %2395 = vmatpush1.msra.mxu0 0.0
    %2396 = vmatprep.subr.mxu0 0.0
    %2397 = vmatpush1.msra.mxu0 0.0
    %2398 = vmatprep.subr.mxu0 0.0
    %2399 = vmatpush1.msra.mxu0 0.0
    %2400 = vmatprep.subr.mxu0 0.0
    %2401 = vmatpush1.msra.mxu0 0.0
    %2402 = vmatprep.subr.mxu0 0.0
    %2403 = vmatpush1.msra.mxu0 0.0
    %2404 = vmatprep.subr.mxu0 0.0
    %2405 = vmatpush1.msra.mxu0 0.0
    %2406 = vmatprep.subr.mxu0 0.0
    %2407 = vmatpush1.msra.mxu0 0.0
    %2408 = vmatprep.subr.mxu0 0.0
    %2409 = vmatpush1.msra.mxu0 0.0
    %2410 = vmatprep.subr.mxu0 0.0
    %2411 = vmatpush1.msra.mxu0 0.0
    %2412 = vmatprep.subr.mxu0 0.0
    %2413 = vmatpush1.msra.mxu0 0.0
    %2414 = vmatprep.subr.mxu0 0.0
    %2415 = vmatpush1.msra.mxu0 0.0
    %2416 = vmatprep.subr.mxu0 0.0
    %2417 = vmatpush1.msra.mxu0 0.0
    %2418 = vmatprep.subr.mxu0 0.0
    %2419 = vmatpush1.msra.mxu0 0.0
    %2420 = vmatprep.subr.mxu0 0.0
    %2421 = vmatpush1.msra.mxu0 0.0
    %2422 = vmatprep.subr.mxu0 0.0
    %2423 = vmatpush1.msra.mxu0 0.0
    %2424 = vmatprep.subr.mxu0 0.0
    %2425 = vmatpush1.msra.mxu0 0.0
    %2426 = vmatprep.subr.mxu0 0.0
    %2427 = vmatpush1.msra.mxu0 0.0
    %2428 = vmatprep.mubr.f32.mxu0 0.0
    %2429 = vmatmul.mubr.f32.gmra.mrb[0].mxu0 %v2362
    %v2430 = vpop.f32.mrb[0].mxu0
    %v2431 = vadd.f32 %v2357, %v2430
    %v2432 = vpop.f32.mrb[0].mxu0
    %2433 = vdwg.mxu0
    %v2434 = vmax.f32 %v2431, 0.0
    %v2436 = vlaneseq
    %v2437 = vshrl.u32 %v2436, 7
    %v2438 = vsub.s32 0, %v2437
    %v2439 = vrot.slane %v86, %v2438
    %v2441 = vmul.f32 %v2434, %v2439
    %vm2442 = vcmask 523264
    %v2443 = vsel %vm2442, %v2441, 0.0
    %2444 = vadd.xlane.f32.xlu0 %v2443
    %v2445 = vpop.xlane.xlu0 %2444
    %v2447 = vlaneseq
    %v2448 = vshrl.u32 %v2447, 7
    %v2449 = vsub.s32 0, %v2448
    %v2450 = vrot.slane %v87, %v2449
    %v2452 = vadd.f32 %v2445, %v2450
    %vm2453 = vcmask 7168
    %2454 = vst.msk [vmem:[%s11] sm:$0xff] %vm2453, %v2452
    // Predicated region
    $region54: #{tpu_custom_call.1} parent=1 // pred_check
      _
    $region55: #{tpu_custom_call.1} parent=1 // pred_check_branch
      %2456 = sbr.rel (0) target = $region57
    $region56: #{tpu_custom_call.1} parent=1 // pred_region
      _
    $region57: #{tpu_custom_call.1} parent=1 // pred_fallthru
      _
    // Predicated region
    $region58: #{tpu_custom_call.1} parent=1 // pred_check
      _
    $region59: #{tpu_custom_call.1} parent=1 // pred_check_branch
      %2458 = sbr.rel (0) target = $region61
    $region60: #{tpu_custom_call.1} parent=1 // pred_region
      _
    $region61: #{tpu_custom_call.1} parent=1 // pred_fallthru
      _
    %2459 = vsyncpa [#allocation4], 1
    %2460 = vsyncpa [#allocation6], 1

</llo_original>
